<compile_context>
chip_gen: v7x
topology: tpu7x:2x2x1
jax: 0.10.0
libtpu: 0.0.40
codegen_flags: <defaults>
</compile_context>

<pallas_src>
import math
import jax
import jax.numpy as jnp
from jax.experimental import pallas as pl
from jax.experimental.pallas import tpu as pltpu

# Small synthetic ALBERT-tiny-like config.
B, S = 2, 8            # batch of sentence pairs, padded ("longest") sequence length
H, NH, DH = 32, 2, 16  # hidden, num heads, head dim
I = 64                 # FFN intermediate
L = 2                  # number of (weight-shared) transformer layers
V = 100                # vocab size
TB = 2 * B             # both sentence sets stacked on the batch axis
M = TB * S             # flattened (batch, seq) rows


def _layernorm(h, g, b, eps=1e-12):
    mu = jnp.mean(h, axis=-1, keepdims=True)
    var = jnp.mean((h - mu) ** 2, axis=-1, keepdims=True)
    return (h - mu) * jax.lax.rsqrt(var + eps) * g + b


# --------------------------------------------------------------------------
# Fused kernel: embedding LN + L shared transformer layers for BOTH sentence
# sets (flattened [2B*S, H]) + masked mean pooling + cosine similarity.
# --------------------------------------------------------------------------
def sbert_fused_kernel(x_ref, mask_ref, vec_ref, wqkv_ref, wo_ref, w1_ref, w2_ref,
                       sim_ref):
    bf = jnp.bfloat16
    x = x_ref[...]            # [M, H]  f32 (word + position embeddings, flattened)
    mask2 = mask_ref[...]     # [TB, S] f32 (1 = real token, 0 = pad)

    # ---- unpack the single small-vector operand (static row / lane slices) ----
    vec = vec_ref[...]        # [10, 128] f32
    eg, eb = vec[0:1, :H], vec[1:2, :H]        # embedding LayerNorm gamma/beta
    bo = vec[2:3, :H]                          # attn output proj bias
    ag, ab = vec[3:4, :H], vec[4:5, :H]        # attention LayerNorm gamma/beta
    b2 = vec[5:6, :H]                          # FFN W2 bias
    fg, fb = vec[6:7, :H], vec[7:8, :H]        # FFN LayerNorm gamma/beta
    bqkv = vec[8:9, :3 * H]                    # fused q/k/v bias
    b1 = vec[9:10, :I]                         # FFN W1 bias

    # Weights are already bf16 (packed at init) -> straight into the MXU.
    wqkv = wqkv_ref[...]      # [H, 3H] bf16
    wo = wo_ref[...]          # [H, H]  bf16
    w1 = w1_ref[...]          # [H, I]  bf16
    w2 = w2_ref[...]          # [I, H]  bf16

    # Additive attention bias, materialized ONCE at full head-batched shape
    # (JAX does not CSE broadcast_in_dim inside the layer loop).
    bias_b = jnp.broadcast_to((1.0 - mask2)[:, None, :] * -1e9, (TB, S, S))
    bias_h = jnp.concatenate([bias_b] * NH, axis=0)        # [NH*TB, S, S]

    scale = 1.0 / math.sqrt(DH)

    h = _layernorm(x, eg, eb)                               # [M, H] f32

    def heads(cols):
        # list of NH lane-slices [M, DH] -> head-batched [NH*TB, S, DH]
        # (sublane concat + pure major-dim split; no lane relayout).
        return jnp.concatenate(cols, axis=0).reshape(NH * TB, S, DH)

    # ALBERT: the same layer parameters are reused every layer; L=2 so a static
    # unroll is fine (switch to lax.fori_loop if L grows).
    for _ in range(L):
        hb = h.astype(bf)
        # ONE fused QKV projection on flattened rows: [M, H] x [H, 3H].
        qkv = jnp.dot(hb, wqkv, preferred_element_type=jnp.float32) + bqkv

        qh = heads([qkv[:, n * DH:(n + 1) * DH] for n in range(NH)]).astype(bf)
        kh = heads([qkv[:, H + n * DH:H + (n + 1) * DH] for n in range(NH)]).astype(bf)
        vh = heads([qkv[:, 2 * H + n * DH:2 * H + (n + 1) * DH] for n in range(NH)]).astype(bf)

        # Head-batched scores / softmax / PV (single einsum each per layer).
        s = jnp.einsum('bqd,bkd->bqk', qh, kh,
                       preferred_element_type=jnp.float32) * scale + bias_h
        s = s - jnp.max(s, axis=-1, keepdims=True)          # f32 softmax
        e = jnp.exp(s)
        denom = jnp.sum(e, axis=-1, keepdims=True)          # [NH*TB, S, 1]
        ctx = jnp.einsum('bqk,bkd->bqd', e.astype(bf), vh,
                         preferred_element_type=jnp.float32)
        # Normalize AFTER the PV matmul (one multiply on the small ctx tensor,
        # reciprocal on the EUP slot).
        ctx = ctx * pl.reciprocal(denom, approx=True)       # [NH*TB, S, DH]

        # Heads back to lanes: [NH*TB, S, DH] -> [NH, M, DH] -> concat lanes -> [M, H]
        ctx2 = ctx.reshape(NH, M, DH)
        ctx_flat = jnp.concatenate([ctx2[n] for n in range(NH)], axis=-1)

        attn_out = jnp.dot(ctx_flat.astype(bf), wo,
                           preferred_element_type=jnp.float32) + bo
        h = _layernorm(h + attn_out, ag, ab)

        ff = jnp.dot(h.astype(bf), w1, preferred_element_type=jnp.float32) + b1
        ff = jax.nn.gelu(ff, approximate=True)   # HF ALBERT uses gelu_new (tanh form)
        ff = jnp.dot(ff.astype(bf), w2, preferred_element_type=jnp.float32) + b2
        h = _layernorm(h + ff, fg, fb)

    # ---- masked mean pooling for both sentence sets at once ----
    h3 = h.reshape(TB, S, H)                                # pure major-dim split
    mask3 = mask2[:, :, None]                               # [TB, S, 1]
    pooled = jnp.sum(h3 * mask3, axis=1)                    # [TB, H]
    counts = jnp.sum(mask2, axis=-1, keepdims=True)         # [TB, 1]
    counts = jnp.maximum(counts, 1e-9)                      # clamp: no NaN on all-pad rows
    pooled = pooled / counts

    # ---- cosine similarity between set A (first B rows) and set B (last B) ----
    # torch.cosine_similarity clamps each norm at eps=1e-8; equivalent below via
    # clamping the squared norms at eps^2 and one rsqrt (EUP).
    pa = pooled[:B]
    pb = pooled[B:]
    dot = jnp.sum(pa * pb, axis=-1, keepdims=True)          # [B, 1]
    na2 = jnp.sum(pa * pa, axis=-1, keepdims=True)
    nb2 = jnp.sum(pb * pb, axis=-1, keepdims=True)
    eps2 = 1e-16
    sim_ref[...] = dot * jax.lax.rsqrt(jnp.maximum(na2, eps2) * jnp.maximum(nb2, eps2))


# --------------------------------------------------------------------------
# Wrappers
# --------------------------------------------------------------------------
def sentence_bert_forward(ids_a, mask_a, ids_b, mask_b, params):
    """Mirrors SentenceBert.forward on an already-tokenized batch of pairs."""
    ids = jnp.concatenate([ids_a, ids_b], axis=0)           # [TB, S]
    mask2 = jnp.concatenate([mask_a, mask_b], axis=0)       # [TB, S]

    # One XLA gather for both sets (embedding lookup + position embeddings),
    # flattened to [M, H] so every in-kernel projection is one 2-D matmul.
    x = jnp.take(params['word_emb'], ids, axis=0) + params['pos_emb'][None, :, :]
    x_flat = x.reshape(M, H)

    args = (x_flat, mask2, params['vecs'],
            params['wqkv'], params['wo'], params['w1'], params['w2'])
    sim = pl.pallas_call(
        sbert_fused_kernel,
        out_shape=jax.ShapeDtypeStruct((B, 1), jnp.float32),
        in_specs=[pl.BlockSpec(memory_space=pltpu.MemorySpace.VMEM)
                  for _ in range(len(args))],
        out_specs=pl.BlockSpec(memory_space=pltpu.MemorySpace.VMEM),
    )(*args)
    return sim[:, 0]                                        # [B] cosine similarities


def _pack_vecs(*vectors):
    """Pack the small bias / LayerNorm vectors into one [n_rows, 128] array."""
    rows = []
    for v in vectors:
        v = jnp.reshape(v, (-1,)).astype(jnp.float32)
        rows.append(jnp.pad(v, (0, 128 - v.shape[0])))
    return jnp.stack(rows, axis=0)


def init_params(key):
    ks = jax.random.split(key, 8)
    std = 0.02
    w = lambda k, shp: jax.random.normal(k, shp, jnp.float32) * std
    ones = lambda n: jnp.ones((n,), jnp.float32)
    zeros = lambda n: jnp.zeros((n,), jnp.float32)

    wq, wk, wv = w(ks[2], (H, H)), w(ks[3], (H, H)), w(ks[4], (H, H))
    params = {
        'word_emb': w(ks[0], (V, H)),
        'pos_emb':  w(ks[1], (S, H)),
        # Fused QKV weight + standalone projections, stored bf16 for the MXU.
        'wqkv': jnp.concatenate([wq, wk, wv], axis=1).astype(jnp.bfloat16),  # [H, 3H]
        'wo':   w(ks[5], (H, H)).astype(jnp.bfloat16),
        'w1':   w(ks[6], (H, I)).astype(jnp.bfloat16),
        'w2':   w(ks[7], (I, H)).astype(jnp.bfloat16),
        # Packed small vectors (row order must match the kernel's slicing):
        #  0: emb LN gamma   1: emb LN beta
        #  2: bo             3: attn LN gamma   4: attn LN beta
        #  5: b2             6: ffn LN gamma    7: ffn LN beta
        #  8: fused bqkv     9: b1
        'vecs': _pack_vecs(ones(H), zeros(H),
                           zeros(H), ones(H), zeros(H),
                           zeros(H), ones(H), zeros(H),
                           zeros(3 * H), zeros(I)),
    }
    return params


if __name__ == "__main__":
    key = jax.random.PRNGKey(0)
    kp, ka, kb = jax.random.split(key, 3)
    params = init_params(kp)

    # Deterministic synthetic "tokenized" sentence pairs (padding='longest').
    ids_a = jax.random.randint(ka, (B, S), 0, V, dtype=jnp.int32)
    ids_b = jax.random.randint(kb, (B, S), 0, V, dtype=jnp.int32)
    lens_a = jnp.array([8, 5], jnp.int32)   # second sentence in set A is padded
    lens_b = jnp.array([6, 8], jnp.int32)   # first sentence in set B is padded
    pos = jnp.arange(S, dtype=jnp.int32)[None, :]
    mask_a = (pos < lens_a[:, None]).astype(jnp.float32)
    mask_b = (pos < lens_b[:, None]).astype(jnp.float32)

    fwd = jax.jit(sentence_bert_forward)
    sims = fwd(ids_a, mask_a, ids_b, mask_b, params)
    sims = jax.block_until_ready(sims)
    assert sims.shape == (B,)
    assert bool(jnp.all(jnp.isfinite(sims)))
    print("KERNEL_OK")
</pallas_src>

<mosaic_0001>
module attributes {stable_mosaic.version = 11 : i64} {
  func.func @sbert_fused_kernel(%arg0: memref<32x32xf32, #tpu.memory_space<vmem>>, %arg1: memref<4x8xf32, #tpu.memory_space<vmem>>, %arg2: memref<10x128xf32, #tpu.memory_space<vmem>>, %arg3: memref<32x96xbf16, #tpu.memory_space<vmem>>, %arg4: memref<32x32xbf16, #tpu.memory_space<vmem>>, %arg5: memref<32x64xbf16, #tpu.memory_space<vmem>>, %arg6: memref<64x32xbf16, #tpu.memory_space<vmem>>, %arg7: memref<2x1xf32, #tpu.memory_space<vmem>>) attributes {dimension_semantics = [], scalar_prefetch = 0 : i64, scratch_operands = 0 : i64, tpu.core_type = #tpu.core_type<tc>} {
    %c0 = arith.constant 0 : index
    %c0_0 = arith.constant 0 : index
    %0 = vector.load %arg0[%c0, %c0_0] : memref<32x32xf32, #tpu.memory_space<vmem>>, vector<32x32xf32>
    %c0_1 = arith.constant 0 : index
    %c0_2 = arith.constant 0 : index
    %1 = vector.load %arg1[%c0_1, %c0_2] : memref<4x8xf32, #tpu.memory_space<vmem>>, vector<4x8xf32>
    %c0_3 = arith.constant 0 : index
    %c0_4 = arith.constant 0 : index
    %2 = vector.load %arg2[%c0_3, %c0_4] : memref<10x128xf32, #tpu.memory_space<vmem>>, vector<10x128xf32>
    %3 = vector.extract_strided_slice %2 {offsets = [0, 0], sizes = [1, 32], strides = [1, 1]} : vector<10x128xf32> to vector<1x32xf32>
    %4 = vector.extract_strided_slice %2 {offsets = [1, 0], sizes = [1, 32], strides = [1, 1]} : vector<10x128xf32> to vector<1x32xf32>
    %5 = vector.extract_strided_slice %2 {offsets = [2, 0], sizes = [1, 32], strides = [1, 1]} : vector<10x128xf32> to vector<1x32xf32>
    %6 = vector.extract_strided_slice %2 {offsets = [3, 0], sizes = [1, 32], strides = [1, 1]} : vector<10x128xf32> to vector<1x32xf32>
    %7 = vector.extract_strided_slice %2 {offsets = [4, 0], sizes = [1, 32], strides = [1, 1]} : vector<10x128xf32> to vector<1x32xf32>
    %8 = vector.extract_strided_slice %2 {offsets = [5, 0], sizes = [1, 32], strides = [1, 1]} : vector<10x128xf32> to vector<1x32xf32>
    %9 = vector.extract_strided_slice %2 {offsets = [6, 0], sizes = [1, 32], strides = [1, 1]} : vector<10x128xf32> to vector<1x32xf32>
    %10 = vector.extract_strided_slice %2 {offsets = [7, 0], sizes = [1, 32], strides = [1, 1]} : vector<10x128xf32> to vector<1x32xf32>
    %11 = vector.extract_strided_slice %2 {offsets = [8, 0], sizes = [1, 96], strides = [1, 1]} : vector<10x128xf32> to vector<1x96xf32>
    %12 = vector.extract_strided_slice %2 {offsets = [9, 0], sizes = [1, 64], strides = [1, 1]} : vector<10x128xf32> to vector<1x64xf32>
    %c0_5 = arith.constant 0 : index
    %c0_6 = arith.constant 0 : index
    %13 = vector.load %arg3[%c0_5, %c0_6] : memref<32x96xbf16, #tpu.memory_space<vmem>>, vector<32x96xbf16>
    %c0_7 = arith.constant 0 : index
    %c0_8 = arith.constant 0 : index
    %14 = vector.load %arg4[%c0_7, %c0_8] : memref<32x32xbf16, #tpu.memory_space<vmem>>, vector<32x32xbf16>
    %c0_9 = arith.constant 0 : index
    %c0_10 = arith.constant 0 : index
    %15 = vector.load %arg5[%c0_9, %c0_10] : memref<32x64xbf16, #tpu.memory_space<vmem>>, vector<32x64xbf16>
    %c0_11 = arith.constant 0 : index
    %c0_12 = arith.constant 0 : index
    %16 = vector.load %arg6[%c0_11, %c0_12] : memref<64x32xbf16, #tpu.memory_space<vmem>>, vector<64x32xbf16>
    %cst = arith.constant 1.000000e+00 : f32
    %17 = vector.broadcast %cst : f32 to vector<4x8xf32>
    %18 = arith.subf %17, %1 : vector<4x8xf32>
    %19 = vector.shape_cast %18 : vector<4x8xf32> to vector<4x1x8xf32>
    %cst_13 = arith.constant -1.000000e+09 : f32
    %20 = vector.broadcast %cst_13 : f32 to vector<4x1x8xf32>
    %21 = arith.mulf %19, %20 : vector<4x1x8xf32>
    %22 = vector.shape_cast %21 : vector<4x1x8xf32> to vector<4x1x8xf32>
    %23 = vector.broadcast %22 : vector<4x1x8xf32> to vector<4x8x8xf32>
    %24 = tpu.concatenate %23, %23 in 0 : vector<4x8x8xf32>, vector<4x8x8xf32> -> vector<8x8x8xf32>
    %cst_14 = arith.constant dense<0.000000e+00> : vector<32xf32>
    %25 = vector.multi_reduction <add>, %0, %cst_14 [1] : vector<32x32xf32> to vector<32xf32>
    %26 = vector.shape_cast %25 : vector<32xf32> to vector<32x1xf32>
    %cst_15 = arith.constant 3.200000e+01 : f32
    %27 = vector.broadcast %cst_15 : f32 to vector<32x1xf32>
    %28 = arith.divf %26, %27 : vector<32x1xf32>
    %29 = vector.broadcast %28 : vector<32x1xf32> to vector<32x32xf32>
    %30 = arith.subf %0, %29 : vector<32x32xf32>
    %31 = arith.mulf %30, %30 : vector<32x32xf32>
    %cst_16 = arith.constant dense<0.000000e+00> : vector<32xf32>
    %32 = vector.multi_reduction <add>, %31, %cst_16 [1] : vector<32x32xf32> to vector<32xf32>
    %33 = vector.shape_cast %32 : vector<32xf32> to vector<32x1xf32>
    %cst_17 = arith.constant 3.200000e+01 : f32
    %34 = vector.broadcast %cst_17 : f32 to vector<32x1xf32>
    %35 = arith.divf %33, %34 : vector<32x1xf32>
    %36 = vector.broadcast %28 : vector<32x1xf32> to vector<32x32xf32>
    %37 = arith.subf %0, %36 : vector<32x32xf32>
    %cst_18 = arith.constant 9.99999996E-13 : f32
    %38 = vector.broadcast %cst_18 : f32 to vector<32x1xf32>
    %39 = arith.addf %35, %38 : vector<32x1xf32>
    %40 = math.rsqrt %39 : vector<32x1xf32>
    %41 = vector.broadcast %40 : vector<32x1xf32> to vector<32x32xf32>
    %42 = arith.mulf %37, %41 : vector<32x32xf32>
    %43 = vector.broadcast %3 : vector<1x32xf32> to vector<32x32xf32>
    %44 = arith.mulf %42, %43 : vector<32x32xf32>
    %45 = vector.broadcast %4 : vector<1x32xf32> to vector<32x32xf32>
    %46 = arith.addf %44, %45 : vector<32x32xf32>
    %47 = arith.truncf %46 : vector<32x32xf32> to vector<32x32xbf16>
    %cst_19 = arith.constant dense<0.000000e+00> : vector<32x96xf32>
    %48 = tpu.matmul %47, %13, %cst_19 {dimension_numbers = #tpu.dot_dimension_numbers<[1], [0], [0], [1], [0, 0, 1, 1], [], []>} : vector<32x32xbf16>, vector<32x96xbf16>, vector<32x96xf32> -> vector<32x96xf32>
    %49 = vector.broadcast %11 : vector<1x96xf32> to vector<32x96xf32>
    %50 = arith.addf %48, %49 : vector<32x96xf32>
    %51 = vector.extract_strided_slice %50 {offsets = [0, 0], sizes = [32, 16], strides = [1, 1]} : vector<32x96xf32> to vector<32x16xf32>
    %52 = vector.extract_strided_slice %50 {offsets = [0, 16], sizes = [32, 16], strides = [1, 1]} : vector<32x96xf32> to vector<32x16xf32>
    %53 = tpu.concatenate %51, %52 in 0 : vector<32x16xf32>, vector<32x16xf32> -> vector<64x16xf32>
    %54 = vector.shape_cast %53 : vector<64x16xf32> to vector<8x8x16xf32>
    %55 = arith.truncf %54 : vector<8x8x16xf32> to vector<8x8x16xbf16>
    %56 = vector.extract_strided_slice %50 {offsets = [0, 32], sizes = [32, 16], strides = [1, 1]} : vector<32x96xf32> to vector<32x16xf32>
    %57 = vector.extract_strided_slice %50 {offsets = [0, 48], sizes = [32, 16], strides = [1, 1]} : vector<32x96xf32> to vector<32x16xf32>
    %58 = tpu.concatenate %56, %57 in 0 : vector<32x16xf32>, vector<32x16xf32> -> vector<64x16xf32>
    %59 = vector.shape_cast %58 : vector<64x16xf32> to vector<8x8x16xf32>
    %60 = arith.truncf %59 : vector<8x8x16xf32> to vector<8x8x16xbf16>
    %61 = vector.extract_strided_slice %50 {offsets = [0, 64], sizes = [32, 16], strides = [1, 1]} : vector<32x96xf32> to vector<32x16xf32>
    %62 = vector.extract_strided_slice %50 {offsets = [0, 80], sizes = [32, 16], strides = [1, 1]} : vector<32x96xf32> to vector<32x16xf32>
    %63 = tpu.concatenate %61, %62 in 0 : vector<32x16xf32>, vector<32x16xf32> -> vector<64x16xf32>
    %64 = vector.shape_cast %63 : vector<64x16xf32> to vector<8x8x16xf32>
    %65 = arith.truncf %64 : vector<8x8x16xf32> to vector<8x8x16xbf16>
    "tpu.trace_start"() <{level = 10 : i32, message = "bqd,bkd->bqk"}> : () -> ()
    %cst_20 = arith.constant dense<0.000000e+00> : vector<8x8x8xf32>
    %66 = tpu.matmul %55, %60, %cst_20 {dimension_numbers = #tpu.dot_dimension_numbers<[2], [2], [1], [1], [0, 0, 0, 1, 1, 1], [0], [0]>} : vector<8x8x16xbf16>, vector<8x8x16xbf16>, vector<8x8x8xf32> -> vector<8x8x8xf32>
    "tpu.trace_stop"() : () -> ()
    %cst_21 = arith.constant 2.500000e-01 : f32
    %67 = vector.broadcast %cst_21 : f32 to vector<8x8x8xf32>
    %68 = arith.mulf %66, %67 : vector<8x8x8xf32>
    %69 = arith.addf %68, %24 : vector<8x8x8xf32>
    %cst_22 = arith.constant dense<0xFF800000> : vector<8x8xf32>
    %70 = vector.multi_reduction <maximumf>, %69, %cst_22 [2] : vector<8x8x8xf32> to vector<8x8xf32>
    %71 = vector.shape_cast %70 : vector<8x8xf32> to vector<8x8x1xf32>
    %72 = vector.broadcast %71 : vector<8x8x1xf32> to vector<8x8x8xf32>
    %73 = arith.subf %69, %72 : vector<8x8x8xf32>
    %74 = math.exp %73 : vector<8x8x8xf32>
    %cst_23 = arith.constant dense<0.000000e+00> : vector<8x8xf32>
    %75 = vector.multi_reduction <add>, %74, %cst_23 [2] : vector<8x8x8xf32> to vector<8x8xf32>
    %76 = vector.shape_cast %75 : vector<8x8xf32> to vector<8x8x1xf32>
    %77 = arith.truncf %74 : vector<8x8x8xf32> to vector<8x8x8xbf16>
    "tpu.trace_start"() <{level = 10 : i32, message = "bqk,bkd->bqd"}> : () -> ()
    %cst_24 = arith.constant dense<0.000000e+00> : vector<8x8x16xf32>
    %78 = tpu.matmul %77, %65, %cst_24 {dimension_numbers = #tpu.dot_dimension_numbers<[2], [1], [1], [2], [0, 0, 0, 1, 1, 2], [0], [0]>} : vector<8x8x8xbf16>, vector<8x8x16xbf16>, vector<8x8x16xf32> -> vector<8x8x16xf32>
    "tpu.trace_stop"() : () -> ()
    %79 = tpu.reciprocal %76 {approx = true} : vector<8x8x1xf32> -> vector<8x8x1xf32>
    %80 = vector.broadcast %79 : vector<8x8x1xf32> to vector<8x8x16xf32>
    %81 = arith.mulf %78, %80 : vector<8x8x16xf32>
    %82 = vector.shape_cast %81 : vector<8x8x16xf32> to vector<2x32x16xf32>
    %83 = vector.extract_strided_slice %82 {offsets = [0, 0, 0], sizes = [1, 32, 16], strides = [1, 1, 1]} : vector<2x32x16xf32> to vector<1x32x16xf32>
    %84 = vector.shape_cast %83 : vector<1x32x16xf32> to vector<32x16xf32>
    %85 = vector.extract_strided_slice %82 {offsets = [1, 0, 0], sizes = [1, 32, 16], strides = [1, 1, 1]} : vector<2x32x16xf32> to vector<1x32x16xf32>
    %86 = vector.shape_cast %85 : vector<1x32x16xf32> to vector<32x16xf32>
    %87 = tpu.concatenate %84, %86 in 1 : vector<32x16xf32>, vector<32x16xf32> -> vector<32x32xf32>
    %88 = arith.truncf %87 : vector<32x32xf32> to vector<32x32xbf16>
    %cst_25 = arith.constant dense<0.000000e+00> : vector<32x32xf32>
    %89 = tpu.matmul %88, %14, %cst_25 {dimension_numbers = #tpu.dot_dimension_numbers<[1], [0], [0], [1], [0, 0, 1, 1], [], []>} : vector<32x32xbf16>, vector<32x32xbf16>, vector<32x32xf32> -> vector<32x32xf32>
    %90 = vector.broadcast %5 : vector<1x32xf32> to vector<32x32xf32>
    %91 = arith.addf %89, %90 : vector<32x32xf32>
    %92 = arith.addf %46, %91 : vector<32x32xf32>
    %cst_26 = arith.constant dense<0.000000e+00> : vector<32xf32>
    %93 = vector.multi_reduction <add>, %92, %cst_26 [1] : vector<32x32xf32> to vector<32xf32>
    %94 = vector.shape_cast %93 : vector<32xf32> to vector<32x1xf32>
    %cst_27 = arith.constant 3.200000e+01 : f32
    %95 = vector.broadcast %cst_27 : f32 to vector<32x1xf32>
    %96 = arith.divf %94, %95 : vector<32x1xf32>
    %97 = vector.broadcast %96 : vector<32x1xf32> to vector<32x32xf32>
    %98 = arith.subf %92, %97 : vector<32x32xf32>
    %99 = arith.mulf %98, %98 : vector<32x32xf32>
    %cst_28 = arith.constant dense<0.000000e+00> : vector<32xf32>
    %100 = vector.multi_reduction <add>, %99, %cst_28 [1] : vector<32x32xf32> to vector<32xf32>
    %101 = vector.shape_cast %100 : vector<32xf32> to vector<32x1xf32>
    %cst_29 = arith.constant 3.200000e+01 : f32
    %102 = vector.broadcast %cst_29 : f32 to vector<32x1xf32>
    %103 = arith.divf %101, %102 : vector<32x1xf32>
    %104 = vector.broadcast %96 : vector<32x1xf32> to vector<32x32xf32>
    %105 = arith.subf %92, %104 : vector<32x32xf32>
    %cst_30 = arith.constant 9.99999996E-13 : f32
    %106 = vector.broadcast %cst_30 : f32 to vector<32x1xf32>
    %107 = arith.addf %103, %106 : vector<32x1xf32>
    %108 = math.rsqrt %107 : vector<32x1xf32>
    %109 = vector.broadcast %108 : vector<32x1xf32> to vector<32x32xf32>
    %110 = arith.mulf %105, %109 : vector<32x32xf32>
    %111 = vector.broadcast %6 : vector<1x32xf32> to vector<32x32xf32>
    %112 = arith.mulf %110, %111 : vector<32x32xf32>
    %113 = vector.broadcast %7 : vector<1x32xf32> to vector<32x32xf32>
    %114 = arith.addf %112, %113 : vector<32x32xf32>
    %115 = arith.truncf %114 : vector<32x32xf32> to vector<32x32xbf16>
    %cst_31 = arith.constant dense<0.000000e+00> : vector<32x64xf32>
    %116 = tpu.matmul %115, %15, %cst_31 {dimension_numbers = #tpu.dot_dimension_numbers<[1], [0], [0], [1], [0, 0, 1, 1], [], []>} : vector<32x32xbf16>, vector<32x64xbf16>, vector<32x64xf32> -> vector<32x64xf32>
    %117 = vector.broadcast %12 : vector<1x64xf32> to vector<32x64xf32>
    %118 = arith.addf %116, %117 : vector<32x64xf32>
    %119 = arith.mulf %118, %118 : vector<32x64xf32>
    %120 = arith.mulf %118, %119 : vector<32x64xf32>
    %cst_32 = arith.constant 4.471500e-02 : f32
    %121 = vector.broadcast %cst_32 : f32 to vector<32x64xf32>
    %122 = arith.mulf %121, %120 : vector<32x64xf32>
    %123 = arith.addf %118, %122 : vector<32x64xf32>
    %cst_33 = arith.constant 0.797884583 : f32
    %124 = vector.broadcast %cst_33 : f32 to vector<32x64xf32>
    %125 = arith.mulf %124, %123 : vector<32x64xf32>
    %126 = math.tanh %125 : vector<32x64xf32>
    %cst_34 = arith.constant 1.000000e+00 : f32
    %127 = vector.broadcast %cst_34 : f32 to vector<32x64xf32>
    %128 = arith.addf %127, %126 : vector<32x64xf32>
    %cst_35 = arith.constant 5.000000e-01 : f32
    %129 = vector.broadcast %cst_35 : f32 to vector<32x64xf32>
    %130 = arith.mulf %129, %128 : vector<32x64xf32>
    %131 = arith.mulf %118, %130 : vector<32x64xf32>
    %132 = arith.truncf %131 : vector<32x64xf32> to vector<32x64xbf16>
    %cst_36 = arith.constant dense<0.000000e+00> : vector<32x32xf32>
    %133 = tpu.matmul %132, %16, %cst_36 {dimension_numbers = #tpu.dot_dimension_numbers<[1], [0], [0], [1], [0, 0, 1, 1], [], []>} : vector<32x64xbf16>, vector<64x32xbf16>, vector<32x32xf32> -> vector<32x32xf32>
    %134 = vector.broadcast %8 : vector<1x32xf32> to vector<32x32xf32>
    %135 = arith.addf %133, %134 : vector<32x32xf32>
    %136 = arith.addf %114, %135 : vector<32x32xf32>
    %cst_37 = arith.constant dense<0.000000e+00> : vector<32xf32>
    %137 = vector.multi_reduction <add>, %136, %cst_37 [1] : vector<32x32xf32> to vector<32xf32>
    %138 = vector.shape_cast %137 : vector<32xf32> to vector<32x1xf32>
    %cst_38 = arith.constant 3.200000e+01 : f32
    %139 = vector.broadcast %cst_38 : f32 to vector<32x1xf32>
    %140 = arith.divf %138, %139 : vector<32x1xf32>
    %141 = vector.broadcast %140 : vector<32x1xf32> to vector<32x32xf32>
    %142 = arith.subf %136, %141 : vector<32x32xf32>
    %143 = arith.mulf %142, %142 : vector<32x32xf32>
    %cst_39 = arith.constant dense<0.000000e+00> : vector<32xf32>
    %144 = vector.multi_reduction <add>, %143, %cst_39 [1] : vector<32x32xf32> to vector<32xf32>
    %145 = vector.shape_cast %144 : vector<32xf32> to vector<32x1xf32>
    %cst_40 = arith.constant 3.200000e+01 : f32
    %146 = vector.broadcast %cst_40 : f32 to vector<32x1xf32>
    %147 = arith.divf %145, %146 : vector<32x1xf32>
    %148 = vector.broadcast %140 : vector<32x1xf32> to vector<32x32xf32>
    %149 = arith.subf %136, %148 : vector<32x32xf32>
    %cst_41 = arith.constant 9.99999996E-13 : f32
    %150 = vector.broadcast %cst_41 : f32 to vector<32x1xf32>
    %151 = arith.addf %147, %150 : vector<32x1xf32>
    %152 = math.rsqrt %151 : vector<32x1xf32>
    %153 = vector.broadcast %152 : vector<32x1xf32> to vector<32x32xf32>
    %154 = arith.mulf %149, %153 : vector<32x32xf32>
    %155 = vector.broadcast %9 : vector<1x32xf32> to vector<32x32xf32>
    %156 = arith.mulf %154, %155 : vector<32x32xf32>
    %157 = vector.broadcast %10 : vector<1x32xf32> to vector<32x32xf32>
    %158 = arith.addf %156, %157 : vector<32x32xf32>
    %159 = arith.truncf %158 : vector<32x32xf32> to vector<32x32xbf16>
    %cst_42 = arith.constant dense<0.000000e+00> : vector<32x96xf32>
    %160 = tpu.matmul %159, %13, %cst_42 {dimension_numbers = #tpu.dot_dimension_numbers<[1], [0], [0], [1], [0, 0, 1, 1], [], []>} : vector<32x32xbf16>, vector<32x96xbf16>, vector<32x96xf32> -> vector<32x96xf32>
    %161 = vector.broadcast %11 : vector<1x96xf32> to vector<32x96xf32>
    %162 = arith.addf %160, %161 : vector<32x96xf32>
    %163 = vector.extract_strided_slice %162 {offsets = [0, 0], sizes = [32, 16], strides = [1, 1]} : vector<32x96xf32> to vector<32x16xf32>
    %164 = vector.extract_strided_slice %162 {offsets = [0, 16], sizes = [32, 16], strides = [1, 1]} : vector<32x96xf32> to vector<32x16xf32>
    %165 = tpu.concatenate %163, %164 in 0 : vector<32x16xf32>, vector<32x16xf32> -> vector<64x16xf32>
    %166 = vector.shape_cast %165 : vector<64x16xf32> to vector<8x8x16xf32>
    %167 = arith.truncf %166 : vector<8x8x16xf32> to vector<8x8x16xbf16>
    %168 = vector.extract_strided_slice %162 {offsets = [0, 32], sizes = [32, 16], strides = [1, 1]} : vector<32x96xf32> to vector<32x16xf32>
    %169 = vector.extract_strided_slice %162 {offsets = [0, 48], sizes = [32, 16], strides = [1, 1]} : vector<32x96xf32> to vector<32x16xf32>
    %170 = tpu.concatenate %168, %169 in 0 : vector<32x16xf32>, vector<32x16xf32> -> vector<64x16xf32>
    %171 = vector.shape_cast %170 : vector<64x16xf32> to vector<8x8x16xf32>
    %172 = arith.truncf %171 : vector<8x8x16xf32> to vector<8x8x16xbf16>
    %173 = vector.extract_strided_slice %162 {offsets = [0, 64], sizes = [32, 16], strides = [1, 1]} : vector<32x96xf32> to vector<32x16xf32>
    %174 = vector.extract_strided_slice %162 {offsets = [0, 80], sizes = [32, 16], strides = [1, 1]} : vector<32x96xf32> to vector<32x16xf32>
    %175 = tpu.concatenate %173, %174 in 0 : vector<32x16xf32>, vector<32x16xf32> -> vector<64x16xf32>
    %176 = vector.shape_cast %175 : vector<64x16xf32> to vector<8x8x16xf32>
    %177 = arith.truncf %176 : vector<8x8x16xf32> to vector<8x8x16xbf16>
    "tpu.trace_start"() <{level = 10 : i32, message = "bqd,bkd->bqk"}> : () -> ()
    %cst_43 = arith.constant dense<0.000000e+00> : vector<8x8x8xf32>
    %178 = tpu.matmul %167, %172, %cst_43 {dimension_numbers = #tpu.dot_dimension_numbers<[2], [2], [1], [1], [0, 0, 0, 1, 1, 1], [0], [0]>} : vector<8x8x16xbf16>, vector<8x8x16xbf16>, vector<8x8x8xf32> -> vector<8x8x8xf32>
    "tpu.trace_stop"() : () -> ()
    %cst_44 = arith.constant 2.500000e-01 : f32
    %179 = vector.broadcast %cst_44 : f32 to vector<8x8x8xf32>
    %180 = arith.mulf %178, %179 : vector<8x8x8xf32>
    %181 = arith.addf %180, %24 : vector<8x8x8xf32>
    %cst_45 = arith.constant dense<0xFF800000> : vector<8x8xf32>
    %182 = vector.multi_reduction <maximumf>, %181, %cst_45 [2] : vector<8x8x8xf32> to vector<8x8xf32>
    %183 = vector.shape_cast %182 : vector<8x8xf32> to vector<8x8x1xf32>
    %184 = vector.broadcast %183 : vector<8x8x1xf32> to vector<8x8x8xf32>
    %185 = arith.subf %181, %184 : vector<8x8x8xf32>
    %186 = math.exp %185 : vector<8x8x8xf32>
    %cst_46 = arith.constant dense<0.000000e+00> : vector<8x8xf32>
    %187 = vector.multi_reduction <add>, %186, %cst_46 [2] : vector<8x8x8xf32> to vector<8x8xf32>
    %188 = vector.shape_cast %187 : vector<8x8xf32> to vector<8x8x1xf32>
    %189 = arith.truncf %186 : vector<8x8x8xf32> to vector<8x8x8xbf16>
    "tpu.trace_start"() <{level = 10 : i32, message = "bqk,bkd->bqd"}> : () -> ()
    %cst_47 = arith.constant dense<0.000000e+00> : vector<8x8x16xf32>
    %190 = tpu.matmul %189, %177, %cst_47 {dimension_numbers = #tpu.dot_dimension_numbers<[2], [1], [1], [2], [0, 0, 0, 1, 1, 2], [0], [0]>} : vector<8x8x8xbf16>, vector<8x8x16xbf16>, vector<8x8x16xf32> -> vector<8x8x16xf32>
    "tpu.trace_stop"() : () -> ()
    %191 = tpu.reciprocal %188 {approx = true} : vector<8x8x1xf32> -> vector<8x8x1xf32>
    %192 = vector.broadcast %191 : vector<8x8x1xf32> to vector<8x8x16xf32>
    %193 = arith.mulf %190, %192 : vector<8x8x16xf32>
    %194 = vector.shape_cast %193 : vector<8x8x16xf32> to vector<2x32x16xf32>
    %195 = vector.extract_strided_slice %194 {offsets = [0, 0, 0], sizes = [1, 32, 16], strides = [1, 1, 1]} : vector<2x32x16xf32> to vector<1x32x16xf32>
    %196 = vector.shape_cast %195 : vector<1x32x16xf32> to vector<32x16xf32>
    %197 = vector.extract_strided_slice %194 {offsets = [1, 0, 0], sizes = [1, 32, 16], strides = [1, 1, 1]} : vector<2x32x16xf32> to vector<1x32x16xf32>
    %198 = vector.shape_cast %197 : vector<1x32x16xf32> to vector<32x16xf32>
    %199 = tpu.concatenate %196, %198 in 1 : vector<32x16xf32>, vector<32x16xf32> -> vector<32x32xf32>
    %200 = arith.truncf %199 : vector<32x32xf32> to vector<32x32xbf16>
    %cst_48 = arith.constant dense<0.000000e+00> : vector<32x32xf32>
    %201 = tpu.matmul %200, %14, %cst_48 {dimension_numbers = #tpu.dot_dimension_numbers<[1], [0], [0], [1], [0, 0, 1, 1], [], []>} : vector<32x32xbf16>, vector<32x32xbf16>, vector<32x32xf32> -> vector<32x32xf32>
    %202 = vector.broadcast %5 : vector<1x32xf32> to vector<32x32xf32>
    %203 = arith.addf %201, %202 : vector<32x32xf32>
    %204 = arith.addf %158, %203 : vector<32x32xf32>
    %cst_49 = arith.constant dense<0.000000e+00> : vector<32xf32>
    %205 = vector.multi_reduction <add>, %204, %cst_49 [1] : vector<32x32xf32> to vector<32xf32>
    %206 = vector.shape_cast %205 : vector<32xf32> to vector<32x1xf32>
    %cst_50 = arith.constant 3.200000e+01 : f32
    %207 = vector.broadcast %cst_50 : f32 to vector<32x1xf32>
    %208 = arith.divf %206, %207 : vector<32x1xf32>
    %209 = vector.broadcast %208 : vector<32x1xf32> to vector<32x32xf32>
    %210 = arith.subf %204, %209 : vector<32x32xf32>
    %211 = arith.mulf %210, %210 : vector<32x32xf32>
    %cst_51 = arith.constant dense<0.000000e+00> : vector<32xf32>
    %212 = vector.multi_reduction <add>, %211, %cst_51 [1] : vector<32x32xf32> to vector<32xf32>
    %213 = vector.shape_cast %212 : vector<32xf32> to vector<32x1xf32>
    %cst_52 = arith.constant 3.200000e+01 : f32
    %214 = vector.broadcast %cst_52 : f32 to vector<32x1xf32>
    %215 = arith.divf %213, %214 : vector<32x1xf32>
    %216 = vector.broadcast %208 : vector<32x1xf32> to vector<32x32xf32>
    %217 = arith.subf %204, %216 : vector<32x32xf32>
    %cst_53 = arith.constant 9.99999996E-13 : f32
    %218 = vector.broadcast %cst_53 : f32 to vector<32x1xf32>
    %219 = arith.addf %215, %218 : vector<32x1xf32>
    %220 = math.rsqrt %219 : vector<32x1xf32>
    %221 = vector.broadcast %220 : vector<32x1xf32> to vector<32x32xf32>
    %222 = arith.mulf %217, %221 : vector<32x32xf32>
    %223 = vector.broadcast %6 : vector<1x32xf32> to vector<32x32xf32>
    %224 = arith.mulf %222, %223 : vector<32x32xf32>
    %225 = vector.broadcast %7 : vector<1x32xf32> to vector<32x32xf32>
    %226 = arith.addf %224, %225 : vector<32x32xf32>
    %227 = arith.truncf %226 : vector<32x32xf32> to vector<32x32xbf16>
    %cst_54 = arith.constant dense<0.000000e+00> : vector<32x64xf32>
    %228 = tpu.matmul %227, %15, %cst_54 {dimension_numbers = #tpu.dot_dimension_numbers<[1], [0], [0], [1], [0, 0, 1, 1], [], []>} : vector<32x32xbf16>, vector<32x64xbf16>, vector<32x64xf32> -> vector<32x64xf32>
    %229 = vector.broadcast %12 : vector<1x64xf32> to vector<32x64xf32>
    %230 = arith.addf %228, %229 : vector<32x64xf32>
    %231 = arith.mulf %230, %230 : vector<32x64xf32>
    %232 = arith.mulf %230, %231 : vector<32x64xf32>
    %cst_55 = arith.constant 4.471500e-02 : f32
    %233 = vector.broadcast %cst_55 : f32 to vector<32x64xf32>
    %234 = arith.mulf %233, %232 : vector<32x64xf32>
    %235 = arith.addf %230, %234 : vector<32x64xf32>
    %cst_56 = arith.constant 0.797884583 : f32
    %236 = vector.broadcast %cst_56 : f32 to vector<32x64xf32>
    %237 = arith.mulf %236, %235 : vector<32x64xf32>
    %238 = math.tanh %237 : vector<32x64xf32>
    %cst_57 = arith.constant 1.000000e+00 : f32
    %239 = vector.broadcast %cst_57 : f32 to vector<32x64xf32>
    %240 = arith.addf %239, %238 : vector<32x64xf32>
    %cst_58 = arith.constant 5.000000e-01 : f32
    %241 = vector.broadcast %cst_58 : f32 to vector<32x64xf32>
    %242 = arith.mulf %241, %240 : vector<32x64xf32>
    %243 = arith.mulf %230, %242 : vector<32x64xf32>
    %244 = arith.truncf %243 : vector<32x64xf32> to vector<32x64xbf16>
    %cst_59 = arith.constant dense<0.000000e+00> : vector<32x32xf32>
    %245 = tpu.matmul %244, %16, %cst_59 {dimension_numbers = #tpu.dot_dimension_numbers<[1], [0], [0], [1], [0, 0, 1, 1], [], []>} : vector<32x64xbf16>, vector<64x32xbf16>, vector<32x32xf32> -> vector<32x32xf32>
    %246 = vector.broadcast %8 : vector<1x32xf32> to vector<32x32xf32>
    %247 = arith.addf %245, %246 : vector<32x32xf32>
    %248 = arith.addf %226, %247 : vector<32x32xf32>
    %cst_60 = arith.constant dense<0.000000e+00> : vector<32xf32>
    %249 = vector.multi_reduction <add>, %248, %cst_60 [1] : vector<32x32xf32> to vector<32xf32>
    %250 = vector.shape_cast %249 : vector<32xf32> to vector<32x1xf32>
    %cst_61 = arith.constant 3.200000e+01 : f32
    %251 = vector.broadcast %cst_61 : f32 to vector<32x1xf32>
    %252 = arith.divf %250, %251 : vector<32x1xf32>
    %253 = vector.broadcast %252 : vector<32x1xf32> to vector<32x32xf32>
    %254 = arith.subf %248, %253 : vector<32x32xf32>
    %255 = arith.mulf %254, %254 : vector<32x32xf32>
    %cst_62 = arith.constant dense<0.000000e+00> : vector<32xf32>
    %256 = vector.multi_reduction <add>, %255, %cst_62 [1] : vector<32x32xf32> to vector<32xf32>
    %257 = vector.shape_cast %256 : vector<32xf32> to vector<32x1xf32>
    %cst_63 = arith.constant 3.200000e+01 : f32
    %258 = vector.broadcast %cst_63 : f32 to vector<32x1xf32>
    %259 = arith.divf %257, %258 : vector<32x1xf32>
    %260 = vector.broadcast %252 : vector<32x1xf32> to vector<32x32xf32>
    %261 = arith.subf %248, %260 : vector<32x32xf32>
    %cst_64 = arith.constant 9.99999996E-13 : f32
    %262 = vector.broadcast %cst_64 : f32 to vector<32x1xf32>
    %263 = arith.addf %259, %262 : vector<32x1xf32>
    %264 = math.rsqrt %263 : vector<32x1xf32>
    %265 = vector.broadcast %264 : vector<32x1xf32> to vector<32x32xf32>
    %266 = arith.mulf %261, %265 : vector<32x32xf32>
    %267 = vector.broadcast %9 : vector<1x32xf32> to vector<32x32xf32>
    %268 = arith.mulf %266, %267 : vector<32x32xf32>
    %269 = vector.broadcast %10 : vector<1x32xf32> to vector<32x32xf32>
    %270 = arith.addf %268, %269 : vector<32x32xf32>
    %271 = vector.shape_cast %270 : vector<32x32xf32> to vector<4x8x32xf32>
    %272 = vector.shape_cast %1 : vector<4x8xf32> to vector<4x8x1xf32>
    %273 = vector.broadcast %272 : vector<4x8x1xf32> to vector<4x8x32xf32>
    %274 = arith.mulf %271, %273 : vector<4x8x32xf32>
    %cst_65 = arith.constant dense<0.000000e+00> : vector<4x32xf32>
    %275 = vector.multi_reduction <add>, %274, %cst_65 [1] : vector<4x8x32xf32> to vector<4x32xf32>
    %cst_66 = arith.constant dense<0.000000e+00> : vector<4xf32>
    %276 = vector.multi_reduction <add>, %1, %cst_66 [1] : vector<4x8xf32> to vector<4xf32>
    %277 = vector.shape_cast %276 : vector<4xf32> to vector<4x1xf32>
    %cst_67 = arith.constant 9.99999971E-10 : f32
    %278 = vector.broadcast %cst_67 : f32 to vector<4x1xf32>
    %279 = arith.maximumf %277, %278 : vector<4x1xf32>
    %280 = vector.broadcast %279 : vector<4x1xf32> to vector<4x32xf32>
    %281 = arith.divf %275, %280 : vector<4x32xf32>
    %282 = vector.extract_strided_slice %281 {offsets = [0, 0], sizes = [2, 32], strides = [1, 1]} : vector<4x32xf32> to vector<2x32xf32>
    %283 = vector.extract_strided_slice %281 {offsets = [2, 0], sizes = [2, 32], strides = [1, 1]} : vector<4x32xf32> to vector<2x32xf32>
    %284 = arith.mulf %282, %283 : vector<2x32xf32>
    %cst_68 = arith.constant dense<0.000000e+00> : vector<2xf32>
    %285 = vector.multi_reduction <add>, %284, %cst_68 [1] : vector<2x32xf32> to vector<2xf32>
    %286 = vector.shape_cast %285 : vector<2xf32> to vector<2x1xf32>
    %287 = arith.mulf %282, %282 : vector<2x32xf32>
    %cst_69 = arith.constant dense<0.000000e+00> : vector<2xf32>
    %288 = vector.multi_reduction <add>, %287, %cst_69 [1] : vector<2x32xf32> to vector<2xf32>
    %289 = vector.shape_cast %288 : vector<2xf32> to vector<2x1xf32>
    %290 = arith.mulf %283, %283 : vector<2x32xf32>
    %cst_70 = arith.constant dense<0.000000e+00> : vector<2xf32>
    %291 = vector.multi_reduction <add>, %290, %cst_70 [1] : vector<2x32xf32> to vector<2xf32>
    %292 = vector.shape_cast %291 : vector<2xf32> to vector<2x1xf32>
    %cst_71 = arith.constant 1.000000e-16 : f32
    %293 = vector.broadcast %cst_71 : f32 to vector<2x1xf32>
    %294 = arith.maximumf %289, %293 : vector<2x1xf32>
    %cst_72 = arith.constant 1.000000e-16 : f32
    %295 = vector.broadcast %cst_72 : f32 to vector<2x1xf32>
    %296 = arith.maximumf %292, %295 : vector<2x1xf32>
    %297 = arith.mulf %294, %296 : vector<2x1xf32>
    %298 = math.rsqrt %297 : vector<2x1xf32>
    %299 = arith.mulf %286, %298 : vector<2x1xf32>
    %c0_73 = arith.constant 0 : index
    %c0_74 = arith.constant 0 : index
    %300 = vector.load %arg7[%c0_73, %c0_74] : memref<2x1xf32, #tpu.memory_space<vmem>>, vector<2x1xf32>
    tpu.vector_store %arg7[%c0_73, %c0_74], %299 {strides = array<i32>} : memref<2x1xf32, #tpu.memory_space<vmem>>, vector<2x1xf32>,
    return
  }
}

</mosaic_0001>

<llo_original>
// kernel: sentence_bert_forward.1
$region0: #{sentence_bert_forward.1}
  #allocation0 [shape = 'u32[]', space=smem, size = 0x4, offset = 0x4, fixed_abs, tag = 'smem constant byte address 0x4 - core index']
  #allocation1 [shape = 'u32[144,128]{1,0:T(1,128)}', space=vmem, size = 0x12000, scoped, tag = 'internal scratch']
  %s0 = inlined_call_operand.vmem [shape: f32[32,32], index: 0, kind: input, shape index: {}]
  %s1 = inlined_call_operand.vmem [shape: f32[4,8], index: 1, kind: input, shape index: {}]
  %s2 = inlined_call_operand.vmem [shape: f32[10,128], index: 2, kind: input, shape index: {}]
  %s3 = inlined_call_operand.vmem [shape: bf16[32,96], index: 3, kind: input, shape index: {}]
  %s4 = inlined_call_operand.vmem [shape: bf16[32,32], index: 4, kind: input, shape index: {}]
  %s5 = inlined_call_operand.vmem [shape: bf16[32,64], index: 5, kind: input, shape index: {}]
  %s6 = inlined_call_operand.vmem [shape: bf16[64,32], index: 6, kind: input, shape index: {}]
  %s7 = inlined_call_operand.vmem [shape: f32[2,1], index: 7, kind: output, shape index: {}]
  %s8 = sld [smem:[#allocation0]]
  $region38: #{sentence_bert_forward.1} parent=0
    _
  %s10 = ssub.s32 1, %s8
  %s11 = scalar_select 0, %s10, %s8
  // Predicated region
  $region2: #{sentence_bert_forward.1} parent=0 // pred_check
    _
  $region3: #{sentence_bert_forward.1} parent=0 // pred_check_branch
    %13 = sbr.rel (0) target = $region5
  $region4: #{sentence_bert_forward.1} parent=0 // pred_region
    _
  $region5: #{sentence_bert_forward.1} parent=0 // pred_fallthru
    _
  // Predicated region
  $region6: #{sentence_bert_forward.1} parent=0 // pred_check
    _
  $region7: #{sentence_bert_forward.1} parent=0 // pred_check_branch
    %15 = sbr.rel (0) target = $region9
  $region8: #{sentence_bert_forward.1} parent=0 // pred_region
    _
  $region9: #{sentence_bert_forward.1} parent=0 // pred_fallthru
    _
  // Predicated region
  $region10: #{sentence_bert_forward.1} parent=0 // pred_check
    _
  $region11: #{sentence_bert_forward.1} parent=0 // pred_check_branch
    %17 = sbr.rel (0) target = $region13
  $region12: #{sentence_bert_forward.1} parent=0 // pred_region
    _
  $region13: #{sentence_bert_forward.1} parent=0 // pred_fallthru
    _
  // Predicated region
  $region14: #{sentence_bert_forward.1} parent=0 // pred_check
    _
  $region15: #{sentence_bert_forward.1} parent=0 // pred_check_branch
    %19 = sbr.rel (0) target = $region17
  $region16: #{sentence_bert_forward.1} parent=0 // pred_region
    _
  $region17: #{sentence_bert_forward.1} parent=0 // pred_fallthru
    _
  // Predicated region
  $region18: #{sentence_bert_forward.1} parent=0 // pred_check
    _
  $region19: #{sentence_bert_forward.1} parent=0 // pred_check_branch
    %21 = sbr.rel (0) target = $region21
  $region20: #{sentence_bert_forward.1} parent=0 // pred_region
    _
  $region21: #{sentence_bert_forward.1} parent=0 // pred_fallthru
    _
  // Predicated region
  $region22: #{sentence_bert_forward.1} parent=0 // pred_check
    _
  $region23: #{sentence_bert_forward.1} parent=0 // pred_check_branch
    %23 = sbr.rel (0) target = $region25
  $region24: #{sentence_bert_forward.1} parent=0 // pred_region
    _
  $region25: #{sentence_bert_forward.1} parent=0 // pred_fallthru
    _
  // Predicated region
  $region26: #{sentence_bert_forward.1} parent=0 // pred_check
    _
  $region27: #{sentence_bert_forward.1} parent=0 // pred_check_branch
    %25 = sbr.rel (0) target = $region29
  $region28: #{sentence_bert_forward.1} parent=0 // pred_region
    _
  $region29: #{sentence_bert_forward.1} parent=0 // pred_fallthru
    _
  %v27 = vld [vmem:[%s0] sm:$0xff]
  %v28 = vld [vmem:[%s0 + $0x8] sm:$0xff]
  %v29 = vld [vmem:[%s0 + $0x10] sm:$0xff]
  %v30 = vld [vmem:[%s0 + $0x18] sm:$0xff]
  %v31 = vld [vmem:[%s1] sm:$0xf]
  %v32 = vld [vmem:[%s2] sm:$0xff]
  %v33 = vld [vmem:[%s2 + $0x8] sm:$0x3]
  %v34 = vld [vmem:[%s3] sm:$0xf]
  %v35 = vld [vmem:[%s3 + $0x4] sm:$0xf]
  %v36 = vld [vmem:[%s3 + $0x8] sm:$0xf]
  %v37 = vld [vmem:[%s3 + $0xc] sm:$0xf]
  %v38 = vld [vmem:[%s4] sm:$0xf]
  %v39 = vld [vmem:[%s4 + $0x4] sm:$0xf]
  %v40 = vld [vmem:[%s4 + $0x8] sm:$0xf]
  %v41 = vld [vmem:[%s4 + $0xc] sm:$0xf]
  %v42 = vld [vmem:[%s5] sm:$0xf]
  %v43 = vld [vmem:[%s5 + $0x4] sm:$0xf]
  %v44 = vld [vmem:[%s5 + $0x8] sm:$0xf]
  %v45 = vld [vmem:[%s5 + $0xc] sm:$0xf]
  %v46 = vld [vmem:[%s6] sm:$0xf]
  %v47 = vld [vmem:[%s6 + $0x4] sm:$0xf]
  %v48 = vld [vmem:[%s6 + $0x8] sm:$0xf]
  %v49 = vld [vmem:[%s6 + $0xc] sm:$0xf]
  %v50 = vld [vmem:[%s6 + $0x10] sm:$0xf]
  %v51 = vld [vmem:[%s6 + $0x14] sm:$0xf]
  %v52 = vld [vmem:[%s6 + $0x18] sm:$0xf]
  %v53 = vld [vmem:[%s6 + $0x1c] sm:$0xf]
  %v54 = vsub.f32 1.0, %v31
  %v57 = vunpack.c.l.s4 1966171168
  %v58 = vunpack.c.0.s8 %v57
  %v59 = vlaneseq
  %v60 = vshrl.u32 %v59, 7
  %v61 = vsub.s32 %v58, %v60
  %v62 = vrot.slane %v54, %v61
  %v63 = vcombine.high %v62, %v62
  %v65 = vunpack.c.l.s4 1966171168
  %v66 = vunpack.c.0.s8 %v65
  %v67 = vlaneseq
  %v68 = vshrl.u32 %v67, 7
  %v69 = vsub.s32 %v66, %v68
  %v70 = vrot.slane %v62, %v69
  %v72 = vunpack.c.l.s4 1966171168
  %v73 = vunpack.c.0.s8 %v72
  %v74 = vlaneseq
  %v75 = vshrl.u32 %v74, 7
  %v76 = vsub.s32 %v73, %v75
  %v77 = vrot.slane %v63, %v76
  %v78 = vcombine.high %v70, %v70
  %v79 = vcombine.high %v77, %v77
  %v84 = vmul.f32 %v70, -1e+09
  %v85 = vmul.f32 %v77, -1e+09
  %v86 = vmul.f32 %v78, -1e+09
  %v87 = vmul.f32 %v79, -1e+09
  %v92 = vlaneseq
  %v93 = vshrl.u32 %v92, 7
  %v94 = vsub.s32 0, %v93
  %v95 = vrot.slane %v84, %v94
  %v96 = vlaneseq
  %v97 = vshrl.u32 %v96, 7
  %v98 = vsub.s32 0, %v97
  %v99 = vrot.slane %v85, %v98
  %v100 = vlaneseq
  %v101 = vshrl.u32 %v100, 7
  %v102 = vsub.s32 0, %v101
  %v103 = vrot.slane %v86, %v102
  %v104 = vlaneseq
  %v105 = vshrl.u32 %v104, 7
  %v106 = vsub.s32 0, %v105
  %v107 = vrot.slane %v87, %v106
  %vm112 = vcmask 261120
  %v113 = vsel %vm112, %v27, 0.0
  %114 = vadd.xlane.f32.xlu0 %v113
  %v115 = vpop.xlane.xlu0 %114
  %v116 = vsel %vm112, %v28, 0.0
  %117 = vadd.xlane.f32.xlu0 %v116
  %v118 = vpop.xlane.xlu0 %117
  %v119 = vsel %vm112, %v29, 0.0
  %120 = vadd.xlane.f32.xlu0 %v119
  %v121 = vpop.xlane.xlu0 %120
  %v122 = vsel %vm112, %v30, 0.0
  %123 = vadd.xlane.f32.xlu0 %v122
  %v124 = vpop.xlane.xlu0 %123
  %v125 = vrcp.pop 32.0
  %v126 = vmul.f32 %v115, %v125
  %v127 = vmul.f32 %v118, %v125
  %v128 = vmul.f32 %v121, %v125
  %v129 = vmul.f32 %v124, %v125
  %v130 = vsub.f32 %v27, %v126
  %v131 = vsub.f32 %v28, %v127
  %v132 = vsub.f32 %v29, %v128
  %v133 = vsub.f32 %v30, %v129
  %v134 = vmul.f32 %v130, %v130
  %v135 = vmul.f32 %v131, %v131
  %v136 = vmul.f32 %v132, %v132
  %v137 = vmul.f32 %v133, %v133
  %v138 = vsel %vm112, %v134, 0.0
  %139 = vadd.xlane.f32.xlu0 %v138
  %v140 = vpop.xlane.xlu0 %139
  %v141 = vsel %vm112, %v135, 0.0
  %142 = vadd.xlane.f32.xlu0 %v141
  %v143 = vpop.xlane.xlu0 %142
  %v144 = vsel %vm112, %v136, 0.0
  %145 = vadd.xlane.f32.xlu0 %v144
  %v146 = vpop.xlane.xlu0 %145
  %v147 = vsel %vm112, %v137, 0.0
  %148 = vadd.xlane.f32.xlu0 %v147
  %v149 = vpop.xlane.xlu0 %148
  %v150 = vmul.f32 %v140, %v125
  %v151 = vmul.f32 %v143, %v125
  %v152 = vmul.f32 %v146, %v125
  %v153 = vmul.f32 %v149, %v125
  %v154 = vadd.f32 %v150, 1e-12
  %v155 = vadd.f32 %v151, 1e-12
  %v156 = vadd.f32 %v152, 1e-12
  %v157 = vadd.f32 %v153, 1e-12
  %v158 = vrsqrt.pop %v154
  %v159 = vrsqrt.pop %v155
  %v160 = vrsqrt.pop %v156
  %v161 = vrsqrt.pop %v157
  %v162 = vmul.f32 %v130, %v158
  %v163 = vmul.f32 %v131, %v159
  %v164 = vmul.f32 %v132, %v160
  %v165 = vmul.f32 %v133, %v161
  %v166 = vlaneseq
  %v167 = vshrl.u32 %v166, 7
  %v168 = vsub.s32 0, %v167
  %v169 = vrot.slane %v32, %v168
  %v170 = vmul.f32 %v162, %v169
  %v171 = vmul.f32 %v163, %v169
  %v172 = vmul.f32 %v164, %v169
  %v173 = vmul.f32 %v165, %v169
  %v174 = vlaneseq
  %v175 = vshrl.u32 %v174, 7
  %v176 = vsub.s32 1, %v175
  %v177 = vrot.slane %v32, %v176
  %v178 = vadd.f32 %v170, %v177
  %v179 = vadd.f32 %v171, %v177
  %v180 = vadd.f32 %v172, %v177
  %v181 = vadd.f32 %v173, %v177
  %v182 = vpack.c.bf16 %v179, %v178
  %v183 = vpack.c.bf16 %v181, %v180
  %v184 = vlaneseq
  %v185 = vshrl.u32 %v184, 7
  %v186 = vsub.s32 0, %v185
  %v187 = vrot.slane %v33, %v186
  %v192 = vunpack.c.l.b16 %v34
  %v193 = vunpack.c.l.b16 %v35
  %v194 = vunpack.c.l.b16 %v36
  %v195 = vunpack.c.l.b16 %v37
  %v196 = vpack.c.b16 %v193, %v192
  %v197 = vpack.c.b16 %v195, %v194
  %v201 = vsel %vm112, %v182, 0
  %v204 = vsel %vm112, %v183, 0
  %206 = vmatprep.subr.bf16.mxu0 0
  %207 = vmatpush1.bf16.msra.mxu0 %v196
  %208 = vmatprep.subr.bf16.mxu0 0
  %209 = vmatpush1.bf16.msra.mxu0 %v197
  %210 = vmatprep.subr.bf16.mxu0 0
  %211 = vmatpush1.bf16.msra.mxu0 0
  %212 = vmatprep.subr.bf16.mxu0 0
  %213 = vmatpush1.bf16.msra.mxu0 0
  %214 = vmatprep.subr.bf16.mxu0 0
  %215 = vmatpush1.bf16.msra.mxu0 0
  %216 = vmatprep.subr.bf16.mxu0 0
  %217 = vmatpush1.bf16.msra.mxu0 0
  %218 = vmatprep.subr.bf16.mxu0 0
  %219 = vmatpush1.bf16.msra.mxu0 0
  %220 = vmatprep.subr.bf16.mxu0 0
  %221 = vmatpush1.bf16.msra.mxu0 0
  %222 = vmatprep.subr.bf16.mxu0 0
  %223 = vmatpush1.bf16.msra.mxu0 0
  %224 = vmatprep.subr.bf16.mxu0 0
  %225 = vmatpush1.bf16.msra.mxu0 0
  %226 = vmatprep.subr.bf16.mxu0 0
  %227 = vmatpush1.bf16.msra.mxu0 0
  %228 = vmatprep.subr.bf16.mxu0 0
  %229 = vmatpush1.bf16.msra.mxu0 0
  %230 = vmatprep.subr.bf16.mxu0 0
  %231 = vmatpush1.bf16.msra.mxu0 0
  %232 = vmatprep.subr.bf16.mxu0 0
  %233 = vmatpush1.bf16.msra.mxu0 0
  %234 = vmatprep.subr.bf16.mxu0 0
  %235 = vmatpush1.bf16.msra.mxu0 0
  %236 = vmatprep.subr.bf16.mxu0 0
  %237 = vmatpush1.bf16.msra.mxu0 0
  %238 = vmatprep.mubr.bf16.mxu0 0
  %239 = vmatmul.mubr.bf16.gmra.mrb[0].mxu0 %v201
  %v240 = vpop.f32.mrb[0].mxu0
  %v241 = vadd.f32 %v187, %v240
  %v242 = vpop.f32.mrb[0].mxu0
  %v243 = vpop.f32.mrb[0].mxu0
  %v244 = vadd.f32 %v187, %v243
  %v245 = vpop.f32.mrb[0].mxu0
  %246 = vmatprep.mubr.bf16.mxu0 0
  %247 = vmatmul.mubr.bf16.gmra.mrb[0].mxu0 %v204
  %v248 = vpop.f32.mrb[0].mxu0
  %v249 = vadd.f32 %v187, %v248
  %v250 = vpop.f32.mrb[0].mxu0
  %v251 = vpop.f32.mrb[0].mxu0
  %v252 = vadd.f32 %v187, %v251
  %v253 = vpop.f32.mrb[0].mxu0
  %254 = vdwg.mxu0
  %259 = vrot.lane.b32.xlu0 %v241, 112
  %v260 = vpop.permute.xlu0 %259
  %261 = vrot.lane.b32.xlu0 %v244, 112
  %v262 = vpop.permute.xlu0 %261
  %263 = vrot.lane.b32.xlu0 %v249, 112
  %v264 = vpop.permute.xlu0 %263
  %265 = vrot.lane.b32.xlu0 %v252, 112
  %v266 = vpop.permute.xlu0 %265
  %v271 = vpack.c.bf16 %v241, %v241
  %v272 = vpack.c.bf16 %v244, %v244
  %v273 = vpack.c.bf16 %v249, %v249
  %v274 = vpack.c.bf16 %v252, %v252
  %v275 = vpack.c.bf16 %v260, %v260
  %v276 = vpack.c.bf16 %v262, %v262
  %v277 = vpack.c.bf16 %v264, %v264
  %v278 = vpack.c.bf16 %v266, %v266
  %280 = vrot.lane.b32.xlu0 %v271, 96
  %v281 = vpop.permute.xlu0 %280
  %vm282 = vcmask 130048
  %v284 = vsel %vm282, %v271, 0
  %v287 = vsel %vm282, %v281, 0
  %289 = vmatprep.subr.bf16.mxu0 0
  %290 = vmatpush1.bf16.xpose.msra.mxu0 %v287
  %291 = vmatprep.subr.bf16.mxu0 0
  %292 = vmatpush1.bf16.xpose.msra.mxu0 0
  %293 = vmatprep.subr.bf16.mxu0 0
  %294 = vmatpush1.bf16.xpose.msra.mxu0 0
  %295 = vmatprep.subr.bf16.mxu0 0
  %296 = vmatpush1.bf16.xpose.msra.mxu0 0
  %297 = vmatprep.subr.bf16.mxu0 0
  %298 = vmatpush1.bf16.xpose.msra.mxu0 0
  %299 = vmatprep.subr.bf16.mxu0 0
  %300 = vmatpush1.bf16.xpose.msra.mxu0 0
  %301 = vmatprep.subr.bf16.mxu0 0
  %302 = vmatpush1.bf16.xpose.msra.mxu0 0
  %303 = vmatprep.subr.bf16.mxu0 0
  %304 = vmatpush1.bf16.xpose.msra.mxu0 0
  %305 = vmatprep.subr.bf16.mxu0 0
  %306 = vmatpush1.bf16.xpose.msra.mxu0 0
  %307 = vmatprep.subr.bf16.mxu0 0
  %308 = vmatpush1.bf16.xpose.msra.mxu0 0
  %309 = vmatprep.subr.bf16.mxu0 0
  %310 = vmatpush1.bf16.xpose.msra.mxu0 0
  %311 = vmatprep.subr.bf16.mxu0 0
  %312 = vmatpush1.bf16.xpose.msra.mxu0 0
  %313 = vmatprep.subr.bf16.mxu0 0
  %314 = vmatpush1.bf16.xpose.msra.mxu0 0
  %315 = vmatprep.subr.bf16.mxu0 0
  %316 = vmatpush1.bf16.xpose.msra.mxu0 0
  %317 = vmatprep.subr.bf16.mxu0 0
  %318 = vmatpush1.bf16.xpose.msra.mxu0 0
  %319 = vmatprep.subr.bf16.mxu0 0
  %320 = vmatpush1.bf16.xpose.msra.mxu0 0
  %321 = vmatprep.mubr.bf16.mxu0 0
  %322 = vmatmul.mubr.bf16.gmra.mrb[0].mxu0 %v284
  %v323 = vpop.f32.mrb[0].mxu0
  %v324 = vadd.f32 0.0, %v323
  %v325 = vpop.f32.mrb[0].mxu0
  %v326 = vpop.f32.mrb[0].mxu0
  %v327 = vpop.f32.mrb[0].mxu0
  %328 = vdwg.mxu0
  %330 = vrot.lane.b32.xlu0 %v272, 96
  %v331 = vpop.permute.xlu0 %330
  %v333 = vsel %vm282, %v272, 0
  %v336 = vsel %vm282, %v331, 0
  %338 = vmatprep.subr.bf16.mxu0 0
  %339 = vmatpush1.bf16.xpose.msra.mxu0 %v336
  %340 = vmatprep.subr.bf16.mxu0 0
  %341 = vmatpush1.bf16.xpose.msra.mxu0 0
  %342 = vmatprep.subr.bf16.mxu0 0
  %343 = vmatpush1.bf16.xpose.msra.mxu0 0
  %344 = vmatprep.subr.bf16.mxu0 0
  %345 = vmatpush1.bf16.xpose.msra.mxu0 0
  %346 = vmatprep.subr.bf16.mxu0 0
  %347 = vmatpush1.bf16.xpose.msra.mxu0 0
  %348 = vmatprep.subr.bf16.mxu0 0
  %349 = vmatpush1.bf16.xpose.msra.mxu0 0
  %350 = vmatprep.subr.bf16.mxu0 0
  %351 = vmatpush1.bf16.xpose.msra.mxu0 0
  %352 = vmatprep.subr.bf16.mxu0 0
  %353 = vmatpush1.bf16.xpose.msra.mxu0 0
  %354 = vmatprep.subr.bf16.mxu0 0
  %355 = vmatpush1.bf16.xpose.msra.mxu0 0
  %356 = vmatprep.subr.bf16.mxu0 0
  %357 = vmatpush1.bf16.xpose.msra.mxu0 0
  %358 = vmatprep.subr.bf16.mxu0 0
  %359 = vmatpush1.bf16.xpose.msra.mxu0 0
  %360 = vmatprep.subr.bf16.mxu0 0
  %361 = vmatpush1.bf16.xpose.msra.mxu0 0
  %362 = vmatprep.subr.bf16.mxu0 0
  %363 = vmatpush1.bf16.xpose.msra.mxu0 0
  %364 = vmatprep.subr.bf16.mxu0 0
  %365 = vmatpush1.bf16.xpose.msra.mxu0 0
  %366 = vmatprep.subr.bf16.mxu0 0
  %367 = vmatpush1.bf16.xpose.msra.mxu0 0
  %368 = vmatprep.subr.bf16.mxu0 0
  %369 = vmatpush1.bf16.xpose.msra.mxu0 0
  %370 = vmatprep.mubr.bf16.mxu0 0
  %371 = vmatmul.mubr.bf16.gmra.mrb[0].mxu0 %v333
  %v372 = vpop.f32.mrb[0].mxu0
  %v373 = vadd.f32 0.0, %v372
  %v374 = vpop.f32.mrb[0].mxu0
  %v375 = vpop.f32.mrb[0].mxu0
  %v376 = vpop.f32.mrb[0].mxu0
  %377 = vdwg.mxu0
  %379 = vrot.lane.b32.xlu0 %v273, 96
  %v380 = vpop.permute.xlu0 %379
  %v382 = vsel %vm282, %v273, 0
  %v385 = vsel %vm282, %v380, 0
  %387 = vmatprep.subr.bf16.mxu0 0
  %388 = vmatpush1.bf16.xpose.msra.mxu0 %v385
  %389 = vmatprep.subr.bf16.mxu0 0
  %390 = vmatpush1.bf16.xpose.msra.mxu0 0
  %391 = vmatprep.subr.bf16.mxu0 0
  %392 = vmatpush1.bf16.xpose.msra.mxu0 0
  %393 = vmatprep.subr.bf16.mxu0 0
  %394 = vmatpush1.bf16.xpose.msra.mxu0 0
  %395 = vmatprep.subr.bf16.mxu0 0
  %396 = vmatpush1.bf16.xpose.msra.mxu0 0
  %397 = vmatprep.subr.bf16.mxu0 0
  %398 = vmatpush1.bf16.xpose.msra.mxu0 0
  %399 = vmatprep.subr.bf16.mxu0 0
  %400 = vmatpush1.bf16.xpose.msra.mxu0 0
  %401 = vmatprep.subr.bf16.mxu0 0
  %402 = vmatpush1.bf16.xpose.msra.mxu0 0
  %403 = vmatprep.subr.bf16.mxu0 0
  %404 = vmatpush1.bf16.xpose.msra.mxu0 0
  %405 = vmatprep.subr.bf16.mxu0 0
  %406 = vmatpush1.bf16.xpose.msra.mxu0 0
  %407 = vmatprep.subr.bf16.mxu0 0
  %408 = vmatpush1.bf16.xpose.msra.mxu0 0
  %409 = vmatprep.subr.bf16.mxu0 0
  %410 = vmatpush1.bf16.xpose.msra.mxu0 0
  %411 = vmatprep.subr.bf16.mxu0 0
  %412 = vmatpush1.bf16.xpose.msra.mxu0 0
  %413 = vmatprep.subr.bf16.mxu0 0
  %414 = vmatpush1.bf16.xpose.msra.mxu0 0
  %415 = vmatprep.subr.bf16.mxu0 0
  %416 = vmatpush1.bf16.xpose.msra.mxu0 0
  %417 = vmatprep.subr.bf16.mxu0 0
  %418 = vmatpush1.bf16.xpose.msra.mxu0 0
  %419 = vmatprep.mubr.bf16.mxu0 0
  %420 = vmatmul.mubr.bf16.gmra.mrb[0].mxu0 %v382
  %v421 = vpop.f32.mrb[0].mxu0
  %v422 = vadd.f32 0.0, %v421
  %v423 = vpop.f32.mrb[0].mxu0
  %v424 = vpop.f32.mrb[0].mxu0
  %v425 = vpop.f32.mrb[0].mxu0
  %426 = vdwg.mxu0
  %428 = vrot.lane.b32.xlu0 %v274, 96
  %v429 = vpop.permute.xlu0 %428
  %v431 = vsel %vm282, %v274, 0
  %v434 = vsel %vm282, %v429, 0
  %436 = vmatprep.subr.bf16.mxu0 0
  %437 = vmatpush1.bf16.xpose.msra.mxu0 %v434
  %438 = vmatprep.subr.bf16.mxu0 0
  %439 = vmatpush1.bf16.xpose.msra.mxu0 0
  %440 = vmatprep.subr.bf16.mxu0 0
  %441 = vmatpush1.bf16.xpose.msra.mxu0 0
  %442 = vmatprep.subr.bf16.mxu0 0
  %443 = vmatpush1.bf16.xpose.msra.mxu0 0
  %444 = vmatprep.subr.bf16.mxu0 0
  %445 = vmatpush1.bf16.xpose.msra.mxu0 0
  %446 = vmatprep.subr.bf16.mxu0 0
  %447 = vmatpush1.bf16.xpose.msra.mxu0 0
  %448 = vmatprep.subr.bf16.mxu0 0
  %449 = vmatpush1.bf16.xpose.msra.mxu0 0
  %450 = vmatprep.subr.bf16.mxu0 0
  %451 = vmatpush1.bf16.xpose.msra.mxu0 0
  %452 = vmatprep.subr.bf16.mxu0 0
  %453 = vmatpush1.bf16.xpose.msra.mxu0 0
  %454 = vmatprep.subr.bf16.mxu0 0
  %455 = vmatpush1.bf16.xpose.msra.mxu0 0
  %456 = vmatprep.subr.bf16.mxu0 0
  %457 = vmatpush1.bf16.xpose.msra.mxu0 0
  %458 = vmatprep.subr.bf16.mxu0 0
  %459 = vmatpush1.bf16.xpose.msra.mxu0 0
  %460 = vmatprep.subr.bf16.mxu0 0
  %461 = vmatpush1.bf16.xpose.msra.mxu0 0
  %462 = vmatprep.subr.bf16.mxu0 0
  %463 = vmatpush1.bf16.xpose.msra.mxu0 0
  %464 = vmatprep.subr.bf16.mxu0 0
  %465 = vmatpush1.bf16.xpose.msra.mxu0 0
  %466 = vmatprep.subr.bf16.mxu0 0
  %467 = vmatpush1.bf16.xpose.msra.mxu0 0
  %468 = vmatprep.mubr.bf16.mxu0 0
  %469 = vmatmul.mubr.bf16.gmra.mrb[0].mxu0 %v431
  %v470 = vpop.f32.mrb[0].mxu0
  %v471 = vadd.f32 0.0, %v470
  %v472 = vpop.f32.mrb[0].mxu0
  %v473 = vpop.f32.mrb[0].mxu0
  %v474 = vpop.f32.mrb[0].mxu0
  %475 = vdwg.mxu0
  %477 = vrot.lane.b32.xlu0 %v275, 96
  %v478 = vpop.permute.xlu0 %477
  %v480 = vsel %vm282, %v275, 0
  %v483 = vsel %vm282, %v478, 0
  %485 = vmatprep.subr.bf16.mxu0 0
  %486 = vmatpush1.bf16.xpose.msra.mxu0 %v483
  %487 = vmatprep.subr.bf16.mxu0 0
  %488 = vmatpush1.bf16.xpose.msra.mxu0 0
  %489 = vmatprep.subr.bf16.mxu0 0
  %490 = vmatpush1.bf16.xpose.msra.mxu0 0
  %491 = vmatprep.subr.bf16.mxu0 0
  %492 = vmatpush1.bf16.xpose.msra.mxu0 0
  %493 = vmatprep.subr.bf16.mxu0 0
  %494 = vmatpush1.bf16.xpose.msra.mxu0 0
  %495 = vmatprep.subr.bf16.mxu0 0
  %496 = vmatpush1.bf16.xpose.msra.mxu0 0
  %497 = vmatprep.subr.bf16.mxu0 0
  %498 = vmatpush1.bf16.xpose.msra.mxu0 0
  %499 = vmatprep.subr.bf16.mxu0 0
  %500 = vmatpush1.bf16.xpose.msra.mxu0 0
  %501 = vmatprep.subr.bf16.mxu0 0
  %502 = vmatpush1.bf16.xpose.msra.mxu0 0
  %503 = vmatprep.subr.bf16.mxu0 0
  %504 = vmatpush1.bf16.xpose.msra.mxu0 0
  %505 = vmatprep.subr.bf16.mxu0 0
  %506 = vmatpush1.bf16.xpose.msra.mxu0 0
  %507 = vmatprep.subr.bf16.mxu0 0
  %508 = vmatpush1.bf16.xpose.msra.mxu0 0
  %509 = vmatprep.subr.bf16.mxu0 0
  %510 = vmatpush1.bf16.xpose.msra.mxu0 0
  %511 = vmatprep.subr.bf16.mxu0 0
  %512 = vmatpush1.bf16.xpose.msra.mxu0 0
  %513 = vmatprep.subr.bf16.mxu0 0
  %514 = vmatpush1.bf16.xpose.msra.mxu0 0
  %515 = vmatprep.subr.bf16.mxu0 0
  %516 = vmatpush1.bf16.xpose.msra.mxu0 0
  %517 = vmatprep.mubr.bf16.mxu0 0
  %518 = vmatmul.mubr.bf16.gmra.mrb[0].mxu0 %v480
  %v519 = vpop.f32.mrb[0].mxu0
  %v520 = vadd.f32 0.0, %v519
  %v521 = vpop.f32.mrb[0].mxu0
  %v522 = vpop.f32.mrb[0].mxu0
  %v523 = vpop.f32.mrb[0].mxu0
  %524 = vdwg.mxu0
  %526 = vrot.lane.b32.xlu0 %v276, 96
  %v527 = vpop.permute.xlu0 %526
  %v529 = vsel %vm282, %v276, 0
  %v532 = vsel %vm282, %v527, 0
  %534 = vmatprep.subr.bf16.mxu0 0
  %535 = vmatpush1.bf16.xpose.msra.mxu0 %v532
  %536 = vmatprep.subr.bf16.mxu0 0
  %537 = vmatpush1.bf16.xpose.msra.mxu0 0
  %538 = vmatprep.subr.bf16.mxu0 0
  %539 = vmatpush1.bf16.xpose.msra.mxu0 0
  %540 = vmatprep.subr.bf16.mxu0 0
  %541 = vmatpush1.bf16.xpose.msra.mxu0 0
  %542 = vmatprep.subr.bf16.mxu0 0
  %543 = vmatpush1.bf16.xpose.msra.mxu0 0
  %544 = vmatprep.subr.bf16.mxu0 0
  %545 = vmatpush1.bf16.xpose.msra.mxu0 0
  %546 = vmatprep.subr.bf16.mxu0 0
  %547 = vmatpush1.bf16.xpose.msra.mxu0 0
  %548 = vmatprep.subr.bf16.mxu0 0
  %549 = vmatpush1.bf16.xpose.msra.mxu0 0
  %550 = vmatprep.subr.bf16.mxu0 0
  %551 = vmatpush1.bf16.xpose.msra.mxu0 0
  %552 = vmatprep.subr.bf16.mxu0 0
  %553 = vmatpush1.bf16.xpose.msra.mxu0 0
  %554 = vmatprep.subr.bf16.mxu0 0
  %555 = vmatpush1.bf16.xpose.msra.mxu0 0
  %556 = vmatprep.subr.bf16.mxu0 0
  %557 = vmatpush1.bf16.xpose.msra.mxu0 0
  %558 = vmatprep.subr.bf16.mxu0 0
  %559 = vmatpush1.bf16.xpose.msra.mxu0 0
  %560 = vmatprep.subr.bf16.mxu0 0
  %561 = vmatpush1.bf16.xpose.msra.mxu0 0
  %562 = vmatprep.subr.bf16.mxu0 0
  %563 = vmatpush1.bf16.xpose.msra.mxu0 0
  %564 = vmatprep.subr.bf16.mxu0 0
  %565 = vmatpush1.bf16.xpose.msra.mxu0 0
  %566 = vmatprep.mubr.bf16.mxu0 0
  %567 = vmatmul.mubr.bf16.gmra.mrb[0].mxu0 %v529
  %v568 = vpop.f32.mrb[0].mxu0
  %v569 = vadd.f32 0.0, %v568
  %v570 = vpop.f32.mrb[0].mxu0
  %v571 = vpop.f32.mrb[0].mxu0
  %v572 = vpop.f32.mrb[0].mxu0
  %573 = vdwg.mxu0
  %575 = vrot.lane.b32.xlu0 %v277, 96
  %v576 = vpop.permute.xlu0 %575
  %v578 = vsel %vm282, %v277, 0
  %v581 = vsel %vm282, %v576, 0
  %583 = vmatprep.subr.bf16.mxu0 0
  %584 = vmatpush1.bf16.xpose.msra.mxu0 %v581
  %585 = vmatprep.subr.bf16.mxu0 0
  %586 = vmatpush1.bf16.xpose.msra.mxu0 0
  %587 = vmatprep.subr.bf16.mxu0 0
  %588 = vmatpush1.bf16.xpose.msra.mxu0 0
  %589 = vmatprep.subr.bf16.mxu0 0
  %590 = vmatpush1.bf16.xpose.msra.mxu0 0
  %591 = vmatprep.subr.bf16.mxu0 0
  %592 = vmatpush1.bf16.xpose.msra.mxu0 0
  %593 = vmatprep.subr.bf16.mxu0 0
  %594 = vmatpush1.bf16.xpose.msra.mxu0 0
  %595 = vmatprep.subr.bf16.mxu0 0
  %596 = vmatpush1.bf16.xpose.msra.mxu0 0
  %597 = vmatprep.subr.bf16.mxu0 0
  %598 = vmatpush1.bf16.xpose.msra.mxu0 0
  %599 = vmatprep.subr.bf16.mxu0 0
  %600 = vmatpush1.bf16.xpose.msra.mxu0 0
  %601 = vmatprep.subr.bf16.mxu0 0
  %602 = vmatpush1.bf16.xpose.msra.mxu0 0
  %603 = vmatprep.subr.bf16.mxu0 0
  %604 = vmatpush1.bf16.xpose.msra.mxu0 0
  %605 = vmatprep.subr.bf16.mxu0 0
  %606 = vmatpush1.bf16.xpose.msra.mxu0 0
  %607 = vmatprep.subr.bf16.mxu0 0
  %608 = vmatpush1.bf16.xpose.msra.mxu0 0
  %609 = vmatprep.subr.bf16.mxu0 0
  %610 = vmatpush1.bf16.xpose.msra.mxu0 0
  %611 = vmatprep.subr.bf16.mxu0 0
  %612 = vmatpush1.bf16.xpose.msra.mxu0 0
  %613 = vmatprep.subr.bf16.mxu0 0
  %614 = vmatpush1.bf16.xpose.msra.mxu0 0
  %615 = vmatprep.mubr.bf16.mxu0 0
  %616 = vmatmul.mubr.bf16.gmra.mrb[0].mxu0 %v578
  %v617 = vpop.f32.mrb[0].mxu0
  %v618 = vadd.f32 0.0, %v617
  %v619 = vpop.f32.mrb[0].mxu0
  %v620 = vpop.f32.mrb[0].mxu0
  %v621 = vpop.f32.mrb[0].mxu0
  %622 = vdwg.mxu0
  %624 = vrot.lane.b32.xlu0 %v278, 96
  %v625 = vpop.permute.xlu0 %624
  %v627 = vsel %vm282, %v278, 0
  %v630 = vsel %vm282, %v625, 0
  %632 = vmatprep.subr.bf16.mxu0 0
  %633 = vmatpush1.bf16.xpose.msra.mxu0 %v630
  %634 = vmatprep.subr.bf16.mxu0 0
  %635 = vmatpush1.bf16.xpose.msra.mxu0 0
  %636 = vmatprep.subr.bf16.mxu0 0
  %637 = vmatpush1.bf16.xpose.msra.mxu0 0
  %638 = vmatprep.subr.bf16.mxu0 0
  %639 = vmatpush1.bf16.xpose.msra.mxu0 0
  %640 = vmatprep.subr.bf16.mxu0 0
  %641 = vmatpush1.bf16.xpose.msra.mxu0 0
  %642 = vmatprep.subr.bf16.mxu0 0
  %643 = vmatpush1.bf16.xpose.msra.mxu0 0
  %644 = vmatprep.subr.bf16.mxu0 0
  %645 = vmatpush1.bf16.xpose.msra.mxu0 0
  %646 = vmatprep.subr.bf16.mxu0 0
  %647 = vmatpush1.bf16.xpose.msra.mxu0 0
  %648 = vmatprep.subr.bf16.mxu0 0
  %649 = vmatpush1.bf16.xpose.msra.mxu0 0
  %650 = vmatprep.subr.bf16.mxu0 0
  %651 = vmatpush1.bf16.xpose.msra.mxu0 0
  %652 = vmatprep.subr.bf16.mxu0 0
  %653 = vmatpush1.bf16.xpose.msra.mxu0 0
  %654 = vmatprep.subr.bf16.mxu0 0
  %655 = vmatpush1.bf16.xpose.msra.mxu0 0
  %656 = vmatprep.subr.bf16.mxu0 0
  %657 = vmatpush1.bf16.xpose.msra.mxu0 0
  %658 = vmatprep.subr.bf16.mxu0 0
  %659 = vmatpush1.bf16.xpose.msra.mxu0 0
  %660 = vmatprep.subr.bf16.mxu0 0
  %661 = vmatpush1.bf16.xpose.msra.mxu0 0
  %662 = vmatprep.subr.bf16.mxu0 0
  %663 = vmatpush1.bf16.xpose.msra.mxu0 0
  %664 = vmatprep.mubr.bf16.mxu0 0
  %665 = vmatmul.mubr.bf16.gmra.mrb[0].mxu0 %v627
  %v666 = vpop.f32.mrb[0].mxu0
  %v667 = vadd.f32 0.0, %v666
  %v668 = vpop.f32.mrb[0].mxu0
  %v669 = vpop.f32.mrb[0].mxu0
  %v670 = vpop.f32.mrb[0].mxu0
  %671 = vdwg.mxu0
  %v672 = vmul.f32 %v324, 0.25
  %v673 = vmul.f32 %v373, 0.25
  %v674 = vmul.f32 %v422, 0.25
  %v675 = vmul.f32 %v471, 0.25
  %v676 = vmul.f32 %v520, 0.25
  %v677 = vmul.f32 %v569, 0.25
  %v678 = vmul.f32 %v618, 0.25
  %v679 = vmul.f32 %v667, 0.25
  %v680 = vadd.f32 %v672, %v95
  %v681 = vadd.f32 %v673, %v99
  %v682 = vadd.f32 %v674, %v103
  %v683 = vadd.f32 %v675, %v107
  %v684 = vadd.f32 %v676, %v95
  %v685 = vadd.f32 %v677, %v99
  %v686 = vadd.f32 %v678, %v103
  %v687 = vadd.f32 %v679, %v107
  %vm688 = vcmask 64512
  %v689 = vsel %vm688, %v680, -inf
  %690 = vmax.xlane.f32.xlu0 %v689
  %v691 = vpop.xlane.xlu0 %690
  %v692 = vsel %vm688, %v681, -inf
  %693 = vmax.xlane.f32.xlu0 %v692
  %v694 = vpop.xlane.xlu0 %693
  %v695 = vsel %vm688, %v682, -inf
  %696 = vmax.xlane.f32.xlu0 %v695
  %v697 = vpop.xlane.xlu0 %696
  %v698 = vsel %vm688, %v683, -inf
  %699 = vmax.xlane.f32.xlu0 %v698
  %v700 = vpop.xlane.xlu0 %699
  %v701 = vsel %vm688, %v684, -inf
  %702 = vmax.xlane.f32.xlu0 %v701
  %v703 = vpop.xlane.xlu0 %702
  %v704 = vsel %vm688, %v685, -inf
  %705 = vmax.xlane.f32.xlu0 %v704
  %v706 = vpop.xlane.xlu0 %705
  %v707 = vsel %vm688, %v686, -inf
  %708 = vmax.xlane.f32.xlu0 %v707
  %v709 = vpop.xlane.xlu0 %708
  %v710 = vsel %vm688, %v687, -inf
  %711 = vmax.xlane.f32.xlu0 %v710
  %v712 = vpop.xlane.xlu0 %711
  %v713 = vsub.f32 %v680, %v691
  %v714 = vsub.f32 %v681, %v694
  %v715 = vsub.f32 %v682, %v697
  %v716 = vsub.f32 %v683, %v700
  %v717 = vsub.f32 %v684, %v703
  %v718 = vsub.f32 %v685, %v706
  %v719 = vsub.f32 %v686, %v709
  %v720 = vsub.f32 %v687, %v712
  %v721 = vmul.f32 %v713, 1.442695
  %v722 = vpow.pop %v721
  %v723 = vmul.f32 %v714, 1.442695
  %v724 = vpow.pop %v723
  %v725 = vmul.f32 %v715, 1.442695
  %v726 = vpow.pop %v725
  %v727 = vmul.f32 %v716, 1.442695
  %v728 = vpow.pop %v727
  %v729 = vmul.f32 %v717, 1.442695
  %v730 = vpow.pop %v729
  %v731 = vmul.f32 %v718, 1.442695
  %v732 = vpow.pop %v731
  %v733 = vmul.f32 %v719, 1.442695
  %v734 = vpow.pop %v733
  %v735 = vmul.f32 %v720, 1.442695
  %v736 = vpow.pop %v735
  %v737 = vsel %vm688, %v722, 0.0
  %738 = vadd.xlane.f32.xlu0 %v737
  %v739 = vpop.xlane.xlu0 %738
  %v740 = vsel %vm688, %v724, 0.0
  %741 = vadd.xlane.f32.xlu0 %v740
  %v742 = vpop.xlane.xlu0 %741
  %v743 = vsel %vm688, %v726, 0.0
  %744 = vadd.xlane.f32.xlu0 %v743
  %v745 = vpop.xlane.xlu0 %744
  %v746 = vsel %vm688, %v728, 0.0
  %747 = vadd.xlane.f32.xlu0 %v746
  %v748 = vpop.xlane.xlu0 %747
  %v749 = vsel %vm688, %v730, 0.0
  %750 = vadd.xlane.f32.xlu0 %v749
  %v751 = vpop.xlane.xlu0 %750
  %v752 = vsel %vm688, %v732, 0.0
  %753 = vadd.xlane.f32.xlu0 %v752
  %v754 = vpop.xlane.xlu0 %753
  %v755 = vsel %vm688, %v734, 0.0
  %756 = vadd.xlane.f32.xlu0 %v755
  %v757 = vpop.xlane.xlu0 %756
  %v758 = vsel %vm688, %v736, 0.0
  %759 = vadd.xlane.f32.xlu0 %v758
  %v760 = vpop.xlane.xlu0 %759
  %v761 = vpack.c.bf16 %v722, %v722
  %v762 = vpack.c.bf16 %v724, %v724
  %v763 = vpack.c.bf16 %v726, %v726
  %v764 = vpack.c.bf16 %v728, %v728
  %v765 = vpack.c.bf16 %v730, %v730
  %v766 = vpack.c.bf16 %v732, %v732
  %v767 = vpack.c.bf16 %v734, %v734
  %v768 = vpack.c.bf16 %v736, %v736
  %769 = vrot.lane.b32.xlu0 %v271, 64
  %v770 = vpop.permute.xlu0 %769
  %v772 = vsel %vm688, %v761, 0
  %vm774 = vcmask 1043456
  %v776 = vsel %vm774, %v770, 0
  %778 = vmatprep.subr.bf16.mxu0 0
  %779 = vmatpush1.bf16.msra.mxu0 %v776
  %780 = vmatprep.subr.bf16.mxu0 0
  %781 = vmatpush1.bf16.msra.mxu0 0
  %782 = vmatprep.subr.bf16.mxu0 0
  %783 = vmatpush1.bf16.msra.mxu0 0
  %784 = vmatprep.subr.bf16.mxu0 0
  %785 = vmatpush1.bf16.msra.mxu0 0
  %786 = vmatprep.subr.bf16.mxu0 0
  %787 = vmatpush1.bf16.msra.mxu0 0
  %788 = vmatprep.subr.bf16.mxu0 0
  %789 = vmatpush1.bf16.msra.mxu0 0
  %790 = vmatprep.subr.bf16.mxu0 0
  %791 = vmatpush1.bf16.msra.mxu0 0
  %792 = vmatprep.subr.bf16.mxu0 0
  %793 = vmatpush1.bf16.msra.mxu0 0
  %794 = vmatprep.subr.bf16.mxu0 0
  %795 = vmatpush1.bf16.msra.mxu0 0
  %796 = vmatprep.subr.bf16.mxu0 0
  %797 = vmatpush1.bf16.msra.mxu0 0
  %798 = vmatprep.subr.bf16.mxu0 0
  %799 = vmatpush1.bf16.msra.mxu0 0
  %800 = vmatprep.subr.bf16.mxu0 0
  %801 = vmatpush1.bf16.msra.mxu0 0
  %802 = vmatprep.subr.bf16.mxu0 0
  %803 = vmatpush1.bf16.msra.mxu0 0
  %804 = vmatprep.subr.bf16.mxu0 0
  %805 = vmatpush1.bf16.msra.mxu0 0
  %806 = vmatprep.subr.bf16.mxu0 0
  %807 = vmatpush1.bf16.msra.mxu0 0
  %808 = vmatprep.subr.bf16.mxu0 0
  %809 = vmatpush1.bf16.msra.mxu0 0
  %810 = vmatprep.mubr.bf16.mxu0 0
  %811 = vmatmul.mubr.bf16.gmra.mrb[0].mxu0 %v772
  %v812 = vpop.f32.mrb[0].mxu0
  %v813 = vadd.f32 0.0, %v812
  %v814 = vpop.f32.mrb[0].mxu0
  %v815 = vpop.f32.mrb[0].mxu0
  %v816 = vpop.f32.mrb[0].mxu0
  %817 = vdwg.mxu0
  %818 = vrot.lane.b32.xlu0 %v272, 64
  %v819 = vpop.permute.xlu0 %818
  %v821 = vsel %vm688, %v762, 0
  %v824 = vsel %vm774, %v819, 0
  %826 = vmatprep.subr.bf16.mxu0 0
  %827 = vmatpush1.bf16.msra.mxu0 %v824
  %828 = vmatprep.subr.bf16.mxu0 0
  %829 = vmatpush1.bf16.msra.mxu0 0
  %830 = vmatprep.subr.bf16.mxu0 0
  %831 = vmatpush1.bf16.msra.mxu0 0
  %832 = vmatprep.subr.bf16.mxu0 0
  %833 = vmatpush1.bf16.msra.mxu0 0
  %834 = vmatprep.subr.bf16.mxu0 0
  %835 = vmatpush1.bf16.msra.mxu0 0
  %836 = vmatprep.subr.bf16.mxu0 0
  %837 = vmatpush1.bf16.msra.mxu0 0
  %838 = vmatprep.subr.bf16.mxu0 0
  %839 = vmatpush1.bf16.msra.mxu0 0
  %840 = vmatprep.subr.bf16.mxu0 0
  %841 = vmatpush1.bf16.msra.mxu0 0
  %842 = vmatprep.subr.bf16.mxu0 0
  %843 = vmatpush1.bf16.msra.mxu0 0
  %844 = vmatprep.subr.bf16.mxu0 0
  %845 = vmatpush1.bf16.msra.mxu0 0
  %846 = vmatprep.subr.bf16.mxu0 0
  %847 = vmatpush1.bf16.msra.mxu0 0
  %848 = vmatprep.subr.bf16.mxu0 0
  %849 = vmatpush1.bf16.msra.mxu0 0
  %850 = vmatprep.subr.bf16.mxu0 0
  %851 = vmatpush1.bf16.msra.mxu0 0
  %852 = vmatprep.subr.bf16.mxu0 0
  %853 = vmatpush1.bf16.msra.mxu0 0
  %854 = vmatprep.subr.bf16.mxu0 0
  %855 = vmatpush1.bf16.msra.mxu0 0
  %856 = vmatprep.subr.bf16.mxu0 0
  %857 = vmatpush1.bf16.msra.mxu0 0
  %858 = vmatprep.mubr.bf16.mxu0 0
  %859 = vmatmul.mubr.bf16.gmra.mrb[0].mxu0 %v821
  %v860 = vpop.f32.mrb[0].mxu0
  %v861 = vadd.f32 0.0, %v860
  %v862 = vpop.f32.mrb[0].mxu0
  %v863 = vpop.f32.mrb[0].mxu0
  %v864 = vpop.f32.mrb[0].mxu0
  %865 = vdwg.mxu0
  %866 = vrot.lane.b32.xlu0 %v273, 64
  %v867 = vpop.permute.xlu0 %866
  %v869 = vsel %vm688, %v763, 0
  %v872 = vsel %vm774, %v867, 0
  %874 = vmatprep.subr.bf16.mxu0 0
  %875 = vmatpush1.bf16.msra.mxu0 %v872
  %876 = vmatprep.subr.bf16.mxu0 0
  %877 = vmatpush1.bf16.msra.mxu0 0
  %878 = vmatprep.subr.bf16.mxu0 0
  %879 = vmatpush1.bf16.msra.mxu0 0
  %880 = vmatprep.subr.bf16.mxu0 0
  %881 = vmatpush1.bf16.msra.mxu0 0
  %882 = vmatprep.subr.bf16.mxu0 0
  %883 = vmatpush1.bf16.msra.mxu0 0
  %884 = vmatprep.subr.bf16.mxu0 0
  %885 = vmatpush1.bf16.msra.mxu0 0
  %886 = vmatprep.subr.bf16.mxu0 0
  %887 = vmatpush1.bf16.msra.mxu0 0
  %888 = vmatprep.subr.bf16.mxu0 0
  %889 = vmatpush1.bf16.msra.mxu0 0
  %890 = vmatprep.subr.bf16.mxu0 0
  %891 = vmatpush1.bf16.msra.mxu0 0
  %892 = vmatprep.subr.bf16.mxu0 0
  %893 = vmatpush1.bf16.msra.mxu0 0
  %894 = vmatprep.subr.bf16.mxu0 0
  %895 = vmatpush1.bf16.msra.mxu0 0
  %896 = vmatprep.subr.bf16.mxu0 0
  %897 = vmatpush1.bf16.msra.mxu0 0
  %898 = vmatprep.subr.bf16.mxu0 0
  %899 = vmatpush1.bf16.msra.mxu0 0
  %900 = vmatprep.subr.bf16.mxu0 0
  %901 = vmatpush1.bf16.msra.mxu0 0
  %902 = vmatprep.subr.bf16.mxu0 0
  %903 = vmatpush1.bf16.msra.mxu0 0
  %904 = vmatprep.subr.bf16.mxu0 0
  %905 = vmatpush1.bf16.msra.mxu0 0
  %906 = vmatprep.mubr.bf16.mxu0 0
  %907 = vmatmul.mubr.bf16.gmra.mrb[0].mxu0 %v869
  %v908 = vpop.f32.mrb[0].mxu0
  %v909 = vadd.f32 0.0, %v908
  %v910 = vpop.f32.mrb[0].mxu0
  %v911 = vpop.f32.mrb[0].mxu0
  %v912 = vpop.f32.mrb[0].mxu0
  %913 = vdwg.mxu0
  %914 = vrot.lane.b32.xlu0 %v274, 64
  %v915 = vpop.permute.xlu0 %914
  %v917 = vsel %vm688, %v764, 0
  %v920 = vsel %vm774, %v915, 0
  %922 = vmatprep.subr.bf16.mxu0 0
  %923 = vmatpush1.bf16.msra.mxu0 %v920
  %924 = vmatprep.subr.bf16.mxu0 0
  %925 = vmatpush1.bf16.msra.mxu0 0
  %926 = vmatprep.subr.bf16.mxu0 0
  %927 = vmatpush1.bf16.msra.mxu0 0
  %928 = vmatprep.subr.bf16.mxu0 0
  %929 = vmatpush1.bf16.msra.mxu0 0
  %930 = vmatprep.subr.bf16.mxu0 0
  %931 = vmatpush1.bf16.msra.mxu0 0
  %932 = vmatprep.subr.bf16.mxu0 0
  %933 = vmatpush1.bf16.msra.mxu0 0
  %934 = vmatprep.subr.bf16.mxu0 0
  %935 = vmatpush1.bf16.msra.mxu0 0
  %936 = vmatprep.subr.bf16.mxu0 0
  %937 = vmatpush1.bf16.msra.mxu0 0
  %938 = vmatprep.subr.bf16.mxu0 0
  %939 = vmatpush1.bf16.msra.mxu0 0
  %940 = vmatprep.subr.bf16.mxu0 0
  %941 = vmatpush1.bf16.msra.mxu0 0
  %942 = vmatprep.subr.bf16.mxu0 0
  %943 = vmatpush1.bf16.msra.mxu0 0
  %944 = vmatprep.subr.bf16.mxu0 0
  %945 = vmatpush1.bf16.msra.mxu0 0
  %946 = vmatprep.subr.bf16.mxu0 0
  %947 = vmatpush1.bf16.msra.mxu0 0
  %948 = vmatprep.subr.bf16.mxu0 0
  %949 = vmatpush1.bf16.msra.mxu0 0
  %950 = vmatprep.subr.bf16.mxu0 0
  %951 = vmatpush1.bf16.msra.mxu0 0
  %952 = vmatprep.subr.bf16.mxu0 0
  %953 = vmatpush1.bf16.msra.mxu0 0
  %954 = vmatprep.mubr.bf16.mxu0 0
  %955 = vmatmul.mubr.bf16.gmra.mrb[0].mxu0 %v917
  %v956 = vpop.f32.mrb[0].mxu0
  %v957 = vadd.f32 0.0, %v956
  %v958 = vpop.f32.mrb[0].mxu0
  %v959 = vpop.f32.mrb[0].mxu0
  %v960 = vpop.f32.mrb[0].mxu0
  %961 = vdwg.mxu0
  %962 = vrot.lane.b32.xlu0 %v275, 64
  %v963 = vpop.permute.xlu0 %962
  %v965 = vsel %vm688, %v765, 0
  %v968 = vsel %vm774, %v963, 0
  %970 = vmatprep.subr.bf16.mxu0 0
  %971 = vmatpush1.bf16.msra.mxu0 %v968
  %972 = vmatprep.subr.bf16.mxu0 0
  %973 = vmatpush1.bf16.msra.mxu0 0
  %974 = vmatprep.subr.bf16.mxu0 0
  %975 = vmatpush1.bf16.msra.mxu0 0
  %976 = vmatprep.subr.bf16.mxu0 0
  %977 = vmatpush1.bf16.msra.mxu0 0
  %978 = vmatprep.subr.bf16.mxu0 0
  %979 = vmatpush1.bf16.msra.mxu0 0
  %980 = vmatprep.subr.bf16.mxu0 0
  %981 = vmatpush1.bf16.msra.mxu0 0
  %982 = vmatprep.subr.bf16.mxu0 0
  %983 = vmatpush1.bf16.msra.mxu0 0
  %984 = vmatprep.subr.bf16.mxu0 0
  %985 = vmatpush1.bf16.msra.mxu0 0
  %986 = vmatprep.subr.bf16.mxu0 0
  %987 = vmatpush1.bf16.msra.mxu0 0
  %988 = vmatprep.subr.bf16.mxu0 0
  %989 = vmatpush1.bf16.msra.mxu0 0
  %990 = vmatprep.subr.bf16.mxu0 0
  %991 = vmatpush1.bf16.msra.mxu0 0
  %992 = vmatprep.subr.bf16.mxu0 0
  %993 = vmatpush1.bf16.msra.mxu0 0
  %994 = vmatprep.subr.bf16.mxu0 0
  %995 = vmatpush1.bf16.msra.mxu0 0
  %996 = vmatprep.subr.bf16.mxu0 0
  %997 = vmatpush1.bf16.msra.mxu0 0
  %998 = vmatprep.subr.bf16.mxu0 0
  %999 = vmatpush1.bf16.msra.mxu0 0
  %1000 = vmatprep.subr.bf16.mxu0 0
  %1001 = vmatpush1.bf16.msra.mxu0 0
  %1002 = vmatprep.mubr.bf16.mxu0 0
  %1003 = vmatmul.mubr.bf16.gmra.mrb[0].mxu0 %v965
  %v1004 = vpop.f32.mrb[0].mxu0
  %v1005 = vadd.f32 0.0, %v1004
  %v1006 = vpop.f32.mrb[0].mxu0
  %v1007 = vpop.f32.mrb[0].mxu0
  %v1008 = vpop.f32.mrb[0].mxu0
  %1009 = vdwg.mxu0
  %1010 = vrot.lane.b32.xlu0 %v276, 64
  %v1011 = vpop.permute.xlu0 %1010
  %v1013 = vsel %vm688, %v766, 0
  %v1016 = vsel %vm774, %v1011, 0
  %1018 = vmatprep.subr.bf16.mxu0 0
  %1019 = vmatpush1.bf16.msra.mxu0 %v1016
  %1020 = vmatprep.subr.bf16.mxu0 0
  %1021 = vmatpush1.bf16.msra.mxu0 0
  %1022 = vmatprep.subr.bf16.mxu0 0
  %1023 = vmatpush1.bf16.msra.mxu0 0
  %1024 = vmatprep.subr.bf16.mxu0 0
  %1025 = vmatpush1.bf16.msra.mxu0 0
  %1026 = vmatprep.subr.bf16.mxu0 0
  %1027 = vmatpush1.bf16.msra.mxu0 0
  %1028 = vmatprep.subr.bf16.mxu0 0
  %1029 = vmatpush1.bf16.msra.mxu0 0
  %1030 = vmatprep.subr.bf16.mxu0 0
  %1031 = vmatpush1.bf16.msra.mxu0 0
  %1032 = vmatprep.subr.bf16.mxu0 0
  %1033 = vmatpush1.bf16.msra.mxu0 0
  %1034 = vmatprep.subr.bf16.mxu0 0
  %1035 = vmatpush1.bf16.msra.mxu0 0
  %1036 = vmatprep.subr.bf16.mxu0 0
  %1037 = vmatpush1.bf16.msra.mxu0 0
  %1038 = vmatprep.subr.bf16.mxu0 0
  %1039 = vmatpush1.bf16.msra.mxu0 0
  %1040 = vmatprep.subr.bf16.mxu0 0
  %1041 = vmatpush1.bf16.msra.mxu0 0
  %1042 = vmatprep.subr.bf16.mxu0 0
  %1043 = vmatpush1.bf16.msra.mxu0 0
  %1044 = vmatprep.subr.bf16.mxu0 0
  %1045 = vmatpush1.bf16.msra.mxu0 0
  %1046 = vmatprep.subr.bf16.mxu0 0
  %1047 = vmatpush1.bf16.msra.mxu0 0
  %1048 = vmatprep.subr.bf16.mxu0 0
  %1049 = vmatpush1.bf16.msra.mxu0 0
  %1050 = vmatprep.mubr.bf16.mxu0 0
  %1051 = vmatmul.mubr.bf16.gmra.mrb[0].mxu0 %v1013
  %v1052 = vpop.f32.mrb[0].mxu0
  %v1053 = vadd.f32 0.0, %v1052
  %v1054 = vpop.f32.mrb[0].mxu0
  %v1055 = vpop.f32.mrb[0].mxu0
  %v1056 = vpop.f32.mrb[0].mxu0
  %1057 = vdwg.mxu0
  %1058 = vrot.lane.b32.xlu0 %v277, 64
  %v1059 = vpop.permute.xlu0 %1058
  %v1061 = vsel %vm688, %v767, 0
  %v1064 = vsel %vm774, %v1059, 0
  %1066 = vmatprep.subr.bf16.mxu0 0
  %1067 = vmatpush1.bf16.msra.mxu0 %v1064
  %1068 = vmatprep.subr.bf16.mxu0 0
  %1069 = vmatpush1.bf16.msra.mxu0 0
  %1070 = vmatprep.subr.bf16.mxu0 0
  %1071 = vmatpush1.bf16.msra.mxu0 0
  %1072 = vmatprep.subr.bf16.mxu0 0
  %1073 = vmatpush1.bf16.msra.mxu0 0
  %1074 = vmatprep.subr.bf16.mxu0 0
  %1075 = vmatpush1.bf16.msra.mxu0 0
  %1076 = vmatprep.subr.bf16.mxu0 0
  %1077 = vmatpush1.bf16.msra.mxu0 0
  %1078 = vmatprep.subr.bf16.mxu0 0
  %1079 = vmatpush1.bf16.msra.mxu0 0
  %1080 = vmatprep.subr.bf16.mxu0 0
  %1081 = vmatpush1.bf16.msra.mxu0 0
  %1082 = vmatprep.subr.bf16.mxu0 0
  %1083 = vmatpush1.bf16.msra.mxu0 0
  %1084 = vmatprep.subr.bf16.mxu0 0
  %1085 = vmatpush1.bf16.msra.mxu0 0
  %1086 = vmatprep.subr.bf16.mxu0 0
  %1087 = vmatpush1.bf16.msra.mxu0 0
  %1088 = vmatprep.subr.bf16.mxu0 0
  %1089 = vmatpush1.bf16.msra.mxu0 0
  %1090 = vmatprep.subr.bf16.mxu0 0
  %1091 = vmatpush1.bf16.msra.mxu0 0
  %1092 = vmatprep.subr.bf16.mxu0 0
  %1093 = vmatpush1.bf16.msra.mxu0 0
  %1094 = vmatprep.subr.bf16.mxu0 0
  %1095 = vmatpush1.bf16.msra.mxu0 0
  %1096 = vmatprep.subr.bf16.mxu0 0
  %1097 = vmatpush1.bf16.msra.mxu0 0
  %1098 = vmatprep.mubr.bf16.mxu0 0
  %1099 = vmatmul.mubr.bf16.gmra.mrb[0].mxu0 %v1061
  %v1100 = vpop.f32.mrb[0].mxu0
  %v1101 = vadd.f32 0.0, %v1100
  %v1102 = vpop.f32.mrb[0].mxu0
  %v1103 = vpop.f32.mrb[0].mxu0
  %v1104 = vpop.f32.mrb[0].mxu0
  %1105 = vdwg.mxu0
  %1106 = vrot.lane.b32.xlu0 %v278, 64
  %v1107 = vpop.permute.xlu0 %1106
  %v1109 = vsel %vm688, %v768, 0
  %v1112 = vsel %vm774, %v1107, 0
  %1114 = vmatprep.subr.bf16.mxu0 0
  %1115 = vmatpush1.bf16.msra.mxu0 %v1112
  %1116 = vmatprep.subr.bf16.mxu0 0
  %1117 = vmatpush1.bf16.msra.mxu0 0
  %1118 = vmatprep.subr.bf16.mxu0 0
  %1119 = vmatpush1.bf16.msra.mxu0 0
  %1120 = vmatprep.subr.bf16.mxu0 0
  %1121 = vmatpush1.bf16.msra.mxu0 0
  %1122 = vmatprep.subr.bf16.mxu0 0
  %1123 = vmatpush1.bf16.msra.mxu0 0
  %1124 = vmatprep.subr.bf16.mxu0 0
  %1125 = vmatpush1.bf16.msra.mxu0 0
  %1126 = vmatprep.subr.bf16.mxu0 0
  %1127 = vmatpush1.bf16.msra.mxu0 0
  %1128 = vmatprep.subr.bf16.mxu0 0
  %1129 = vmatpush1.bf16.msra.mxu0 0
  %1130 = vmatprep.subr.bf16.mxu0 0
  %1131 = vmatpush1.bf16.msra.mxu0 0
  %1132 = vmatprep.subr.bf16.mxu0 0
  %1133 = vmatpush1.bf16.msra.mxu0 0
  %1134 = vmatprep.subr.bf16.mxu0 0
  %1135 = vmatpush1.bf16.msra.mxu0 0
  %1136 = vmatprep.subr.bf16.mxu0 0
  %1137 = vmatpush1.bf16.msra.mxu0 0
  %1138 = vmatprep.subr.bf16.mxu0 0
  %1139 = vmatpush1.bf16.msra.mxu0 0
  %1140 = vmatprep.subr.bf16.mxu0 0
  %1141 = vmatpush1.bf16.msra.mxu0 0
  %1142 = vmatprep.subr.bf16.mxu0 0
  %1143 = vmatpush1.bf16.msra.mxu0 0
  %1144 = vmatprep.subr.bf16.mxu0 0
  %1145 = vmatpush1.bf16.msra.mxu0 0
  %1146 = vmatprep.mubr.bf16.mxu0 0
  %1147 = vmatmul.mubr.bf16.gmra.mrb[0].mxu0 %v1109
  %v1148 = vpop.f32.mrb[0].mxu0
  %v1149 = vadd.f32 0.0, %v1148
  %v1150 = vpop.f32.mrb[0].mxu0
  %v1151 = vpop.f32.mrb[0].mxu0
  %v1152 = vpop.f32.mrb[0].mxu0
  %1153 = vdwg.mxu0
  %v1154 = vrcp.pop %v739
  %v1155 = vrcp.pop %v742
  %v1156 = vrcp.pop %v745
  %v1157 = vrcp.pop %v748
  %v1158 = vrcp.pop %v751
  %v1159 = vrcp.pop %v754
  %v1160 = vrcp.pop %v757
  %v1161 = vrcp.pop %v760
  %v1162 = vmul.f32 %v813, %v1154
  %v1163 = vmul.f32 %v861, %v1155
  %v1164 = vmul.f32 %v909, %v1156
  %v1165 = vmul.f32 %v957, %v1157
  %v1166 = vmul.f32 %v1005, %v1158
  %v1167 = vmul.f32 %v1053, %v1159
  %v1168 = vmul.f32 %v1101, %v1160
  %v1169 = vmul.f32 %v1149, %v1161
  %1174 = vrot.lane.b32.xlu0 %v1166, 16
  %v1175 = vpop.permute.xlu0 %1174
  %1176 = vrot.lane.b32.xlu0 %v1167, 16
  %v1177 = vpop.permute.xlu0 %1176
  %1178 = vrot.lane.b32.xlu0 %v1168, 16
  %v1179 = vpop.permute.xlu0 %1178
  %1180 = vrot.lane.b32.xlu0 %v1169, 16
  %v1181 = vpop.permute.xlu0 %1180
  %v1186 = vsel %vm282, %v1162, %v1175
  %v1187 = vsel %vm282, %v1163, %v1177
  %v1188 = vsel %vm282, %v1164, %v1179
  %v1189 = vsel %vm282, %v1165, %v1181
  %v1190 = vpack.c.bf16 %v1187, %v1186
  %v1191 = vpack.c.bf16 %v1189, %v1188
  %v1192 = vlaneseq
  %v1193 = vshrl.u32 %v1192, 7
  %v1194 = vsub.s32 2, %v1193
  %v1195 = vrot.slane %v32, %v1194
  %v1200 = vunpack.c.l.b16 %v38
  %v1201 = vunpack.c.l.b16 %v39
  %v1202 = vunpack.c.l.b16 %v40
  %v1203 = vunpack.c.l.b16 %v41
  %v1204 = vpack.c.b16 %v1201, %v1200
  %v1205 = vpack.c.b16 %v1203, %v1202
  %v1209 = vsel %vm112, %v1190, 0
  %v1212 = vsel %vm112, %v1191, 0
  %1214 = vmatprep.subr.bf16.mxu0 0
  %1215 = vmatpush1.bf16.msra.mxu0 %v1204
  %1216 = vmatprep.subr.bf16.mxu0 0
  %1217 = vmatpush1.bf16.msra.mxu0 %v1205
  %1218 = vmatprep.subr.bf16.mxu0 0
  %1219 = vmatpush1.bf16.msra.mxu0 0
  %1220 = vmatprep.subr.bf16.mxu0 0
  %1221 = vmatpush1.bf16.msra.mxu0 0
  %1222 = vmatprep.subr.bf16.mxu0 0
  %1223 = vmatpush1.bf16.msra.mxu0 0
  %1224 = vmatprep.subr.bf16.mxu0 0
  %1225 = vmatpush1.bf16.msra.mxu0 0
  %1226 = vmatprep.subr.bf16.mxu0 0
  %1227 = vmatpush1.bf16.msra.mxu0 0
  %1228 = vmatprep.subr.bf16.mxu0 0
  %1229 = vmatpush1.bf16.msra.mxu0 0
  %1230 = vmatprep.subr.bf16.mxu0 0
  %1231 = vmatpush1.bf16.msra.mxu0 0
  %1232 = vmatprep.subr.bf16.mxu0 0
  %1233 = vmatpush1.bf16.msra.mxu0 0
  %1234 = vmatprep.subr.bf16.mxu0 0
  %1235 = vmatpush1.bf16.msra.mxu0 0
  %1236 = vmatprep.subr.bf16.mxu0 0
  %1237 = vmatpush1.bf16.msra.mxu0 0
  %1238 = vmatprep.subr.bf16.mxu0 0
  %1239 = vmatpush1.bf16.msra.mxu0 0
  %1240 = vmatprep.subr.bf16.mxu0 0
  %1241 = vmatpush1.bf16.msra.mxu0 0
  %1242 = vmatprep.subr.bf16.mxu0 0
  %1243 = vmatpush1.bf16.msra.mxu0 0
  %1244 = vmatprep.subr.bf16.mxu0 0
  %1245 = vmatpush1.bf16.msra.mxu0 0
  %1246 = vmatprep.mubr.bf16.mxu0 0
  %1247 = vmatmul.mubr.bf16.gmra.mrb[0].mxu0 %v1209
  %v1248 = vpop.f32.mrb[0].mxu0
  %v1249 = vadd.f32 %v1195, %v1248
  %v1250 = vpop.f32.mrb[0].mxu0
  %v1251 = vpop.f32.mrb[0].mxu0
  %v1252 = vadd.f32 %v1195, %v1251
  %v1253 = vpop.f32.mrb[0].mxu0
  %1254 = vmatprep.mubr.bf16.mxu0 0
  %1255 = vmatmul.mubr.bf16.gmra.mrb[0].mxu0 %v1212
  %v1256 = vpop.f32.mrb[0].mxu0
  %v1257 = vadd.f32 %v1195, %v1256
  %v1258 = vpop.f32.mrb[0].mxu0
  %v1259 = vpop.f32.mrb[0].mxu0
  %v1260 = vadd.f32 %v1195, %v1259
  %v1261 = vpop.f32.mrb[0].mxu0
  %1262 = vdwg.mxu0
  %v1263 = vadd.f32 %v178, %v1249
  %v1264 = vadd.f32 %v179, %v1252
  %v1265 = vadd.f32 %v180, %v1257
  %v1266 = vadd.f32 %v181, %v1260
  %v1267 = vsel %vm112, %v1263, 0.0
  %1268 = vadd.xlane.f32.xlu0 %v1267
  %v1269 = vpop.xlane.xlu0 %1268
  %v1270 = vsel %vm112, %v1264, 0.0
  %1271 = vadd.xlane.f32.xlu0 %v1270
  %v1272 = vpop.xlane.xlu0 %1271
  %v1273 = vsel %vm112, %v1265, 0.0
  %1274 = vadd.xlane.f32.xlu0 %v1273
  %v1275 = vpop.xlane.xlu0 %1274
  %v1276 = vsel %vm112, %v1266, 0.0
  %1277 = vadd.xlane.f32.xlu0 %v1276
  %v1278 = vpop.xlane.xlu0 %1277
  %v1279 = vmul.f32 %v1269, %v125
  %v1280 = vmul.f32 %v1272, %v125
  %v1281 = vmul.f32 %v1275, %v125
  %v1282 = vmul.f32 %v1278, %v125
  %v1283 = vsub.f32 %v1263, %v1279
  %v1284 = vsub.f32 %v1264, %v1280
  %v1285 = vsub.f32 %v1265, %v1281
  %v1286 = vsub.f32 %v1266, %v1282
  %v1287 = vmul.f32 %v1283, %v1283
  %v1288 = vmul.f32 %v1284, %v1284
  %v1289 = vmul.f32 %v1285, %v1285
  %v1290 = vmul.f32 %v1286, %v1286
  %v1291 = vsel %vm112, %v1287, 0.0
  %1292 = vadd.xlane.f32.xlu0 %v1291
  %v1293 = vpop.xlane.xlu0 %1292
  %v1294 = vsel %vm112, %v1288, 0.0
  %1295 = vadd.xlane.f32.xlu0 %v1294
  %v1296 = vpop.xlane.xlu0 %1295
  %v1297 = vsel %vm112, %v1289, 0.0
  %1298 = vadd.xlane.f32.xlu0 %v1297
  %v1299 = vpop.xlane.xlu0 %1298
  %v1300 = vsel %vm112, %v1290, 0.0
  %1301 = vadd.xlane.f32.xlu0 %v1300
  %v1302 = vpop.xlane.xlu0 %1301
  %v1303 = vmul.f32 %v1293, %v125
  %v1304 = vmul.f32 %v1296, %v125
  %v1305 = vmul.f32 %v1299, %v125
  %v1306 = vmul.f32 %v1302, %v125
  %v1307 = vadd.f32 %v1303, 1e-12
  %v1308 = vadd.f32 %v1304, 1e-12
  %v1309 = vadd.f32 %v1305, 1e-12
  %v1310 = vadd.f32 %v1306, 1e-12
  %v1311 = vrsqrt.pop %v1307
  %v1312 = vrsqrt.pop %v1308
  %v1313 = vrsqrt.pop %v1309
  %v1314 = vrsqrt.pop %v1310
  %v1315 = vmul.f32 %v1283, %v1311
  %v1316 = vmul.f32 %v1284, %v1312
  %v1317 = vmul.f32 %v1285, %v1313
  %v1318 = vmul.f32 %v1286, %v1314
  %v1319 = vlaneseq
  %v1320 = vshrl.u32 %v1319, 7
  %v1321 = vsub.s32 3, %v1320
  %v1322 = vrot.slane %v32, %v1321
  %v1323 = vmul.f32 %v1315, %v1322
  %v1324 = vmul.f32 %v1316, %v1322
  %v1325 = vmul.f32 %v1317, %v1322
  %v1326 = vmul.f32 %v1318, %v1322
  %v1327 = vlaneseq
  %v1328 = vshrl.u32 %v1327, 7
  %v1329 = vsub.s32 4, %v1328
  %v1330 = vrot.slane %v32, %v1329
  %v1331 = vadd.f32 %v1323, %v1330
  %v1332 = vadd.f32 %v1324, %v1330
  %v1333 = vadd.f32 %v1325, %v1330
  %v1334 = vadd.f32 %v1326, %v1330
  %v1335 = vpack.c.bf16 %v1332, %v1331
  %v1336 = vpack.c.bf16 %v1334, %v1333
  %v1337 = vlaneseq
  %v1338 = vshrl.u32 %v1337, 7
  %v1339 = vsub.s32 1, %v1338
  %v1340 = vrot.slane %v33, %v1339
  %v1345 = vunpack.c.l.b16 %v42
  %v1346 = vunpack.c.l.b16 %v43
  %v1347 = vunpack.c.l.b16 %v44
  %v1348 = vunpack.c.l.b16 %v45
  %v1349 = vpack.c.b16 %v1346, %v1345
  %v1350 = vpack.c.b16 %v1348, %v1347
  %v1354 = vsel %vm112, %v1335, 0
  %v1357 = vsel %vm112, %v1336, 0
  %1359 = vmatprep.subr.bf16.mxu0 0
  %1360 = vmatpush1.bf16.msra.mxu0 %v1349
  %1361 = vmatprep.subr.bf16.mxu0 0
  %1362 = vmatpush1.bf16.msra.mxu0 %v1350
  %1363 = vmatprep.subr.bf16.mxu0 0
  %1364 = vmatpush1.bf16.msra.mxu0 0
  %1365 = vmatprep.subr.bf16.mxu0 0
  %1366 = vmatpush1.bf16.msra.mxu0 0
  %1367 = vmatprep.subr.bf16.mxu0 0
  %1368 = vmatpush1.bf16.msra.mxu0 0
  %1369 = vmatprep.subr.bf16.mxu0 0
  %1370 = vmatpush1.bf16.msra.mxu0 0
  %1371 = vmatprep.subr.bf16.mxu0 0
  %1372 = vmatpush1.bf16.msra.mxu0 0
  %1373 = vmatprep.subr.bf16.mxu0 0
  %1374 = vmatpush1.bf16.msra.mxu0 0
  %1375 = vmatprep.subr.bf16.mxu0 0
  %1376 = vmatpush1.bf16.msra.mxu0 0
  %1377 = vmatprep.subr.bf16.mxu0 0
  %1378 = vmatpush1.bf16.msra.mxu0 0
  %1379 = vmatprep.subr.bf16.mxu0 0
  %1380 = vmatpush1.bf16.msra.mxu0 0
  %1381 = vmatprep.subr.bf16.mxu0 0
  %1382 = vmatpush1.bf16.msra.mxu0 0
  %1383 = vmatprep.subr.bf16.mxu0 0
  %1384 = vmatpush1.bf16.msra.mxu0 0
  %1385 = vmatprep.subr.bf16.mxu0 0
  %1386 = vmatpush1.bf16.msra.mxu0 0
  %1387 = vmatprep.subr.bf16.mxu0 0
  %1388 = vmatpush1.bf16.msra.mxu0 0
  %1389 = vmatprep.subr.bf16.mxu0 0
  %1390 = vmatpush1.bf16.msra.mxu0 0
  %1391 = vmatprep.mubr.bf16.mxu0 0
  %1392 = vmatmul.mubr.bf16.gmra.mrb[0].mxu0 %v1354
  %v1393 = vpop.f32.mrb[0].mxu0
  %v1394 = vadd.f32 %v1340, %v1393
  %v1395 = vpop.f32.mrb[0].mxu0
  %v1396 = vpop.f32.mrb[0].mxu0
  %v1397 = vadd.f32 %v1340, %v1396
  %v1398 = vpop.f32.mrb[0].mxu0
  %1399 = vmatprep.mubr.bf16.mxu0 0
  %1400 = vmatmul.mubr.bf16.gmra.mrb[0].mxu0 %v1357
  %v1401 = vpop.f32.mrb[0].mxu0
  %v1402 = vadd.f32 %v1340, %v1401
  %v1403 = vpop.f32.mrb[0].mxu0
  %v1404 = vpop.f32.mrb[0].mxu0
  %v1405 = vadd.f32 %v1340, %v1404
  %v1406 = vpop.f32.mrb[0].mxu0
  %1407 = vdwg.mxu0
  %v1408 = vmul.f32 %v1394, %v1394
  %v1409 = vmul.f32 %v1397, %v1397
  %v1410 = vmul.f32 %v1402, %v1402
  %v1411 = vmul.f32 %v1405, %v1405
  %v1412 = vmul.f32 %v1394, %v1408
  %v1413 = vmul.f32 %v1397, %v1409
  %v1414 = vmul.f32 %v1402, %v1410
  %v1415 = vmul.f32 %v1405, %v1411
  %v1416 = vmul.f32 %v1412, 0.044715
  %v1417 = vmul.f32 %v1413, 0.044715
  %v1418 = vmul.f32 %v1414, 0.044715
  %v1419 = vmul.f32 %v1415, 0.044715
  %v1420 = vadd.f32 %v1394, %v1416
  %v1421 = vadd.f32 %v1397, %v1417
  %v1422 = vadd.f32 %v1402, %v1418
  %v1423 = vadd.f32 %v1405, %v1419
  %v1424 = vmul.f32 %v1420, 0.7978846
  %v1425 = vmul.f32 %v1421, 0.7978846
  %v1426 = vmul.f32 %v1422, 0.7978846
  %v1427 = vmul.f32 %v1423, 0.7978846
  %v1428 = vtanh.pop %v1424
  %v1429 = vtanh.pop %v1425
  %v1430 = vtanh.pop %v1426
  %v1431 = vtanh.pop %v1427
  %v1432 = vadd.f32 %v1428, 1.0
  %v1433 = vadd.f32 %v1429, 1.0
  %v1434 = vadd.f32 %v1430, 1.0
  %v1435 = vadd.f32 %v1431, 1.0
  %v1436 = vmul.f32 %v1432, 0.5
  %v1437 = vmul.f32 %v1433, 0.5
  %v1438 = vmul.f32 %v1434, 0.5
  %v1439 = vmul.f32 %v1435, 0.5
  %v1440 = vmul.f32 %v1394, %v1436
  %v1441 = vmul.f32 %v1397, %v1437
  %v1442 = vmul.f32 %v1402, %v1438
  %v1443 = vmul.f32 %v1405, %v1439
  %v1444 = vpack.c.bf16 %v1441, %v1440
  %v1445 = vpack.c.bf16 %v1443, %v1442
  %v1446 = vlaneseq
  %v1447 = vshrl.u32 %v1446, 7
  %v1448 = vsub.s32 5, %v1447
  %v1449 = vrot.slane %v32, %v1448
  %v1458 = vunpack.c.l.b16 %v46
  %v1459 = vunpack.c.l.b16 %v47
  %v1460 = vunpack.c.l.b16 %v48
  %v1461 = vunpack.c.l.b16 %v49
  %v1462 = vunpack.c.l.b16 %v50
  %v1463 = vunpack.c.l.b16 %v51
  %v1464 = vunpack.c.l.b16 %v52
  %v1465 = vunpack.c.l.b16 %v53
  %v1466 = vpack.c.b16 %v1459, %v1458
  %v1467 = vpack.c.b16 %v1461, %v1460
  %v1468 = vpack.c.b16 %v1463, %v1462
  %v1469 = vpack.c.b16 %v1465, %v1464
  %vm1474 = vcmask 523264
  %v1476 = vsel %vm1474, %v1444, 0
  %v1479 = vsel %vm1474, %v1445, 0
  %1481 = vmatprep.subr.bf16.mxu0 0
  %1482 = vmatpush1.bf16.msra.mxu0 %v1466
  %1483 = vmatprep.subr.bf16.mxu0 0
  %1484 = vmatpush1.bf16.msra.mxu0 %v1467
  %1485 = vmatprep.subr.bf16.mxu0 0
  %1486 = vmatpush1.bf16.msra.mxu0 %v1468
  %1487 = vmatprep.subr.bf16.mxu0 0
  %1488 = vmatpush1.bf16.msra.mxu0 %v1469
  %1489 = vmatprep.subr.bf16.mxu0 0
  %1490 = vmatpush1.bf16.msra.mxu0 0
  %1491 = vmatprep.subr.bf16.mxu0 0
  %1492 = vmatpush1.bf16.msra.mxu0 0
  %1493 = vmatprep.subr.bf16.mxu0 0
  %1494 = vmatpush1.bf16.msra.mxu0 0
  %1495 = vmatprep.subr.bf16.mxu0 0
  %1496 = vmatpush1.bf16.msra.mxu0 0
  %1497 = vmatprep.subr.bf16.mxu0 0
  %1498 = vmatpush1.bf16.msra.mxu0 0
  %1499 = vmatprep.subr.bf16.mxu0 0
  %1500 = vmatpush1.bf16.msra.mxu0 0
  %1501 = vmatprep.subr.bf16.mxu0 0
  %1502 = vmatpush1.bf16.msra.mxu0 0
  %1503 = vmatprep.subr.bf16.mxu0 0
  %1504 = vmatpush1.bf16.msra.mxu0 0
  %1505 = vmatprep.subr.bf16.mxu0 0
  %1506 = vmatpush1.bf16.msra.mxu0 0
  %1507 = vmatprep.subr.bf16.mxu0 0
  %1508 = vmatpush1.bf16.msra.mxu0 0
  %1509 = vmatprep.subr.bf16.mxu0 0
  %1510 = vmatpush1.bf16.msra.mxu0 0
  %1511 = vmatprep.subr.bf16.mxu0 0
  %1512 = vmatpush1.bf16.msra.mxu0 0
  %1513 = vmatprep.mubr.bf16.mxu0 0
  %1514 = vmatmul.mubr.bf16.gmra.mrb[0].mxu0 %v1476
  %v1515 = vpop.f32.mrb[0].mxu0
  %v1516 = vadd.f32 %v1449, %v1515
  %v1517 = vpop.f32.mrb[0].mxu0
  %v1518 = vpop.f32.mrb[0].mxu0
  %v1519 = vadd.f32 %v1449, %v1518
  %v1520 = vpop.f32.mrb[0].mxu0
  %1521 = vmatprep.mubr.bf16.mxu0 0
  %1522 = vmatmul.mubr.bf16.gmra.mrb[0].mxu0 %v1479
  %v1523 = vpop.f32.mrb[0].mxu0
  %v1524 = vadd.f32 %v1449, %v1523
  %v1525 = vpop.f32.mrb[0].mxu0
  %v1526 = vpop.f32.mrb[0].mxu0
  %v1527 = vadd.f32 %v1449, %v1526
  %v1528 = vpop.f32.mrb[0].mxu0
  %1529 = vdwg.mxu0
  %v1530 = vadd.f32 %v1331, %v1516
  %v1531 = vadd.f32 %v1332, %v1519
  %v1532 = vadd.f32 %v1333, %v1524
  %v1533 = vadd.f32 %v1334, %v1527
  %v1534 = vsel %vm112, %v1530, 0.0
  %1535 = vadd.xlane.f32.xlu0 %v1534
  %v1536 = vpop.xlane.xlu0 %1535
  %v1537 = vsel %vm112, %v1531, 0.0
  %1538 = vadd.xlane.f32.xlu0 %v1537
  %v1539 = vpop.xlane.xlu0 %1538
  %v1540 = vsel %vm112, %v1532, 0.0
  %1541 = vadd.xlane.f32.xlu0 %v1540
  %v1542 = vpop.xlane.xlu0 %1541
  %v1543 = vsel %vm112, %v1533, 0.0
  %1544 = vadd.xlane.f32.xlu0 %v1543
  %v1545 = vpop.xlane.xlu0 %1544
  %v1546 = vmul.f32 %v1536, %v125
  %v1547 = vmul.f32 %v1539, %v125
  %v1548 = vmul.f32 %v1542, %v125
  %v1549 = vmul.f32 %v1545, %v125
  %v1550 = vsub.f32 %v1530, %v1546
  %v1551 = vsub.f32 %v1531, %v1547
  %v1552 = vsub.f32 %v1532, %v1548
  %v1553 = vsub.f32 %v1533, %v1549
  %v1554 = vmul.f32 %v1550, %v1550
  %v1555 = vmul.f32 %v1551, %v1551
  %v1556 = vmul.f32 %v1552, %v1552
  %v1557 = vmul.f32 %v1553, %v1553
  %v1558 = vsel %vm112, %v1554, 0.0
  %1559 = vadd.xlane.f32.xlu0 %v1558
  %v1560 = vpop.xlane.xlu0 %1559
  %v1561 = vsel %vm112, %v1555, 0.0
  %1562 = vadd.xlane.f32.xlu0 %v1561
  %v1563 = vpop.xlane.xlu0 %1562
  %v1564 = vsel %vm112, %v1556, 0.0
  %1565 = vadd.xlane.f32.xlu0 %v1564
  %v1566 = vpop.xlane.xlu0 %1565
  %v1567 = vsel %vm112, %v1557, 0.0
  %1568 = vadd.xlane.f32.xlu0 %v1567
  %v1569 = vpop.xlane.xlu0 %1568
  %v1570 = vmul.f32 %v1560, %v125
  %v1571 = vmul.f32 %v1563, %v125
  %v1572 = vmul.f32 %v1566, %v125
  %v1573 = vmul.f32 %v1569, %v125
  %v1574 = vadd.f32 %v1570, 1e-12
  %v1575 = vadd.f32 %v1571, 1e-12
  %v1576 = vadd.f32 %v1572, 1e-12
  %v1577 = vadd.f32 %v1573, 1e-12
  %v1578 = vrsqrt.pop %v1574
  %v1579 = vrsqrt.pop %v1575
  %v1580 = vrsqrt.pop %v1576
  %v1581 = vrsqrt.pop %v1577
  %v1582 = vmul.f32 %v1550, %v1578
  %v1583 = vmul.f32 %v1551, %v1579
  %v1584 = vmul.f32 %v1552, %v1580
  %v1585 = vmul.f32 %v1553, %v1581
  %v1586 = vlaneseq
  %v1587 = vshrl.u32 %v1586, 7
  %v1588 = vsub.s32 6, %v1587
  %v1589 = vrot.slane %v32, %v1588
  %v1590 = vmul.f32 %v1582, %v1589
  %v1591 = vmul.f32 %v1583, %v1589
  %v1592 = vmul.f32 %v1584, %v1589
  %v1593 = vmul.f32 %v1585, %v1589
  %v1594 = vlaneseq
  %v1595 = vshrl.u32 %v1594, 7
  %v1596 = vsub.s32 7, %v1595
  %v1597 = vrot.slane %v32, %v1596
  %v1598 = vadd.f32 %v1590, %v1597
  %v1599 = vadd.f32 %v1591, %v1597
  %v1600 = vadd.f32 %v1592, %v1597
  %v1601 = vadd.f32 %v1593, %v1597
  %v1602 = vpack.c.bf16 %v1599, %v1598
  %v1603 = vpack.c.bf16 %v1601, %v1600
  %v1605 = vsel %vm112, %v1602, 0
  %v1608 = vsel %vm112, %v1603, 0
  %1610 = vmatprep.subr.bf16.mxu0 0
  %1611 = vmatpush1.bf16.msra.mxu0 %v196
  %1612 = vmatprep.subr.bf16.mxu0 0
  %1613 = vmatpush1.bf16.msra.mxu0 %v197
  %1614 = vmatprep.subr.bf16.mxu0 0
  %1615 = vmatpush1.bf16.msra.mxu0 0
  %1616 = vmatprep.subr.bf16.mxu0 0
  %1617 = vmatpush1.bf16.msra.mxu0 0
  %1618 = vmatprep.subr.bf16.mxu0 0
  %1619 = vmatpush1.bf16.msra.mxu0 0
  %1620 = vmatprep.subr.bf16.mxu0 0
  %1621 = vmatpush1.bf16.msra.mxu0 0
  %1622 = vmatprep.subr.bf16.mxu0 0
  %1623 = vmatpush1.bf16.msra.mxu0 0
  %1624 = vmatprep.subr.bf16.mxu0 0
  %1625 = vmatpush1.bf16.msra.mxu0 0
  %1626 = vmatprep.subr.bf16.mxu0 0
  %1627 = vmatpush1.bf16.msra.mxu0 0
  %1628 = vmatprep.subr.bf16.mxu0 0
  %1629 = vmatpush1.bf16.msra.mxu0 0
  %1630 = vmatprep.subr.bf16.mxu0 0
  %1631 = vmatpush1.bf16.msra.mxu0 0
  %1632 = vmatprep.subr.bf16.mxu0 0
  %1633 = vmatpush1.bf16.msra.mxu0 0
  %1634 = vmatprep.subr.bf16.mxu0 0
  %1635 = vmatpush1.bf16.msra.mxu0 0
  %1636 = vmatprep.subr.bf16.mxu0 0
  %1637 = vmatpush1.bf16.msra.mxu0 0
  %1638 = vmatprep.subr.bf16.mxu0 0
  %1639 = vmatpush1.bf16.msra.mxu0 0
  %1640 = vmatprep.subr.bf16.mxu0 0
  %1641 = vmatpush1.bf16.msra.mxu0 0
  %1642 = vmatprep.mubr.bf16.mxu0 0
  %1643 = vmatmul.mubr.bf16.gmra.mrb[0].mxu0 %v1605
  %v1644 = vpop.f32.mrb[0].mxu0
  %v1645 = vadd.f32 %v187, %v1644
  %v1646 = vpop.f32.mrb[0].mxu0
  %v1647 = vpop.f32.mrb[0].mxu0
  %v1648 = vadd.f32 %v187, %v1647
  %v1649 = vpop.f32.mrb[0].mxu0
  %1650 = vmatprep.mubr.bf16.mxu0 0
  %1651 = vmatmul.mubr.bf16.gmra.mrb[0].mxu0 %v1608
  %v1652 = vpop.f32.mrb[0].mxu0
  %v1653 = vadd.f32 %v187, %v1652
  %v1654 = vpop.f32.mrb[0].mxu0
  %v1655 = vpop.f32.mrb[0].mxu0
  %v1656 = vadd.f32 %v187, %v1655
  %v1657 = vpop.f32.mrb[0].mxu0
  %1658 = vdwg.mxu0
  %1663 = vrot.lane.b32.xlu0 %v1645, 112
  %v1664 = vpop.permute.xlu0 %1663
  %1665 = vrot.lane.b32.xlu0 %v1648, 112
  %v1666 = vpop.permute.xlu0 %1665
  %1667 = vrot.lane.b32.xlu0 %v1653, 112
  %v1668 = vpop.permute.xlu0 %1667
  %1669 = vrot.lane.b32.xlu0 %v1656, 112
  %v1670 = vpop.permute.xlu0 %1669
  %v1675 = vpack.c.bf16 %v1645, %v1645
  %v1676 = vpack.c.bf16 %v1648, %v1648
  %v1677 = vpack.c.bf16 %v1653, %v1653
  %v1678 = vpack.c.bf16 %v1656, %v1656
  %v1679 = vpack.c.bf16 %v1664, %v1664
  %v1680 = vpack.c.bf16 %v1666, %v1666
  %v1681 = vpack.c.bf16 %v1668, %v1668
  %v1682 = vpack.c.bf16 %v1670, %v1670
  %1684 = vrot.lane.b32.xlu0 %v1675, 96
  %v1685 = vpop.permute.xlu0 %1684
  %v1687 = vsel %vm282, %v1675, 0
  %v1690 = vsel %vm282, %v1685, 0
  %1692 = vmatprep.subr.bf16.mxu0 0
  %1693 = vmatpush1.bf16.xpose.msra.mxu0 %v1690
  %1694 = vmatprep.subr.bf16.mxu0 0
  %1695 = vmatpush1.bf16.xpose.msra.mxu0 0
  %1696 = vmatprep.subr.bf16.mxu0 0
  %1697 = vmatpush1.bf16.xpose.msra.mxu0 0
  %1698 = vmatprep.subr.bf16.mxu0 0
  %1699 = vmatpush1.bf16.xpose.msra.mxu0 0
  %1700 = vmatprep.subr.bf16.mxu0 0
  %1701 = vmatpush1.bf16.xpose.msra.mxu0 0
  %1702 = vmatprep.subr.bf16.mxu0 0
  %1703 = vmatpush1.bf16.xpose.msra.mxu0 0
  %1704 = vmatprep.subr.bf16.mxu0 0
  %1705 = vmatpush1.bf16.xpose.msra.mxu0 0
  %1706 = vmatprep.subr.bf16.mxu0 0
  %1707 = vmatpush1.bf16.xpose.msra.mxu0 0
  %1708 = vmatprep.subr.bf16.mxu0 0
  %1709 = vmatpush1.bf16.xpose.msra.mxu0 0
  %1710 = vmatprep.subr.bf16.mxu0 0
  %1711 = vmatpush1.bf16.xpose.msra.mxu0 0
  %1712 = vmatprep.subr.bf16.mxu0 0
  %1713 = vmatpush1.bf16.xpose.msra.mxu0 0
  %1714 = vmatprep.subr.bf16.mxu0 0
  %1715 = vmatpush1.bf16.xpose.msra.mxu0 0
  %1716 = vmatprep.subr.bf16.mxu0 0
  %1717 = vmatpush1.bf16.xpose.msra.mxu0 0
  %1718 = vmatprep.subr.bf16.mxu0 0
  %1719 = vmatpush1.bf16.xpose.msra.mxu0 0
  %1720 = vmatprep.subr.bf16.mxu0 0
  %1721 = vmatpush1.bf16.xpose.msra.mxu0 0
  %1722 = vmatprep.subr.bf16.mxu0 0
  %1723 = vmatpush1.bf16.xpose.msra.mxu0 0
  %1724 = vmatprep.mubr.bf16.mxu0 0
  %1725 = vmatmul.mubr.bf16.gmra.mrb[0].mxu0 %v1687
  %v1726 = vpop.f32.mrb[0].mxu0
  %v1727 = vadd.f32 0.0, %v1726
  %v1728 = vpop.f32.mrb[0].mxu0
  %v1729 = vpop.f32.mrb[0].mxu0
  %v1730 = vpop.f32.mrb[0].mxu0
  %1731 = vdwg.mxu0
  %1733 = vrot.lane.b32.xlu0 %v1676, 96
  %v1734 = vpop.permute.xlu0 %1733
  %v1736 = vsel %vm282, %v1676, 0
  %v1739 = vsel %vm282, %v1734, 0
  %1741 = vmatprep.subr.bf16.mxu0 0
  %1742 = vmatpush1.bf16.xpose.msra.mxu0 %v1739
  %1743 = vmatprep.subr.bf16.mxu0 0
  %1744 = vmatpush1.bf16.xpose.msra.mxu0 0
  %1745 = vmatprep.subr.bf16.mxu0 0
  %1746 = vmatpush1.bf16.xpose.msra.mxu0 0
  %1747 = vmatprep.subr.bf16.mxu0 0
  %1748 = vmatpush1.bf16.xpose.msra.mxu0 0
  %1749 = vmatprep.subr.bf16.mxu0 0
  %1750 = vmatpush1.bf16.xpose.msra.mxu0 0
  %1751 = vmatprep.subr.bf16.mxu0 0
  %1752 = vmatpush1.bf16.xpose.msra.mxu0 0
  %1753 = vmatprep.subr.bf16.mxu0 0
  %1754 = vmatpush1.bf16.xpose.msra.mxu0 0
  %1755 = vmatprep.subr.bf16.mxu0 0
  %1756 = vmatpush1.bf16.xpose.msra.mxu0 0
  %1757 = vmatprep.subr.bf16.mxu0 0
  %1758 = vmatpush1.bf16.xpose.msra.mxu0 0
  %1759 = vmatprep.subr.bf16.mxu0 0
  %1760 = vmatpush1.bf16.xpose.msra.mxu0 0
  %1761 = vmatprep.subr.bf16.mxu0 0
  %1762 = vmatpush1.bf16.xpose.msra.mxu0 0
  %1763 = vmatprep.subr.bf16.mxu0 0
  %1764 = vmatpush1.bf16.xpose.msra.mxu0 0
  %1765 = vmatprep.subr.bf16.mxu0 0
  %1766 = vmatpush1.bf16.xpose.msra.mxu0 0
  %1767 = vmatprep.subr.bf16.mxu0 0
  %1768 = vmatpush1.bf16.xpose.msra.mxu0 0
  %1769 = vmatprep.subr.bf16.mxu0 0
  %1770 = vmatpush1.bf16.xpose.msra.mxu0 0
  %1771 = vmatprep.subr.bf16.mxu0 0
  %1772 = vmatpush1.bf16.xpose.msra.mxu0 0
  %1773 = vmatprep.mubr.bf16.mxu0 0
  %1774 = vmatmul.mubr.bf16.gmra.mrb[0].mxu0 %v1736
  %v1775 = vpop.f32.mrb[0].mxu0
  %v1776 = vadd.f32 0.0, %v1775
  %v1777 = vpop.f32.mrb[0].mxu0
  %v1778 = vpop.f32.mrb[0].mxu0
  %v1779 = vpop.f32.mrb[0].mxu0
  %1780 = vdwg.mxu0
  %1782 = vrot.lane.b32.xlu0 %v1677, 96
  %v1783 = vpop.permute.xlu0 %1782
  %v1785 = vsel %vm282, %v1677, 0
  %v1788 = vsel %vm282, %v1783, 0
  %1790 = vmatprep.subr.bf16.mxu0 0
  %1791 = vmatpush1.bf16.xpose.msra.mxu0 %v1788
  %1792 = vmatprep.subr.bf16.mxu0 0
  %1793 = vmatpush1.bf16.xpose.msra.mxu0 0
  %1794 = vmatprep.subr.bf16.mxu0 0
  %1795 = vmatpush1.bf16.xpose.msra.mxu0 0
  %1796 = vmatprep.subr.bf16.mxu0 0
  %1797 = vmatpush1.bf16.xpose.msra.mxu0 0
  %1798 = vmatprep.subr.bf16.mxu0 0
  %1799 = vmatpush1.bf16.xpose.msra.mxu0 0
  %1800 = vmatprep.subr.bf16.mxu0 0
  %1801 = vmatpush1.bf16.xpose.msra.mxu0 0
  %1802 = vmatprep.subr.bf16.mxu0 0
  %1803 = vmatpush1.bf16.xpose.msra.mxu0 0
  %1804 = vmatprep.subr.bf16.mxu0 0
  %1805 = vmatpush1.bf16.xpose.msra.mxu0 0
  %1806 = vmatprep.subr.bf16.mxu0 0
  %1807 = vmatpush1.bf16.xpose.msra.mxu0 0
  %1808 = vmatprep.subr.bf16.mxu0 0
  %1809 = vmatpush1.bf16.xpose.msra.mxu0 0
  %1810 = vmatprep.subr.bf16.mxu0 0
  %1811 = vmatpush1.bf16.xpose.msra.mxu0 0
  %1812 = vmatprep.subr.bf16.mxu0 0
  %1813 = vmatpush1.bf16.xpose.msra.mxu0 0
  %1814 = vmatprep.subr.bf16.mxu0 0
  %1815 = vmatpush1.bf16.xpose.msra.mxu0 0
  %1816 = vmatprep.subr.bf16.mxu0 0
  %1817 = vmatpush1.bf16.xpose.msra.mxu0 0
  %1818 = vmatprep.subr.bf16.mxu0 0
  %1819 = vmatpush1.bf16.xpose.msra.mxu0 0
  %1820 = vmatprep.subr.bf16.mxu0 0
  %1821 = vmatpush1.bf16.xpose.msra.mxu0 0
  %1822 = vmatprep.mubr.bf16.mxu0 0
  %1823 = vmatmul.mubr.bf16.gmra.mrb[0].mxu0 %v1785
  %v1824 = vpop.f32.mrb[0].mxu0
  %v1825 = vadd.f32 0.0, %v1824
  %v1826 = vpop.f32.mrb[0].mxu0
  %v1827 = vpop.f32.mrb[0].mxu0
  %v1828 = vpop.f32.mrb[0].mxu0
  %1829 = vdwg.mxu0
  %1831 = vrot.lane.b32.xlu0 %v1678, 96
  %v1832 = vpop.permute.xlu0 %1831
  %v1834 = vsel %vm282, %v1678, 0
  %v1837 = vsel %vm282, %v1832, 0
  %1839 = vmatprep.subr.bf16.mxu0 0
  %1840 = vmatpush1.bf16.xpose.msra.mxu0 %v1837
  %1841 = vmatprep.subr.bf16.mxu0 0
  %1842 = vmatpush1.bf16.xpose.msra.mxu0 0
  %1843 = vmatprep.subr.bf16.mxu0 0
  %1844 = vmatpush1.bf16.xpose.msra.mxu0 0
  %1845 = vmatprep.subr.bf16.mxu0 0
  %1846 = vmatpush1.bf16.xpose.msra.mxu0 0
  %1847 = vmatprep.subr.bf16.mxu0 0
  %1848 = vmatpush1.bf16.xpose.msra.mxu0 0
  %1849 = vmatprep.subr.bf16.mxu0 0
  %1850 = vmatpush1.bf16.xpose.msra.mxu0 0
  %1851 = vmatprep.subr.bf16.mxu0 0
  %1852 = vmatpush1.bf16.xpose.msra.mxu0 0
  %1853 = vmatprep.subr.bf16.mxu0 0
  %1854 = vmatpush1.bf16.xpose.msra.mxu0 0
  %1855 = vmatprep.subr.bf16.mxu0 0
  %1856 = vmatpush1.bf16.xpose.msra.mxu0 0
  %1857 = vmatprep.subr.bf16.mxu0 0
  %1858 = vmatpush1.bf16.xpose.msra.mxu0 0
  %1859 = vmatprep.subr.bf16.mxu0 0
  %1860 = vmatpush1.bf16.xpose.msra.mxu0 0
  %1861 = vmatprep.subr.bf16.mxu0 0
  %1862 = vmatpush1.bf16.xpose.msra.mxu0 0
  %1863 = vmatprep.subr.bf16.mxu0 0
  %1864 = vmatpush1.bf16.xpose.msra.mxu0 0
  %1865 = vmatprep.subr.bf16.mxu0 0
  %1866 = vmatpush1.bf16.xpose.msra.mxu0 0
  %1867 = vmatprep.subr.bf16.mxu0 0
  %1868 = vmatpush1.bf16.xpose.msra.mxu0 0
  %1869 = vmatprep.subr.bf16.mxu0 0
  %1870 = vmatpush1.bf16.xpose.msra.mxu0 0
  %1871 = vmatprep.mubr.bf16.mxu0 0
  %1872 = vmatmul.mubr.bf16.gmra.mrb[0].mxu0 %v1834
  %v1873 = vpop.f32.mrb[0].mxu0
  %v1874 = vadd.f32 0.0, %v1873
  %v1875 = vpop.f32.mrb[0].mxu0
  %v1876 = vpop.f32.mrb[0].mxu0
  %v1877 = vpop.f32.mrb[0].mxu0
  %1878 = vdwg.mxu0
  %1880 = vrot.lane.b32.xlu0 %v1679, 96
  %v1881 = vpop.permute.xlu0 %1880
  %v1883 = vsel %vm282, %v1679, 0
  %v1886 = vsel %vm282, %v1881, 0
  %1888 = vmatprep.subr.bf16.mxu0 0
  %1889 = vmatpush1.bf16.xpose.msra.mxu0 %v1886
  %1890 = vmatprep.subr.bf16.mxu0 0
  %1891 = vmatpush1.bf16.xpose.msra.mxu0 0
  %1892 = vmatprep.subr.bf16.mxu0 0
  %1893 = vmatpush1.bf16.xpose.msra.mxu0 0
  %1894 = vmatprep.subr.bf16.mxu0 0
  %1895 = vmatpush1.bf16.xpose.msra.mxu0 0
  %1896 = vmatprep.subr.bf16.mxu0 0
  %1897 = vmatpush1.bf16.xpose.msra.mxu0 0
  %1898 = vmatprep.subr.bf16.mxu0 0
  %1899 = vmatpush1.bf16.xpose.msra.mxu0 0
  %1900 = vmatprep.subr.bf16.mxu0 0
  %1901 = vmatpush1.bf16.xpose.msra.mxu0 0
  %1902 = vmatprep.subr.bf16.mxu0 0
  %1903 = vmatpush1.bf16.xpose.msra.mxu0 0
  %1904 = vmatprep.subr.bf16.mxu0 0
  %1905 = vmatpush1.bf16.xpose.msra.mxu0 0
  %1906 = vmatprep.subr.bf16.mxu0 0
  %1907 = vmatpush1.bf16.xpose.msra.mxu0 0
  %1908 = vmatprep.subr.bf16.mxu0 0
  %1909 = vmatpush1.bf16.xpose.msra.mxu0 0
  %1910 = vmatprep.subr.bf16.mxu0 0
  %1911 = vmatpush1.bf16.xpose.msra.mxu0 0
  %1912 = vmatprep.subr.bf16.mxu0 0
  %1913 = vmatpush1.bf16.xpose.msra.mxu0 0
  %1914 = vmatprep.subr.bf16.mxu0 0
  %1915 = vmatpush1.bf16.xpose.msra.mxu0 0
  %1916 = vmatprep.subr.bf16.mxu0 0
  %1917 = vmatpush1.bf16.xpose.msra.mxu0 0
  %1918 = vmatprep.subr.bf16.mxu0 0
  %1919 = vmatpush1.bf16.xpose.msra.mxu0 0
  %1920 = vmatprep.mubr.bf16.mxu0 0
  %1921 = vmatmul.mubr.bf16.gmra.mrb[0].mxu0 %v1883
  %v1922 = vpop.f32.mrb[0].mxu0
  %v1923 = vadd.f32 0.0, %v1922
  %v1924 = vpop.f32.mrb[0].mxu0
  %v1925 = vpop.f32.mrb[0].mxu0
  %v1926 = vpop.f32.mrb[0].mxu0
  %1927 = vdwg.mxu0
  %1929 = vrot.lane.b32.xlu0 %v1680, 96
  %v1930 = vpop.permute.xlu0 %1929
  %v1932 = vsel %vm282, %v1680, 0
  %v1935 = vsel %vm282, %v1930, 0
  %1937 = vmatprep.subr.bf16.mxu0 0
  %1938 = vmatpush1.bf16.xpose.msra.mxu0 %v1935
  %1939 = vmatprep.subr.bf16.mxu0 0
  %1940 = vmatpush1.bf16.xpose.msra.mxu0 0
  %1941 = vmatprep.subr.bf16.mxu0 0
  %1942 = vmatpush1.bf16.xpose.msra.mxu0 0
  %1943 = vmatprep.subr.bf16.mxu0 0
  %1944 = vmatpush1.bf16.xpose.msra.mxu0 0
  %1945 = vmatprep.subr.bf16.mxu0 0
  %1946 = vmatpush1.bf16.xpose.msra.mxu0 0
  %1947 = vmatprep.subr.bf16.mxu0 0
  %1948 = vmatpush1.bf16.xpose.msra.mxu0 0
  %1949 = vmatprep.subr.bf16.mxu0 0
  %1950 = vmatpush1.bf16.xpose.msra.mxu0 0
  %1951 = vmatprep.subr.bf16.mxu0 0
  %1952 = vmatpush1.bf16.xpose.msra.mxu0 0
  %1953 = vmatprep.subr.bf16.mxu0 0
  %1954 = vmatpush1.bf16.xpose.msra.mxu0 0
  %1955 = vmatprep.subr.bf16.mxu0 0
  %1956 = vmatpush1.bf16.xpose.msra.mxu0 0
  %1957 = vmatprep.subr.bf16.mxu0 0
  %1958 = vmatpush1.bf16.xpose.msra.mxu0 0
  %1959 = vmatprep.subr.bf16.mxu0 0
  %1960 = vmatpush1.bf16.xpose.msra.mxu0 0
  %1961 = vmatprep.subr.bf16.mxu0 0
  %1962 = vmatpush1.bf16.xpose.msra.mxu0 0
  %1963 = vmatprep.subr.bf16.mxu0 0
  %1964 = vmatpush1.bf16.xpose.msra.mxu0 0
  %1965 = vmatprep.subr.bf16.mxu0 0
  %1966 = vmatpush1.bf16.xpose.msra.mxu0 0
  %1967 = vmatprep.subr.bf16.mxu0 0
  %1968 = vmatpush1.bf16.xpose.msra.mxu0 0
  %1969 = vmatprep.mubr.bf16.mxu0 0
  %1970 = vmatmul.mubr.bf16.gmra.mrb[0].mxu0 %v1932
  %v1971 = vpop.f32.mrb[0].mxu0
  %v1972 = vadd.f32 0.0, %v1971
  %v1973 = vpop.f32.mrb[0].mxu0
  %v1974 = vpop.f32.mrb[0].mxu0
  %v1975 = vpop.f32.mrb[0].mxu0
  %1976 = vdwg.mxu0
  %1978 = vrot.lane.b32.xlu0 %v1681, 96
  %v1979 = vpop.permute.xlu0 %1978
  %v1981 = vsel %vm282, %v1681, 0
  %v1984 = vsel %vm282, %v1979, 0
  %1986 = vmatprep.subr.bf16.mxu0 0
  %1987 = vmatpush1.bf16.xpose.msra.mxu0 %v1984
  %1988 = vmatprep.subr.bf16.mxu0 0
  %1989 = vmatpush1.bf16.xpose.msra.mxu0 0
  %1990 = vmatprep.subr.bf16.mxu0 0
  %1991 = vmatpush1.bf16.xpose.msra.mxu0 0
  %1992 = vmatprep.subr.bf16.mxu0 0
  %1993 = vmatpush1.bf16.xpose.msra.mxu0 0
  %1994 = vmatprep.subr.bf16.mxu0 0
  %1995 = vmatpush1.bf16.xpose.msra.mxu0 0
  %1996 = vmatprep.subr.bf16.mxu0 0
  %1997 = vmatpush1.bf16.xpose.msra.mxu0 0
  %1998 = vmatprep.subr.bf16.mxu0 0
  %1999 = vmatpush1.bf16.xpose.msra.mxu0 0
  %2000 = vmatprep.subr.bf16.mxu0 0
  %2001 = vmatpush1.bf16.xpose.msra.mxu0 0
  %2002 = vmatprep.subr.bf16.mxu0 0
  %2003 = vmatpush1.bf16.xpose.msra.mxu0 0
  %2004 = vmatprep.subr.bf16.mxu0 0
  %2005 = vmatpush1.bf16.xpose.msra.mxu0 0
  %2006 = vmatprep.subr.bf16.mxu0 0
  %2007 = vmatpush1.bf16.xpose.msra.mxu0 0
  %2008 = vmatprep.subr.bf16.mxu0 0
  %2009 = vmatpush1.bf16.xpose.msra.mxu0 0
  %2010 = vmatprep.subr.bf16.mxu0 0
  %2011 = vmatpush1.bf16.xpose.msra.mxu0 0
  %2012 = vmatprep.subr.bf16.mxu0 0
  %2013 = vmatpush1.bf16.xpose.msra.mxu0 0
  %2014 = vmatprep.subr.bf16.mxu0 0
  %2015 = vmatpush1.bf16.xpose.msra.mxu0 0
  %2016 = vmatprep.subr.bf16.mxu0 0
  %2017 = vmatpush1.bf16.xpose.msra.mxu0 0
  %2018 = vmatprep.mubr.bf16.mxu0 0
  %2019 = vmatmul.mubr.bf16.gmra.mrb[0].mxu0 %v1981
  %v2020 = vpop.f32.mrb[0].mxu0
  %v2021 = vadd.f32 0.0, %v2020
  %v2022 = vpop.f32.mrb[0].mxu0
  %v2023 = vpop.f32.mrb[0].mxu0
  %v2024 = vpop.f32.mrb[0].mxu0
  %2025 = vdwg.mxu0
  %2027 = vrot.lane.b32.xlu0 %v1682, 96
  %v2028 = vpop.permute.xlu0 %2027
  %v2030 = vsel %vm282, %v1682, 0
  %v2033 = vsel %vm282, %v2028, 0
  %2035 = vmatprep.subr.bf16.mxu0 0
  %2036 = vmatpush1.bf16.xpose.msra.mxu0 %v2033
  %2037 = vmatprep.subr.bf16.mxu0 0
  %2038 = vmatpush1.bf16.xpose.msra.mxu0 0
  %2039 = vmatprep.subr.bf16.mxu0 0
  %2040 = vmatpush1.bf16.xpose.msra.mxu0 0
  %2041 = vmatprep.subr.bf16.mxu0 0
  %2042 = vmatpush1.bf16.xpose.msra.mxu0 0
  %2043 = vmatprep.subr.bf16.mxu0 0
  %2044 = vmatpush1.bf16.xpose.msra.mxu0 0
  %2045 = vmatprep.subr.bf16.mxu0 0
  %2046 = vmatpush1.bf16.xpose.msra.mxu0 0
  %2047 = vmatprep.subr.bf16.mxu0 0
  %2048 = vmatpush1.bf16.xpose.msra.mxu0 0
  %2049 = vmatprep.subr.bf16.mxu0 0
  %2050 = vmatpush1.bf16.xpose.msra.mxu0 0
  %2051 = vmatprep.subr.bf16.mxu0 0
  %2052 = vmatpush1.bf16.xpose.msra.mxu0 0
  %2053 = vmatprep.subr.bf16.mxu0 0
  %2054 = vmatpush1.bf16.xpose.msra.mxu0 0
  %2055 = vmatprep.subr.bf16.mxu0 0
  %2056 = vmatpush1.bf16.xpose.msra.mxu0 0
  %2057 = vmatprep.subr.bf16.mxu0 0
  %2058 = vmatpush1.bf16.xpose.msra.mxu0 0
  %2059 = vmatprep.subr.bf16.mxu0 0
  %2060 = vmatpush1.bf16.xpose.msra.mxu0 0
  %2061 = vmatprep.subr.bf16.mxu0 0
  %2062 = vmatpush1.bf16.xpose.msra.mxu0 0
  %2063 = vmatprep.subr.bf16.mxu0 0
  %2064 = vmatpush1.bf16.xpose.msra.mxu0 0
  %2065 = vmatprep.subr.bf16.mxu0 0
  %2066 = vmatpush1.bf16.xpose.msra.mxu0 0
  %2067 = vmatprep.mubr.bf16.mxu0 0
  %2068 = vmatmul.mubr.bf16.gmra.mrb[0].mxu0 %v2030
  %v2069 = vpop.f32.mrb[0].mxu0
  %v2070 = vadd.f32 0.0, %v2069
  %v2071 = vpop.f32.mrb[0].mxu0
  %v2072 = vpop.f32.mrb[0].mxu0
  %v2073 = vpop.f32.mrb[0].mxu0
  %2074 = vdwg.mxu0
  %v2075 = vmul.f32 %v1727, 0.25
  %v2076 = vmul.f32 %v1776, 0.25
  %v2077 = vmul.f32 %v1825, 0.25
  %v2078 = vmul.f32 %v1874, 0.25
  %v2079 = vmul.f32 %v1923, 0.25
  %v2080 = vmul.f32 %v1972, 0.25
  %v2081 = vmul.f32 %v2021, 0.25
  %v2082 = vmul.f32 %v2070, 0.25
  %v2083 = vadd.f32 %v2075, %v95
  %v2084 = vadd.f32 %v2076, %v99
  %v2085 = vadd.f32 %v2077, %v103
  %v2086 = vadd.f32 %v2078, %v107
  %v2087 = vadd.f32 %v2079, %v95
  %v2088 = vadd.f32 %v2080, %v99
  %v2089 = vadd.f32 %v2081, %v103
  %v2090 = vadd.f32 %v2082, %v107
  %v2091 = vsel %vm688, %v2083, -inf
  %2092 = vmax.xlane.f32.xlu0 %v2091
  %v2093 = vpop.xlane.xlu0 %2092
  %v2094 = vsel %vm688, %v2084, -inf
  %2095 = vmax.xlane.f32.xlu0 %v2094
  %v2096 = vpop.xlane.xlu0 %2095
  %v2097 = vsel %vm688, %v2085, -inf
  %2098 = vmax.xlane.f32.xlu0 %v2097
  %v2099 = vpop.xlane.xlu0 %2098
  %v2100 = vsel %vm688, %v2086, -inf
  %2101 = vmax.xlane.f32.xlu0 %v2100
  %v2102 = vpop.xlane.xlu0 %2101
  %v2103 = vsel %vm688, %v2087, -inf
  %2104 = vmax.xlane.f32.xlu0 %v2103
  %v2105 = vpop.xlane.xlu0 %2104
  %v2106 = vsel %vm688, %v2088, -inf
  %2107 = vmax.xlane.f32.xlu0 %v2106
  %v2108 = vpop.xlane.xlu0 %2107
  %v2109 = vsel %vm688, %v2089, -inf
  %2110 = vmax.xlane.f32.xlu0 %v2109
  %v2111 = vpop.xlane.xlu0 %2110
  %v2112 = vsel %vm688, %v2090, -inf
  %2113 = vmax.xlane.f32.xlu0 %v2112
  %v2114 = vpop.xlane.xlu0 %2113
  %v2115 = vsub.f32 %v2083, %v2093
  %v2116 = vsub.f32 %v2084, %v2096
  %v2117 = vsub.f32 %v2085, %v2099
  %v2118 = vsub.f32 %v2086, %v2102
  %v2119 = vsub.f32 %v2087, %v2105
  %v2120 = vsub.f32 %v2088, %v2108
  %v2121 = vsub.f32 %v2089, %v2111
  %v2122 = vsub.f32 %v2090, %v2114
  %v2123 = vmul.f32 %v2115, 1.442695
  %v2124 = vpow.pop %v2123
  %v2125 = vmul.f32 %v2116, 1.442695
  %v2126 = vpow.pop %v2125
  %v2127 = vmul.f32 %v2117, 1.442695
  %v2128 = vpow.pop %v2127
  %v2129 = vmul.f32 %v2118, 1.442695
  %v2130 = vpow.pop %v2129
  %v2131 = vmul.f32 %v2119, 1.442695
  %v2132 = vpow.pop %v2131
  %v2133 = vmul.f32 %v2120, 1.442695
  %v2134 = vpow.pop %v2133
  %v2135 = vmul.f32 %v2121, 1.442695
  %v2136 = vpow.pop %v2135
  %v2137 = vmul.f32 %v2122, 1.442695
  %v2138 = vpow.pop %v2137
  %v2139 = vsel %vm688, %v2124, 0.0
  %2140 = vadd.xlane.f32.xlu0 %v2139
  %v2141 = vpop.xlane.xlu0 %2140
  %v2142 = vsel %vm688, %v2126, 0.0
  %2143 = vadd.xlane.f32.xlu0 %v2142
  %v2144 = vpop.xlane.xlu0 %2143
  %v2145 = vsel %vm688, %v2128, 0.0
  %2146 = vadd.xlane.f32.xlu0 %v2145
  %v2147 = vpop.xlane.xlu0 %2146
  %v2148 = vsel %vm688, %v2130, 0.0
  %2149 = vadd.xlane.f32.xlu0 %v2148
  %v2150 = vpop.xlane.xlu0 %2149
  %v2151 = vsel %vm688, %v2132, 0.0
  %2152 = vadd.xlane.f32.xlu0 %v2151
  %v2153 = vpop.xlane.xlu0 %2152
  %v2154 = vsel %vm688, %v2134, 0.0
  %2155 = vadd.xlane.f32.xlu0 %v2154
  %v2156 = vpop.xlane.xlu0 %2155
  %v2157 = vsel %vm688, %v2136, 0.0
  %2158 = vadd.xlane.f32.xlu0 %v2157
  %v2159 = vpop.xlane.xlu0 %2158
  %v2160 = vsel %vm688, %v2138, 0.0
  %2161 = vadd.xlane.f32.xlu0 %v2160
  %v2162 = vpop.xlane.xlu0 %2161
  %v2163 = vpack.c.bf16 %v2124, %v2124
  %v2164 = vpack.c.bf16 %v2126, %v2126
  %v2165 = vpack.c.bf16 %v2128, %v2128
  %v2166 = vpack.c.bf16 %v2130, %v2130
  %v2167 = vpack.c.bf16 %v2132, %v2132
  %v2168 = vpack.c.bf16 %v2134, %v2134
  %v2169 = vpack.c.bf16 %v2136, %v2136
  %v2170 = vpack.c.bf16 %v2138, %v2138
  %2171 = vrot.lane.b32.xlu0 %v1675, 64
  %v2172 = vpop.permute.xlu0 %2171
  %v2174 = vsel %vm688, %v2163, 0
  %v2177 = vsel %vm774, %v2172, 0
  %2179 = vmatprep.subr.bf16.mxu0 0
  %2180 = vmatpush1.bf16.msra.mxu0 %v2177
  %2181 = vmatprep.subr.bf16.mxu0 0
  %2182 = vmatpush1.bf16.msra.mxu0 0
  %2183 = vmatprep.subr.bf16.mxu0 0
  %2184 = vmatpush1.bf16.msra.mxu0 0
  %2185 = vmatprep.subr.bf16.mxu0 0
  %2186 = vmatpush1.bf16.msra.mxu0 0
  %2187 = vmatprep.subr.bf16.mxu0 0
  %2188 = vmatpush1.bf16.msra.mxu0 0
  %2189 = vmatprep.subr.bf16.mxu0 0
  %2190 = vmatpush1.bf16.msra.mxu0 0
  %2191 = vmatprep.subr.bf16.mxu0 0
  %2192 = vmatpush1.bf16.msra.mxu0 0
  %2193 = vmatprep.subr.bf16.mxu0 0
  %2194 = vmatpush1.bf16.msra.mxu0 0
  %2195 = vmatprep.subr.bf16.mxu0 0
  %2196 = vmatpush1.bf16.msra.mxu0 0
  %2197 = vmatprep.subr.bf16.mxu0 0
  %2198 = vmatpush1.bf16.msra.mxu0 0
  %2199 = vmatprep.subr.bf16.mxu0 0
  %2200 = vmatpush1.bf16.msra.mxu0 0
  %2201 = vmatprep.subr.bf16.mxu0 0
  %2202 = vmatpush1.bf16.msra.mxu0 0
  %2203 = vmatprep.subr.bf16.mxu0 0
  %2204 = vmatpush1.bf16.msra.mxu0 0
  %2205 = vmatprep.subr.bf16.mxu0 0
  %2206 = vmatpush1.bf16.msra.mxu0 0
  %2207 = vmatprep.subr.bf16.mxu0 0
  %2208 = vmatpush1.bf16.msra.mxu0 0
  %2209 = vmatprep.subr.bf16.mxu0 0
  %2210 = vmatpush1.bf16.msra.mxu0 0
  %2211 = vmatprep.mubr.bf16.mxu0 0
  %2212 = vmatmul.mubr.bf16.gmra.mrb[0].mxu0 %v2174
  %v2213 = vpop.f32.mrb[0].mxu0
  %v2214 = vadd.f32 0.0, %v2213
  %v2215 = vpop.f32.mrb[0].mxu0
  %v2216 = vpop.f32.mrb[0].mxu0
  %v2217 = vpop.f32.mrb[0].mxu0
  %2218 = vdwg.mxu0
  %2219 = vrot.lane.b32.xlu0 %v1676, 64
  %v2220 = vpop.permute.xlu0 %2219
  %v2222 = vsel %vm688, %v2164, 0
  %v2225 = vsel %vm774, %v2220, 0
  %2227 = vmatprep.subr.bf16.mxu0 0
  %2228 = vmatpush1.bf16.msra.mxu0 %v2225
  %2229 = vmatprep.subr.bf16.mxu0 0
  %2230 = vmatpush1.bf16.msra.mxu0 0
  %2231 = vmatprep.subr.bf16.mxu0 0
  %2232 = vmatpush1.bf16.msra.mxu0 0
  %2233 = vmatprep.subr.bf16.mxu0 0
  %2234 = vmatpush1.bf16.msra.mxu0 0
  %2235 = vmatprep.subr.bf16.mxu0 0
  %2236 = vmatpush1.bf16.msra.mxu0 0
  %2237 = vmatprep.subr.bf16.mxu0 0
  %2238 = vmatpush1.bf16.msra.mxu0 0
  %2239 = vmatprep.subr.bf16.mxu0 0
  %2240 = vmatpush1.bf16.msra.mxu0 0
  %2241 = vmatprep.subr.bf16.mxu0 0
  %2242 = vmatpush1.bf16.msra.mxu0 0
  %2243 = vmatprep.subr.bf16.mxu0 0
  %2244 = vmatpush1.bf16.msra.mxu0 0
  %2245 = vmatprep.subr.bf16.mxu0 0
  %2246 = vmatpush1.bf16.msra.mxu0 0
  %2247 = vmatprep.subr.bf16.mxu0 0
  %2248 = vmatpush1.bf16.msra.mxu0 0
  %2249 = vmatprep.subr.bf16.mxu0 0
  %2250 = vmatpush1.bf16.msra.mxu0 0
  %2251 = vmatprep.subr.bf16.mxu0 0
  %2252 = vmatpush1.bf16.msra.mxu0 0
  %2253 = vmatprep.subr.bf16.mxu0 0
  %2254 = vmatpush1.bf16.msra.mxu0 0
  %2255 = vmatprep.subr.bf16.mxu0 0
  %2256 = vmatpush1.bf16.msra.mxu0 0
  %2257 = vmatprep.subr.bf16.mxu0 0
  %2258 = vmatpush1.bf16.msra.mxu0 0
  %2259 = vmatprep.mubr.bf16.mxu0 0
  %2260 = vmatmul.mubr.bf16.gmra.mrb[0].mxu0 %v2222
  %v2261 = vpop.f32.mrb[0].mxu0
  %v2262 = vadd.f32 0.0, %v2261
  %v2263 = vpop.f32.mrb[0].mxu0
  %v2264 = vpop.f32.mrb[0].mxu0
  %v2265 = vpop.f32.mrb[0].mxu0
  %2266 = vdwg.mxu0
  %2267 = vrot.lane.b32.xlu0 %v1677, 64
  %v2268 = vpop.permute.xlu0 %2267
  %v2270 = vsel %vm688, %v2165, 0
  %v2273 = vsel %vm774, %v2268, 0
  %2275 = vmatprep.subr.bf16.mxu0 0
  %2276 = vmatpush1.bf16.msra.mxu0 %v2273
  %2277 = vmatprep.subr.bf16.mxu0 0
  %2278 = vmatpush1.bf16.msra.mxu0 0
  %2279 = vmatprep.subr.bf16.mxu0 0
  %2280 = vmatpush1.bf16.msra.mxu0 0
  %2281 = vmatprep.subr.bf16.mxu0 0
  %2282 = vmatpush1.bf16.msra.mxu0 0
  %2283 = vmatprep.subr.bf16.mxu0 0
  %2284 = vmatpush1.bf16.msra.mxu0 0
  %2285 = vmatprep.subr.bf16.mxu0 0
  %2286 = vmatpush1.bf16.msra.mxu0 0
  %2287 = vmatprep.subr.bf16.mxu0 0
  %2288 = vmatpush1.bf16.msra.mxu0 0
  %2289 = vmatprep.subr.bf16.mxu0 0
  %2290 = vmatpush1.bf16.msra.mxu0 0
  %2291 = vmatprep.subr.bf16.mxu0 0
  %2292 = vmatpush1.bf16.msra.mxu0 0
  %2293 = vmatprep.subr.bf16.mxu0 0
  %2294 = vmatpush1.bf16.msra.mxu0 0
  %2295 = vmatprep.subr.bf16.mxu0 0
  %2296 = vmatpush1.bf16.msra.mxu0 0
  %2297 = vmatprep.subr.bf16.mxu0 0
  %2298 = vmatpush1.bf16.msra.mxu0 0
  %2299 = vmatprep.subr.bf16.mxu0 0
  %2300 = vmatpush1.bf16.msra.mxu0 0
  %2301 = vmatprep.subr.bf16.mxu0 0
  %2302 = vmatpush1.bf16.msra.mxu0 0
  %2303 = vmatprep.subr.bf16.mxu0 0
  %2304 = vmatpush1.bf16.msra.mxu0 0
  %2305 = vmatprep.subr.bf16.mxu0 0
  %2306 = vmatpush1.bf16.msra.mxu0 0
  %2307 = vmatprep.mubr.bf16.mxu0 0
  %2308 = vmatmul.mubr.bf16.gmra.mrb[0].mxu0 %v2270
  %v2309 = vpop.f32.mrb[0].mxu0
  %v2310 = vadd.f32 0.0, %v2309
  %v2311 = vpop.f32.mrb[0].mxu0
  %v2312 = vpop.f32.mrb[0].mxu0
  %v2313 = vpop.f32.mrb[0].mxu0
  %2314 = vdwg.mxu0
  %2315 = vrot.lane.b32.xlu0 %v1678, 64
  %v2316 = vpop.permute.xlu0 %2315
  %v2318 = vsel %vm688, %v2166, 0
  %v2321 = vsel %vm774, %v2316, 0
  %2323 = vmatprep.subr.bf16.mxu0 0
  %2324 = vmatpush1.bf16.msra.mxu0 %v2321
  %2325 = vmatprep.subr.bf16.mxu0 0
  %2326 = vmatpush1.bf16.msra.mxu0 0
  %2327 = vmatprep.subr.bf16.mxu0 0
  %2328 = vmatpush1.bf16.msra.mxu0 0
  %2329 = vmatprep.subr.bf16.mxu0 0
  %2330 = vmatpush1.bf16.msra.mxu0 0
  %2331 = vmatprep.subr.bf16.mxu0 0
  %2332 = vmatpush1.bf16.msra.mxu0 0
  %2333 = vmatprep.subr.bf16.mxu0 0
  %2334 = vmatpush1.bf16.msra.mxu0 0
  %2335 = vmatprep.subr.bf16.mxu0 0
  %2336 = vmatpush1.bf16.msra.mxu0 0
  %2337 = vmatprep.subr.bf16.mxu0 0
  %2338 = vmatpush1.bf16.msra.mxu0 0
  %2339 = vmatprep.subr.bf16.mxu0 0
  %2340 = vmatpush1.bf16.msra.mxu0 0
  %2341 = vmatprep.subr.bf16.mxu0 0
  %2342 = vmatpush1.bf16.msra.mxu0 0
  %2343 = vmatprep.subr.bf16.mxu0 0
  %2344 = vmatpush1.bf16.msra.mxu0 0
  %2345 = vmatprep.subr.bf16.mxu0 0
  %2346 = vmatpush1.bf16.msra.mxu0 0
  %2347 = vmatprep.subr.bf16.mxu0 0
  %2348 = vmatpush1.bf16.msra.mxu0 0
  %2349 = vmatprep.subr.bf16.mxu0 0
  %2350 = vmatpush1.bf16.msra.mxu0 0
  %2351 = vmatprep.subr.bf16.mxu0 0
  %2352 = vmatpush1.bf16.msra.mxu0 0
  %2353 = vmatprep.subr.bf16.mxu0 0
  %2354 = vmatpush1.bf16.msra.mxu0 0
  %2355 = vmatprep.mubr.bf16.mxu0 0
  %2356 = vmatmul.mubr.bf16.gmra.mrb[0].mxu0 %v2318
  %v2357 = vpop.f32.mrb[0].mxu0
  %v2358 = vadd.f32 0.0, %v2357
  %v2359 = vpop.f32.mrb[0].mxu0
  %v2360 = vpop.f32.mrb[0].mxu0
  %v2361 = vpop.f32.mrb[0].mxu0
  %2362 = vdwg.mxu0
  %2363 = vrot.lane.b32.xlu0 %v1679, 64
  %v2364 = vpop.permute.xlu0 %2363
  %v2366 = vsel %vm688, %v2167, 0
  %v2369 = vsel %vm774, %v2364, 0
  %2371 = vmatprep.subr.bf16.mxu0 0
  %2372 = vmatpush1.bf16.msra.mxu0 %v2369
  %2373 = vmatprep.subr.bf16.mxu0 0
  %2374 = vmatpush1.bf16.msra.mxu0 0
  %2375 = vmatprep.subr.bf16.mxu0 0
  %2376 = vmatpush1.bf16.msra.mxu0 0
  %2377 = vmatprep.subr.bf16.mxu0 0
  %2378 = vmatpush1.bf16.msra.mxu0 0
  %2379 = vmatprep.subr.bf16.mxu0 0
  %2380 = vmatpush1.bf16.msra.mxu0 0
  %2381 = vmatprep.subr.bf16.mxu0 0
  %2382 = vmatpush1.bf16.msra.mxu0 0
  %2383 = vmatprep.subr.bf16.mxu0 0
  %2384 = vmatpush1.bf16.msra.mxu0 0
  %2385 = vmatprep.subr.bf16.mxu0 0
  %2386 = vmatpush1.bf16.msra.mxu0 0
  %2387 = vmatprep.subr.bf16.mxu0 0
  %2388 = vmatpush1.bf16.msra.mxu0 0
  %2389 = vmatprep.subr.bf16.mxu0 0
  %2390 = vmatpush1.bf16.msra.mxu0 0
  %2391 = vmatprep.subr.bf16.mxu0 0
  %2392 = vmatpush1.bf16.msra.mxu0 0
  %2393 = vmatprep.subr.bf16.mxu0 0
  %2394 = vmatpush1.bf16.msra.mxu0 0
  %2395 = vmatprep.subr.bf16.mxu0 0
  %2396 = vmatpush1.bf16.msra.mxu0 0
  %2397 = vmatprep.subr.bf16.mxu0 0
  %2398 = vmatpush1.bf16.msra.mxu0 0
  %2399 = vmatprep.subr.bf16.mxu0 0
  %2400 = vmatpush1.bf16.msra.mxu0 0
  %2401 = vmatprep.subr.bf16.mxu0 0
  %2402 = vmatpush1.bf16.msra.mxu0 0
  %2403 = vmatprep.mubr.bf16.mxu0 0
  %2404 = vmatmul.mubr.bf16.gmra.mrb[0].mxu0 %v2366
  %v2405 = vpop.f32.mrb[0].mxu0
  %v2406 = vadd.f32 0.0, %v2405
  %v2407 = vpop.f32.mrb[0].mxu0
  %v2408 = vpop.f32.mrb[0].mxu0
  %v2409 = vpop.f32.mrb[0].mxu0
  %2410 = vdwg.mxu0
  %2411 = vrot.lane.b32.xlu0 %v1680, 64
  %v2412 = vpop.permute.xlu0 %2411
  %v2414 = vsel %vm688, %v2168, 0
  %v2417 = vsel %vm774, %v2412, 0
  %2419 = vmatprep.subr.bf16.mxu0 0
  %2420 = vmatpush1.bf16.msra.mxu0 %v2417
  %2421 = vmatprep.subr.bf16.mxu0 0
  %2422 = vmatpush1.bf16.msra.mxu0 0
  %2423 = vmatprep.subr.bf16.mxu0 0
  %2424 = vmatpush1.bf16.msra.mxu0 0
  %2425 = vmatprep.subr.bf16.mxu0 0
  %2426 = vmatpush1.bf16.msra.mxu0 0
  %2427 = vmatprep.subr.bf16.mxu0 0
  %2428 = vmatpush1.bf16.msra.mxu0 0
  %2429 = vmatprep.subr.bf16.mxu0 0
  %2430 = vmatpush1.bf16.msra.mxu0 0
  %2431 = vmatprep.subr.bf16.mxu0 0
  %2432 = vmatpush1.bf16.msra.mxu0 0
  %2433 = vmatprep.subr.bf16.mxu0 0
  %2434 = vmatpush1.bf16.msra.mxu0 0
  %2435 = vmatprep.subr.bf16.mxu0 0
  %2436 = vmatpush1.bf16.msra.mxu0 0
  %2437 = vmatprep.subr.bf16.mxu0 0
  %2438 = vmatpush1.bf16.msra.mxu0 0
  %2439 = vmatprep.subr.bf16.mxu0 0
  %2440 = vmatpush1.bf16.msra.mxu0 0
  %2441 = vmatprep.subr.bf16.mxu0 0
  %2442 = vmatpush1.bf16.msra.mxu0 0
  %2443 = vmatprep.subr.bf16.mxu0 0
  %2444 = vmatpush1.bf16.msra.mxu0 0
  %2445 = vmatprep.subr.bf16.mxu0 0
  %2446 = vmatpush1.bf16.msra.mxu0 0
  %2447 = vmatprep.subr.bf16.mxu0 0
  %2448 = vmatpush1.bf16.msra.mxu0 0
  %2449 = vmatprep.subr.bf16.mxu0 0
  %2450 = vmatpush1.bf16.msra.mxu0 0
  %2451 = vmatprep.mubr.bf16.mxu0 0
  %2452 = vmatmul.mubr.bf16.gmra.mrb[0].mxu0 %v2414
  %v2453 = vpop.f32.mrb[0].mxu0
  %v2454 = vadd.f32 0.0, %v2453
  %v2455 = vpop.f32.mrb[0].mxu0
  %v2456 = vpop.f32.mrb[0].mxu0
  %v2457 = vpop.f32.mrb[0].mxu0
  %2458 = vdwg.mxu0
  %2459 = vrot.lane.b32.xlu0 %v1681, 64
  %v2460 = vpop.permute.xlu0 %2459
  %v2462 = vsel %vm688, %v2169, 0
  %v2465 = vsel %vm774, %v2460, 0
  %2467 = vmatprep.subr.bf16.mxu0 0
  %2468 = vmatpush1.bf16.msra.mxu0 %v2465
  %2469 = vmatprep.subr.bf16.mxu0 0
  %2470 = vmatpush1.bf16.msra.mxu0 0
  %2471 = vmatprep.subr.bf16.mxu0 0
  %2472 = vmatpush1.bf16.msra.mxu0 0
  %2473 = vmatprep.subr.bf16.mxu0 0
  %2474 = vmatpush1.bf16.msra.mxu0 0
  %2475 = vmatprep.subr.bf16.mxu0 0
  %2476 = vmatpush1.bf16.msra.mxu0 0
  %2477 = vmatprep.subr.bf16.mxu0 0
  %2478 = vmatpush1.bf16.msra.mxu0 0
  %2479 = vmatprep.subr.bf16.mxu0 0
  %2480 = vmatpush1.bf16.msra.mxu0 0
  %2481 = vmatprep.subr.bf16.mxu0 0
  %2482 = vmatpush1.bf16.msra.mxu0 0
  %2483 = vmatprep.subr.bf16.mxu0 0
  %2484 = vmatpush1.bf16.msra.mxu0 0
  %2485 = vmatprep.subr.bf16.mxu0 0
  %2486 = vmatpush1.bf16.msra.mxu0 0
  %2487 = vmatprep.subr.bf16.mxu0 0
  %2488 = vmatpush1.bf16.msra.mxu0 0
  %2489 = vmatprep.subr.bf16.mxu0 0
  %2490 = vmatpush1.bf16.msra.mxu0 0
  %2491 = vmatprep.subr.bf16.mxu0 0
  %2492 = vmatpush1.bf16.msra.mxu0 0
  %2493 = vmatprep.subr.bf16.mxu0 0
  %2494 = vmatpush1.bf16.msra.mxu0 0
  %2495 = vmatprep.subr.bf16.mxu0 0
  %2496 = vmatpush1.bf16.msra.mxu0 0
  %2497 = vmatprep.subr.bf16.mxu0 0
  %2498 = vmatpush1.bf16.msra.mxu0 0
  %2499 = vmatprep.mubr.bf16.mxu0 0
  %2500 = vmatmul.mubr.bf16.gmra.mrb[0].mxu0 %v2462
  %v2501 = vpop.f32.mrb[0].mxu0
  %v2502 = vadd.f32 0.0, %v2501
  %v2503 = vpop.f32.mrb[0].mxu0
  %v2504 = vpop.f32.mrb[0].mxu0
  %v2505 = vpop.f32.mrb[0].mxu0
  %2506 = vdwg.mxu0
  %2507 = vrot.lane.b32.xlu0 %v1682, 64
  %v2508 = vpop.permute.xlu0 %2507
  %v2510 = vsel %vm688, %v2170, 0
  %v2513 = vsel %vm774, %v2508, 0
  %2515 = vmatprep.subr.bf16.mxu0 0
  %2516 = vmatpush1.bf16.msra.mxu0 %v2513
  %2517 = vmatprep.subr.bf16.mxu0 0
  %2518 = vmatpush1.bf16.msra.mxu0 0
  %2519 = vmatprep.subr.bf16.mxu0 0
  %2520 = vmatpush1.bf16.msra.mxu0 0
  %2521 = vmatprep.subr.bf16.mxu0 0
  %2522 = vmatpush1.bf16.msra.mxu0 0
  %2523 = vmatprep.subr.bf16.mxu0 0
  %2524 = vmatpush1.bf16.msra.mxu0 0
  %2525 = vmatprep.subr.bf16.mxu0 0
  %2526 = vmatpush1.bf16.msra.mxu0 0
  %2527 = vmatprep.subr.bf16.mxu0 0
  %2528 = vmatpush1.bf16.msra.mxu0 0
  %2529 = vmatprep.subr.bf16.mxu0 0
  %2530 = vmatpush1.bf16.msra.mxu0 0
  %2531 = vmatprep.subr.bf16.mxu0 0
  %2532 = vmatpush1.bf16.msra.mxu0 0
  %2533 = vmatprep.subr.bf16.mxu0 0
  %2534 = vmatpush1.bf16.msra.mxu0 0
  %2535 = vmatprep.subr.bf16.mxu0 0
  %2536 = vmatpush1.bf16.msra.mxu0 0
  %2537 = vmatprep.subr.bf16.mxu0 0
  %2538 = vmatpush1.bf16.msra.mxu0 0
  %2539 = vmatprep.subr.bf16.mxu0 0
  %2540 = vmatpush1.bf16.msra.mxu0 0
  %2541 = vmatprep.subr.bf16.mxu0 0
  %2542 = vmatpush1.bf16.msra.mxu0 0
  %2543 = vmatprep.subr.bf16.mxu0 0
  %2544 = vmatpush1.bf16.msra.mxu0 0
  %2545 = vmatprep.subr.bf16.mxu0 0
  %2546 = vmatpush1.bf16.msra.mxu0 0
  %2547 = vmatprep.mubr.bf16.mxu0 0
  %2548 = vmatmul.mubr.bf16.gmra.mrb[0].mxu0 %v2510
  %v2549 = vpop.f32.mrb[0].mxu0
  %v2550 = vadd.f32 0.0, %v2549
  %v2551 = vpop.f32.mrb[0].mxu0
  %v2552 = vpop.f32.mrb[0].mxu0
  %v2553 = vpop.f32.mrb[0].mxu0
  %2554 = vdwg.mxu0
  %v2555 = vrcp.pop %v2141
  %v2556 = vrcp.pop %v2144
  %v2557 = vrcp.pop %v2147
  %v2558 = vrcp.pop %v2150
  %v2559 = vrcp.pop %v2153
  %v2560 = vrcp.pop %v2156
  %v2561 = vrcp.pop %v2159
  %v2562 = vrcp.pop %v2162
  %v2563 = vmul.f32 %v2214, %v2555
  %v2564 = vmul.f32 %v2262, %v2556
  %v2565 = vmul.f32 %v2310, %v2557
  %v2566 = vmul.f32 %v2358, %v2558
  %v2567 = vmul.f32 %v2406, %v2559
  %v2568 = vmul.f32 %v2454, %v2560
  %v2569 = vmul.f32 %v2502, %v2561
  %v2570 = vmul.f32 %v2550, %v2562
  %2575 = vrot.lane.b32.xlu0 %v2567, 16
  %v2576 = vpop.permute.xlu0 %2575
  %2577 = vrot.lane.b32.xlu0 %v2568, 16
  %v2578 = vpop.permute.xlu0 %2577
  %2579 = vrot.lane.b32.xlu0 %v2569, 16
  %v2580 = vpop.permute.xlu0 %2579
  %2581 = vrot.lane.b32.xlu0 %v2570, 16
  %v2582 = vpop.permute.xlu0 %2581
  %v2587 = vsel %vm282, %v2563, %v2576
  %v2588 = vsel %vm282, %v2564, %v2578
  %v2589 = vsel %vm282, %v2565, %v2580
  %v2590 = vsel %vm282, %v2566, %v2582
  %v2591 = vpack.c.bf16 %v2588, %v2587
  %v2592 = vpack.c.bf16 %v2590, %v2589
  %v2594 = vsel %vm112, %v2591, 0
  %v2597 = vsel %vm112, %v2592, 0
  %2599 = vmatprep.subr.bf16.mxu0 0
  %2600 = vmatpush1.bf16.msra.mxu0 %v1204
  %2601 = vmatprep.subr.bf16.mxu0 0
  %2602 = vmatpush1.bf16.msra.mxu0 %v1205
  %2603 = vmatprep.subr.bf16.mxu0 0
  %2604 = vmatpush1.bf16.msra.mxu0 0
  %2605 = vmatprep.subr.bf16.mxu0 0
  %2606 = vmatpush1.bf16.msra.mxu0 0
  %2607 = vmatprep.subr.bf16.mxu0 0
  %2608 = vmatpush1.bf16.msra.mxu0 0
  %2609 = vmatprep.subr.bf16.mxu0 0
  %2610 = vmatpush1.bf16.msra.mxu0 0
  %2611 = vmatprep.subr.bf16.mxu0 0
  %2612 = vmatpush1.bf16.msra.mxu0 0
  %2613 = vmatprep.subr.bf16.mxu0 0
  %2614 = vmatpush1.bf16.msra.mxu0 0
  %2615 = vmatprep.subr.bf16.mxu0 0
  %2616 = vmatpush1.bf16.msra.mxu0 0
  %2617 = vmatprep.subr.bf16.mxu0 0
  %2618 = vmatpush1.bf16.msra.mxu0 0
  %2619 = vmatprep.subr.bf16.mxu0 0
  %2620 = vmatpush1.bf16.msra.mxu0 0
  %2621 = vmatprep.subr.bf16.mxu0 0
  %2622 = vmatpush1.bf16.msra.mxu0 0
  %2623 = vmatprep.subr.bf16.mxu0 0
  %2624 = vmatpush1.bf16.msra.mxu0 0
  %2625 = vmatprep.subr.bf16.mxu0 0
  %2626 = vmatpush1.bf16.msra.mxu0 0
  %2627 = vmatprep.subr.bf16.mxu0 0
  %2628 = vmatpush1.bf16.msra.mxu0 0
  %2629 = vmatprep.subr.bf16.mxu0 0
  %2630 = vmatpush1.bf16.msra.mxu0 0
  %2631 = vmatprep.mubr.bf16.mxu0 0
  %2632 = vmatmul.mubr.bf16.gmra.mrb[0].mxu0 %v2594
  %v2633 = vpop.f32.mrb[0].mxu0
  %v2634 = vadd.f32 %v1195, %v2633
  %v2635 = vpop.f32.mrb[0].mxu0
  %v2636 = vpop.f32.mrb[0].mxu0
  %v2637 = vadd.f32 %v1195, %v2636
  %v2638 = vpop.f32.mrb[0].mxu0
  %2639 = vmatprep.mubr.bf16.mxu0 0
  %2640 = vmatmul.mubr.bf16.gmra.mrb[0].mxu0 %v2597
  %v2641 = vpop.f32.mrb[0].mxu0
  %v2642 = vadd.f32 %v1195, %v2641
  %v2643 = vpop.f32.mrb[0].mxu0
  %v2644 = vpop.f32.mrb[0].mxu0
  %v2645 = vadd.f32 %v1195, %v2644
  %v2646 = vpop.f32.mrb[0].mxu0
  %2647 = vdwg.mxu0
  %v2648 = vadd.f32 %v1598, %v2634
  %v2649 = vadd.f32 %v1599, %v2637
  %v2650 = vadd.f32 %v1600, %v2642
  %v2651 = vadd.f32 %v1601, %v2645
  %v2652 = vsel %vm112, %v2648, 0.0
  %2653 = vadd.xlane.f32.xlu0 %v2652
  %v2654 = vpop.xlane.xlu0 %2653
  %v2655 = vsel %vm112, %v2649, 0.0
  %2656 = vadd.xlane.f32.xlu0 %v2655
  %v2657 = vpop.xlane.xlu0 %2656
  %v2658 = vsel %vm112, %v2650, 0.0
  %2659 = vadd.xlane.f32.xlu0 %v2658
  %v2660 = vpop.xlane.xlu0 %2659
  %v2661 = vsel %vm112, %v2651, 0.0
  %2662 = vadd.xlane.f32.xlu0 %v2661
  %v2663 = vpop.xlane.xlu0 %2662
  %v2664 = vmul.f32 %v2654, %v125
  %v2665 = vmul.f32 %v2657, %v125
  %v2666 = vmul.f32 %v2660, %v125
  %v2667 = vmul.f32 %v2663, %v125
  %v2668 = vsub.f32 %v2648, %v2664
  %v2669 = vsub.f32 %v2649, %v2665
  %v2670 = vsub.f32 %v2650, %v2666
  %v2671 = vsub.f32 %v2651, %v2667
  %v2672 = vmul.f32 %v2668, %v2668
  %v2673 = vmul.f32 %v2669, %v2669
  %v2674 = vmul.f32 %v2670, %v2670
  %v2675 = vmul.f32 %v2671, %v2671
  %v2676 = vsel %vm112, %v2672, 0.0
  %2677 = vadd.xlane.f32.xlu0 %v2676
  %v2678 = vpop.xlane.xlu0 %2677
  %v2679 = vsel %vm112, %v2673, 0.0
  %2680 = vadd.xlane.f32.xlu0 %v2679
  %v2681 = vpop.xlane.xlu0 %2680
  %v2682 = vsel %vm112, %v2674, 0.0
  %2683 = vadd.xlane.f32.xlu0 %v2682
  %v2684 = vpop.xlane.xlu0 %2683
  %v2685 = vsel %vm112, %v2675, 0.0
  %2686 = vadd.xlane.f32.xlu0 %v2685
  %v2687 = vpop.xlane.xlu0 %2686
  %v2688 = vmul.f32 %v2678, %v125
  %v2689 = vmul.f32 %v2681, %v125
  %v2690 = vmul.f32 %v2684, %v125
  %v2691 = vmul.f32 %v2687, %v125
  %v2692 = vadd.f32 %v2688, 1e-12
  %v2693 = vadd.f32 %v2689, 1e-12
  %v2694 = vadd.f32 %v2690, 1e-12
  %v2695 = vadd.f32 %v2691, 1e-12
  %v2696 = vrsqrt.pop %v2692
  %v2697 = vrsqrt.pop %v2693
  %v2698 = vrsqrt.pop %v2694
  %v2699 = vrsqrt.pop %v2695
  %v2700 = vmul.f32 %v2668, %v2696
  %v2701 = vmul.f32 %v2669, %v2697
  %v2702 = vmul.f32 %v2670, %v2698
  %v2703 = vmul.f32 %v2671, %v2699
  %v2704 = vmul.f32 %v2700, %v1322
  %v2705 = vmul.f32 %v2701, %v1322
  %v2706 = vmul.f32 %v2702, %v1322
  %v2707 = vmul.f32 %v2703, %v1322
  %v2708 = vadd.f32 %v2704, %v1330
  %v2709 = vadd.f32 %v2705, %v1330
  %v2710 = vadd.f32 %v2706, %v1330
  %v2711 = vadd.f32 %v2707, %v1330
  %v2712 = vpack.c.bf16 %v2709, %v2708
  %v2713 = vpack.c.bf16 %v2711, %v2710
  %v2715 = vsel %vm112, %v2712, 0
  %v2718 = vsel %vm112, %v2713, 0
  %2720 = vmatprep.subr.bf16.mxu0 0
  %2721 = vmatpush1.bf16.msra.mxu0 %v1349
  %2722 = vmatprep.subr.bf16.mxu0 0
  %2723 = vmatpush1.bf16.msra.mxu0 %v1350
  %2724 = vmatprep.subr.bf16.mxu0 0
  %2725 = vmatpush1.bf16.msra.mxu0 0
  %2726 = vmatprep.subr.bf16.mxu0 0
  %2727 = vmatpush1.bf16.msra.mxu0 0
  %2728 = vmatprep.subr.bf16.mxu0 0
  %2729 = vmatpush1.bf16.msra.mxu0 0
  %2730 = vmatprep.subr.bf16.mxu0 0
  %2731 = vmatpush1.bf16.msra.mxu0 0
  %2732 = vmatprep.subr.bf16.mxu0 0
  %2733 = vmatpush1.bf16.msra.mxu0 0
  %2734 = vmatprep.subr.bf16.mxu0 0
  %2735 = vmatpush1.bf16.msra.mxu0 0
  %2736 = vmatprep.subr.bf16.mxu0 0
  %2737 = vmatpush1.bf16.msra.mxu0 0
  %2738 = vmatprep.subr.bf16.mxu0 0
  %2739 = vmatpush1.bf16.msra.mxu0 0
  %2740 = vmatprep.subr.bf16.mxu0 0
  %2741 = vmatpush1.bf16.msra.mxu0 0
  %2742 = vmatprep.subr.bf16.mxu0 0
  %2743 = vmatpush1.bf16.msra.mxu0 0
  %2744 = vmatprep.subr.bf16.mxu0 0
  %2745 = vmatpush1.bf16.msra.mxu0 0
  %2746 = vmatprep.subr.bf16.mxu0 0
  %2747 = vmatpush1.bf16.msra.mxu0 0
  %2748 = vmatprep.subr.bf16.mxu0 0
  %2749 = vmatpush1.bf16.msra.mxu0 0
  %2750 = vmatprep.subr.bf16.mxu0 0
  %2751 = vmatpush1.bf16.msra.mxu0 0
  %2752 = vmatprep.mubr.bf16.mxu0 0
  %2753 = vmatmul.mubr.bf16.gmra.mrb[0].mxu0 %v2715
  %v2754 = vpop.f32.mrb[0].mxu0
  %v2755 = vadd.f32 %v1340, %v2754
  %v2756 = vpop.f32.mrb[0].mxu0
  %v2757 = vpop.f32.mrb[0].mxu0
  %v2758 = vadd.f32 %v1340, %v2757
  %v2759 = vpop.f32.mrb[0].mxu0
  %2760 = vmatprep.mubr.bf16.mxu0 0
  %2761 = vmatmul.mubr.bf16.gmra.mrb[0].mxu0 %v2718
  %v2762 = vpop.f32.mrb[0].mxu0
  %v2763 = vadd.f32 %v1340, %v2762
  %v2764 = vpop.f32.mrb[0].mxu0
  %v2765 = vpop.f32.mrb[0].mxu0
  %v2766 = vadd.f32 %v1340, %v2765
  %v2767 = vpop.f32.mrb[0].mxu0
  %2768 = vdwg.mxu0
  %v2769 = vmul.f32 %v2755, %v2755
  %v2770 = vmul.f32 %v2758, %v2758
  %v2771 = vmul.f32 %v2763, %v2763
  %v2772 = vmul.f32 %v2766, %v2766
  %v2773 = vmul.f32 %v2755, %v2769
  %v2774 = vmul.f32 %v2758, %v2770
  %v2775 = vmul.f32 %v2763, %v2771
  %v2776 = vmul.f32 %v2766, %v2772
  %v2777 = vmul.f32 %v2773, 0.044715
  %v2778 = vmul.f32 %v2774, 0.044715
  %v2779 = vmul.f32 %v2775, 0.044715
  %v2780 = vmul.f32 %v2776, 0.044715
  %v2781 = vadd.f32 %v2755, %v2777
  %v2782 = vadd.f32 %v2758, %v2778
  %v2783 = vadd.f32 %v2763, %v2779
  %v2784 = vadd.f32 %v2766, %v2780
  %v2785 = vmul.f32 %v2781, 0.7978846
  %v2786 = vmul.f32 %v2782, 0.7978846
  %v2787 = vmul.f32 %v2783, 0.7978846
  %v2788 = vmul.f32 %v2784, 0.7978846
  %v2789 = vtanh.pop %v2785
  %v2790 = vtanh.pop %v2786
  %v2791 = vtanh.pop %v2787
  %v2792 = vtanh.pop %v2788
  %v2793 = vadd.f32 %v2789, 1.0
  %v2794 = vadd.f32 %v2790, 1.0
  %v2795 = vadd.f32 %v2791, 1.0
  %v2796 = vadd.f32 %v2792, 1.0
  %v2797 = vmul.f32 %v2793, 0.5
  %v2798 = vmul.f32 %v2794, 0.5
  %v2799 = vmul.f32 %v2795, 0.5
  %v2800 = vmul.f32 %v2796, 0.5
  %v2801 = vmul.f32 %v2755, %v2797
  %v2802 = vmul.f32 %v2758, %v2798
  %v2803 = vmul.f32 %v2763, %v2799
  %v2804 = vmul.f32 %v2766, %v2800
  %v2805 = vpack.c.bf16 %v2802, %v2801
  %v2806 = vpack.c.bf16 %v2804, %v2803
  %v2808 = vsel %vm1474, %v2805, 0
  %v2811 = vsel %vm1474, %v2806, 0
  %2813 = vmatprep.subr.bf16.mxu0 0
  %2814 = vmatpush1.bf16.msra.mxu0 %v1466
  %2815 = vmatprep.subr.bf16.mxu0 0
  %2816 = vmatpush1.bf16.msra.mxu0 %v1467
  %2817 = vmatprep.subr.bf16.mxu0 0
  %2818 = vmatpush1.bf16.msra.mxu0 %v1468
  %2819 = vmatprep.subr.bf16.mxu0 0
  %2820 = vmatpush1.bf16.msra.mxu0 %v1469
  %2821 = vmatprep.subr.bf16.mxu0 0
  %2822 = vmatpush1.bf16.msra.mxu0 0
  %2823 = vmatprep.subr.bf16.mxu0 0
  %2824 = vmatpush1.bf16.msra.mxu0 0
  %2825 = vmatprep.subr.bf16.mxu0 0
  %2826 = vmatpush1.bf16.msra.mxu0 0
  %2827 = vmatprep.subr.bf16.mxu0 0
  %2828 = vmatpush1.bf16.msra.mxu0 0
  %2829 = vmatprep.subr.bf16.mxu0 0
  %2830 = vmatpush1.bf16.msra.mxu0 0
  %2831 = vmatprep.subr.bf16.mxu0 0
  %2832 = vmatpush1.bf16.msra.mxu0 0
  %2833 = vmatprep.subr.bf16.mxu0 0
  %2834 = vmatpush1.bf16.msra.mxu0 0
  %2835 = vmatprep.subr.bf16.mxu0 0
  %2836 = vmatpush1.bf16.msra.mxu0 0
  %2837 = vmatprep.subr.bf16.mxu0 0
  %2838 = vmatpush1.bf16.msra.mxu0 0
  %2839 = vmatprep.subr.bf16.mxu0 0
  %2840 = vmatpush1.bf16.msra.mxu0 0
  %2841 = vmatprep.subr.bf16.mxu0 0
  %2842 = vmatpush1.bf16.msra.mxu0 0
  %2843 = vmatprep.subr.bf16.mxu0 0
  %2844 = vmatpush1.bf16.msra.mxu0 0
  %2845 = vmatprep.mubr.bf16.mxu0 0
  %2846 = vmatmul.mubr.bf16.gmra.mrb[0].mxu0 %v2808
  %v2847 = vpop.f32.mrb[0].mxu0
  %v2848 = vadd.f32 %v1449, %v2847
  %v2849 = vpop.f32.mrb[0].mxu0
  %v2850 = vpop.f32.mrb[0].mxu0
  %v2851 = vadd.f32 %v1449, %v2850
  %v2852 = vpop.f32.mrb[0].mxu0
  %2853 = vmatprep.mubr.bf16.mxu0 0
  %2854 = vmatmul.mubr.bf16.gmra.mrb[0].mxu0 %v2811
  %v2855 = vpop.f32.mrb[0].mxu0
  %v2856 = vadd.f32 %v1449, %v2855
  %v2857 = vpop.f32.mrb[0].mxu0
  %v2858 = vpop.f32.mrb[0].mxu0
  %v2859 = vadd.f32 %v1449, %v2858
  %v2860 = vpop.f32.mrb[0].mxu0
  %2861 = vdwg.mxu0
  %v2862 = vadd.f32 %v2708, %v2848
  %v2863 = vadd.f32 %v2709, %v2851
  %v2864 = vadd.f32 %v2710, %v2856
  %v2865 = vadd.f32 %v2711, %v2859
  %v2866 = vsel %vm112, %v2862, 0.0
  %2867 = vadd.xlane.f32.xlu0 %v2866
  %v2868 = vpop.xlane.xlu0 %2867
  %v2869 = vsel %vm112, %v2863, 0.0
  %2870 = vadd.xlane.f32.xlu0 %v2869
  %v2871 = vpop.xlane.xlu0 %2870
  %v2872 = vsel %vm112, %v2864, 0.0
  %2873 = vadd.xlane.f32.xlu0 %v2872
  %v2874 = vpop.xlane.xlu0 %2873
  %v2875 = vsel %vm112, %v2865, 0.0
  %2876 = vadd.xlane.f32.xlu0 %v2875
  %v2877 = vpop.xlane.xlu0 %2876
  %v2878 = vmul.f32 %v2868, %v125
  %v2879 = vmul.f32 %v2871, %v125
  %v2880 = vmul.f32 %v2874, %v125
  %v2881 = vmul.f32 %v2877, %v125
  %v2882 = vsub.f32 %v2862, %v2878
  %v2883 = vsub.f32 %v2863, %v2879
  %v2884 = vsub.f32 %v2864, %v2880
  %v2885 = vsub.f32 %v2865, %v2881
  %v2886 = vmul.f32 %v2882, %v2882
  %v2887 = vmul.f32 %v2883, %v2883
  %v2888 = vmul.f32 %v2884, %v2884
  %v2889 = vmul.f32 %v2885, %v2885
  %v2890 = vsel %vm112, %v2886, 0.0
  %2891 = vadd.xlane.f32.xlu0 %v2890
  %v2892 = vpop.xlane.xlu0 %2891
  %v2893 = vsel %vm112, %v2887, 0.0
  %2894 = vadd.xlane.f32.xlu0 %v2893
  %v2895 = vpop.xlane.xlu0 %2894
  %v2896 = vsel %vm112, %v2888, 0.0
  %2897 = vadd.xlane.f32.xlu0 %v2896
  %v2898 = vpop.xlane.xlu0 %2897
  %v2899 = vsel %vm112, %v2889, 0.0
  %2900 = vadd.xlane.f32.xlu0 %v2899
  %v2901 = vpop.xlane.xlu0 %2900
  %v2902 = vmul.f32 %v2892, %v125
  %v2903 = vmul.f32 %v2895, %v125
  %v2904 = vmul.f32 %v2898, %v125
  %v2905 = vmul.f32 %v2901, %v125
  %v2906 = vadd.f32 %v2902, 1e-12
  %v2907 = vadd.f32 %v2903, 1e-12
  %v2908 = vadd.f32 %v2904, 1e-12
  %v2909 = vadd.f32 %v2905, 1e-12
  %v2910 = vrsqrt.pop %v2906
  %v2911 = vrsqrt.pop %v2907
  %v2912 = vrsqrt.pop %v2908
  %v2913 = vrsqrt.pop %v2909
  %v2914 = vmul.f32 %v2882, %v2910
  %v2915 = vmul.f32 %v2883, %v2911
  %v2916 = vmul.f32 %v2884, %v2912
  %v2917 = vmul.f32 %v2885, %v2913
  %v2918 = vmul.f32 %v2914, %v1589
  %v2919 = vmul.f32 %v2915, %v1589
  %v2920 = vmul.f32 %v2916, %v1589
  %v2921 = vmul.f32 %v2917, %v1589
  %v2922 = vadd.f32 %v2918, %v1597
  %v2923 = vadd.f32 %v2919, %v1597
  %v2924 = vadd.f32 %v2920, %v1597
  %v2925 = vadd.f32 %v2921, %v1597
  %v2926 = vlaneseq
  %v2927 = vshrl.u32 %v2926, 7
  %v2928 = vsub.s32 0, %v2927
  %v2929 = vrot.slane %v31, %v2928
  %2931 = vbcast.lane.b32.xlu0 %v2929, 256
  %v2932 = vpop.permute.xlu0 %2931
  %v2933 = vlaneseq
  %v2934 = vshrl.u32 %v2933, 7
  %v2935 = vsub.s32 1, %v2934
  %v2936 = vrot.slane %v31, %v2935
  %2938 = vbcast.lane.b32.xlu0 %v2936, 256
  %v2939 = vpop.permute.xlu0 %2938
  %v2940 = vlaneseq
  %v2941 = vshrl.u32 %v2940, 7
  %v2942 = vsub.s32 2, %v2941
  %v2943 = vrot.slane %v31, %v2942
  %2945 = vbcast.lane.b32.xlu0 %v2943, 256
  %v2946 = vpop.permute.xlu0 %2945
  %v2947 = vlaneseq
  %v2948 = vshrl.u32 %v2947, 7
  %v2949 = vsub.s32 3, %v2948
  %v2950 = vrot.slane %v31, %v2949
  %2952 = vbcast.lane.b32.xlu0 %v2950, 256
  %v2953 = vpop.permute.xlu0 %2952
  %v2954 = vmul.f32 %v2922, %v2932
  %v2955 = vmul.f32 %v2923, %v2939
  %v2956 = vmul.f32 %v2924, %v2946
  %v2957 = vmul.f32 %v2925, %v2953
  %v2958 = vsel %vm112, %v2954, 0.0
  %v2959 = vrot.slane %v2958, 4
  %v2960 = vadd.f32 %v2958, %v2959
  %v2961 = vrot.slane %v2960, 2
  %v2962 = vadd.f32 %v2960, %v2961
  %v2963 = vrot.slane %v2962, 1
  %v2964 = vadd.f32 %v2962, %v2963
  %v2965 = vsel %vm112, %v2955, 0.0
  %v2966 = vrot.slane %v2965, 4
  %v2967 = vadd.f32 %v2965, %v2966
  %v2968 = vrot.slane %v2967, 2
  %v2969 = vadd.f32 %v2967, %v2968
  %v2970 = vrot.slane %v2969, 1
  %v2971 = vadd.f32 %v2969, %v2970
  %v2972 = vsel %vm112, %v2956, 0.0
  %v2973 = vrot.slane %v2972, 4
  %v2974 = vadd.f32 %v2972, %v2973
  %v2975 = vrot.slane %v2974, 2
  %v2976 = vadd.f32 %v2974, %v2975
  %v2977 = vrot.slane %v2976, 1
  %v2978 = vadd.f32 %v2976, %v2977
  %v2979 = vsel %vm112, %v2957, 0.0
  %v2980 = vrot.slane %v2979, 4
  %v2981 = vadd.f32 %v2979, %v2980
  %v2982 = vrot.slane %v2981, 2
  %v2983 = vadd.f32 %v2981, %v2982
  %v2984 = vrot.slane %v2983, 1
  %v2985 = vadd.f32 %v2983, %v2984
  %vm2986 = vcmask 60416
  %v2987 = vsel %vm2986, %v31, 0.0
  %2988 = vadd.xlane.f32.xlu0 %v2987
  %v2989 = vpop.xlane.xlu0 %2988
  %v2990 = vmax.f32 %v2989, 1e-09
  %v2992 = vrot.slane %v2990, 1
  %v2993 = vrot.slane %v2990, 2
  %v2994 = vrot.slane %v2990, 3
  %v2999 = vrcp.pop %v2990
  %v3000 = vmul.f32 %v2964, %v2999
  %v3001 = vrcp.pop %v2992
  %v3002 = vmul.f32 %v2971, %v3001
  %v3003 = vrcp.pop %v2993
  %v3004 = vmul.f32 %v2978, %v3003
  %v3005 = vrcp.pop %v2994
  %v3006 = vmul.f32 %v2985, %v3005
  %v3007 = vmul.f32 %v3000, %v3004
  %v3008 = vmul.f32 %v3002, %v3006
  %v3011 = vrot.slane %v3008, 7
  %vm3012 = vcmask 1041409
  %v3013 = vsel %vm3012, %v3011, %v3007
  %vm3015 = vcmask 254976
  %v3016 = vsel %vm3015, %v3013, 0.0
  %3017 = vadd.xlane.f32.xlu0 %v3016
  %v3018 = vpop.xlane.xlu0 %3017
  %v3019 = vmul.f32 %v3000, %v3000
  %v3020 = vmul.f32 %v3002, %v3002
  %v3023 = vrot.slane %v3020, 7
  %v3024 = vsel %vm3012, %v3023, %v3019
  %v3026 = vsel %vm3015, %v3024, 0.0
  %3027 = vadd.xlane.f32.xlu0 %v3026
  %v3028 = vpop.xlane.xlu0 %3027
  %v3029 = vmul.f32 %v3004, %v3004
  %v3030 = vmul.f32 %v3006, %v3006
  %v3033 = vrot.slane %v3030, 7
  %v3034 = vsel %vm3012, %v3033, %v3029
  %v3036 = vsel %vm3015, %v3034, 0.0
  %3037 = vadd.xlane.f32.xlu0 %v3036
  %v3038 = vpop.xlane.xlu0 %3037
  %v3039 = vmax.f32 %v3028, 1e-16
  %v3040 = vmax.f32 %v3038, 1e-16
  %v3041 = vmul.f32 %v3039, %v3040
  %v3042 = vrsqrt.pop %v3041
  %v3043 = vmul.f32 %v3018, %v3042
  %vm3044 = vcmask 1024
  %3045 = vst.msk [vmem:[%s7] sm:$0x3] %vm3044, %v3043
  // Predicated region
  $region30: #{sentence_bert_forward.1} parent=0 // pred_check
    _
  $region31: #{sentence_bert_forward.1} parent=0 // pred_check_branch
    %3047 = sbr.rel (0) target = $region33
  $region32: #{sentence_bert_forward.1} parent=0 // pred_region
    _
  $region33: #{sentence_bert_forward.1} parent=0 // pred_fallthru
    _
  // Predicated region
  $region34: #{sentence_bert_forward.1} parent=0 // pred_check
    _
  $region35: #{sentence_bert_forward.1} parent=0 // pred_check_branch
    %3049 = sbr.rel (0) target = $region37
  $region36: #{sentence_bert_forward.1} parent=0 // pred_region
    _
  $region37: #{sentence_bert_forward.1} parent=0 // pred_fallthru
    _

</llo_original>
